<compile_context>
chip_gen: v6e
topology: v6e:2x2x1
jax: 0.10.0
libtpu: 0.0.40
codegen_flags: <defaults>
</compile_context>

<pallas_src>
import functools
import math

import jax
import jax.numpy as jnp
from jax.experimental import pallas as pl
from jax.experimental.pallas import tpu as pltpu


_VMEM_LIMIT_CACHE = None


def _vmem_limit_bytes():
    """~3/4 of physical VMEM, capped: ~96 MiB on v5e/v6e (128 MiB), ~48 MiB on v7x (64 MiB)."""
    global _VMEM_LIMIT_CACHE
    if _VMEM_LIMIT_CACHE is None:
        try:
            cap = int(pltpu.get_tpu_info().vmem_capacity_bytes)
        except Exception:
            cap = 64 * 1024 * 1024  # conservative fallback (v7x-sized)
        _VMEM_LIMIT_CACHE = int(max(32 << 20, min(100 << 20, (cap * 3) // 4)))
    return _VMEM_LIMIT_CACHE


def _compiler_params(dimension_semantics):
    return pltpu.CompilerParams(
        dimension_semantics=dimension_semantics,
        vmem_limit_bytes=_vmem_limit_bytes(),
    )


def _pick_tile(dim, target, align):
    """Largest multiple of `align` that divides `dim` and is <= target, else the full dim."""
    if dim <= target:
        return dim
    t = (target // align) * align
    while t >= align:
        if dim % t == 0:
            return t
        t -= align
    return dim


def _pick_head_block(n_head, dh, max_width=512):
    """Heads per attention grid step: hb | n_head, hb*dh a multiple of 128 (lane-dense blocks)."""
    ok = [hb for hb in range(1, n_head + 1)
          if n_head % hb == 0 and (hb * dh) % 128 == 0]
    if not ok:
        # TODO(synk): fall back to a per-head 3-D layout when d_model is not a multiple of 128.
        raise NotImplementedError("attention requires a head block whose width is a multiple of 128")
    under = [hb for hb in ok if hb * dh <= max_width]
    return max(under) if under else min(ok)


# ---------------------------------------------------------------------------
# Exact GELU (erf form, matching torch.nn.GELU() default), built only from exp,
# an EUP reciprocal, and VPU polynomial ops so it lowers cleanly inside Mosaic.
# Abramowitz & Stegun 7.1.26 erf approximation, |err| <= 1.5e-7.
# ---------------------------------------------------------------------------
_SQRT1_2 = 0.7071067811865476


def _erf_approx(x):
    a1, a2, a3, a4, a5 = (0.254829592, -0.284496736, 1.421413741,
                          -1.453152027, 1.061405429)
    p = 0.3275911
    ax = jnp.abs(x)
    t = pl.reciprocal(1.0 + p * ax, approx=True)   # divide goes to the EUP slot
    poly = ((((a5 * t + a4) * t + a3) * t + a2) * t + a1) * t
    y = 1.0 - poly * jnp.exp(-ax * ax)
    return jnp.where(x >= 0, y, -y)


def _gelu_exact(x):
    return 0.5 * x * (1.0 + _erf_approx(x * _SQRT1_2))


# ---------------------------------------------------------------------------
# Shared matmul accumulation step: bf16 MXU operands, f32 accumulator.
# ---------------------------------------------------------------------------
def _matmul_step(x_ref, w_ref, acc_ref):
    @pl.when(pl.program_id(2) == 0)
    def _():
        acc_ref[...] = jnp.zeros_like(acc_ref)

    acc_ref[...] += jnp.dot(x_ref[...].astype(jnp.bfloat16),
                            w_ref[...].astype(jnp.bfloat16),
                            preferred_element_type=jnp.float32)


# ---------------------------------------------------------------------------
# Kernel 1: tiled linear  y = activation(x @ w + b)
# ---------------------------------------------------------------------------
def _linear_kernel(x_ref, w_ref, b_ref, o_ref, acc_ref, *, activation):
    _matmul_step(x_ref, w_ref, acc_ref)

    @pl.when(pl.program_id(2) == pl.num_programs(2) - 1)
    def _():
        out = acc_ref[...] + b_ref[...].astype(jnp.float32)
        if activation == "gelu":
            out = _gelu_exact(out)
        o_ref[...] = out.astype(o_ref.dtype)


def linear(x, w, b, *, activation=None, out_dtype=None, tm=512, tn=512, tk=1024):
    """x: (rows, d_in), w: (d_in, d_out), b: (d_out,) -> (rows, d_out)."""
    rows, d_in = x.shape
    d_out = w.shape[1]
    out_dtype = out_dtype or x.dtype
    tm = rows if rows <= tm else tm                 # ragged tail handled by cdiv grid
    tn = _pick_tile(d_out, tn, 128)
    tk = _pick_tile(d_in, tk, 128)
    grid = (pl.cdiv(rows, tm), d_out // tn, d_in // tk)

    # TODO(synk): if profiling shows exposed DMA on the weight stream, add
    # pipeline_mode=pl.Buffered(3) to the weight BlockSpec (trade against v7x VMEM budget).
    kernel = functools.partial(_linear_kernel, activation=activation)
    return pl.pallas_call(
        kernel,
        out_shape=jax.ShapeDtypeStruct((rows, d_out), out_dtype),
        grid_spec=pltpu.PrefetchScalarGridSpec(
            num_scalar_prefetch=0,
            grid=grid,
            in_specs=[
                pl.BlockSpec((tm, tk), lambda i, j, k: (i, k)),
                pl.BlockSpec((tk, tn), lambda i, j, k: (k, j)),
                pl.BlockSpec((1, tn), lambda i, j, k: (0, j)),
            ],
            out_specs=pl.BlockSpec((tm, tn), lambda i, j, k: (i, j)),
            scratch_shapes=[pltpu.VMEM((tm, tn), jnp.float32)],
        ),
        compiler_params=_compiler_params(("parallel", "parallel", "arbitrary")),
    )(x, w, b.reshape(1, d_out))


# ---------------------------------------------------------------------------
# Kernel 2: linear with LayerNorm + residual fused into the epilogue.
# tn == d_out (full width) so the epilogue sees complete rows.
# ---------------------------------------------------------------------------
def _linear_ln_residual_kernel(x_ref, w_ref, b_ref, res_ref, scale_ref, shift_ref,
                               o_ref, acc_ref, *, eps):
    _matmul_step(x_ref, w_ref, acc_ref)

    @pl.when(pl.program_id(2) == pl.num_programs(2) - 1)
    def _():
        y = acc_ref[...] + b_ref[...].astype(jnp.float32)
        d_inv = 1.0 / y.shape[-1]
        mean = jnp.sum(y, axis=-1, keepdims=True) * d_inv
        centered = y - mean
        var = jnp.sum(centered * centered, axis=-1, keepdims=True) * d_inv  # unbiased=False
        norm = centered * jax.lax.rsqrt(var + eps)
        out = (scale_ref[...].astype(jnp.float32) * norm
               + shift_ref[...].astype(jnp.float32)
               + res_ref[...].astype(jnp.float32))
        o_ref[...] = out.astype(o_ref.dtype)


def linear_ln_residual(x, w, b, residual, scale, shift, *, eps=1e-5,
                       out_dtype=None, tm=512, tk=1024):
    """scale * LayerNorm(x @ w + b) + shift + residual, normalizing the last axis."""
    rows, d_in = x.shape
    d_out = w.shape[1]
    out_dtype = out_dtype or residual.dtype
    tm = rows if rows <= tm else tm
    tk = _pick_tile(d_in, tk, 128)
    tn = d_out                                      # full width: LayerNorm needs the whole row
    grid = (pl.cdiv(rows, tm), 1, d_in // tk)

    kernel = functools.partial(_linear_ln_residual_kernel, eps=eps)
    return pl.pallas_call(
        kernel,
        out_shape=jax.ShapeDtypeStruct((rows, d_out), out_dtype),
        grid_spec=pltpu.PrefetchScalarGridSpec(
            num_scalar_prefetch=0,
            grid=grid,
            in_specs=[
                pl.BlockSpec((tm, tk), lambda i, j, k: (i, k)),
                pl.BlockSpec((tk, tn), lambda i, j, k: (k, j)),
                pl.BlockSpec((1, tn), lambda i, j, k: (0, j)),
                pl.BlockSpec((tm, tn), lambda i, j, k: (i, j)),   # residual (fetched once per i)
                pl.BlockSpec((1, tn), lambda i, j, k: (0, j)),    # LN scale
                pl.BlockSpec((1, tn), lambda i, j, k: (0, j)),    # LN shift
            ],
            out_specs=pl.BlockSpec((tm, tn), lambda i, j, k: (i, j)),
            scratch_shapes=[pltpu.VMEM((tm, tn), jnp.float32)],
        ),
        compiler_params=_compiler_params(("parallel", "parallel", "arbitrary")),
    )(x, w, b.reshape(1, d_out), residual, scale.reshape(1, d_out), shift.reshape(1, d_out))


# ---------------------------------------------------------------------------
# Kernel 3: softmax attention, one (batch, head-block) per grid step.
# Q/K/V are head-block column windows of the fused 2-D qkv tensor (rows, 3*d);
# the per-head context is written straight into the (rows, d) output.
# ---------------------------------------------------------------------------
def _attention_kernel(q_ref, k_ref, v_ref, o_ref, *, sm_scale, hb, dh):
    for h in range(hb):                              # static unrolled loop over heads in block
        sl = slice(h * dh, (h + 1) * dh)
        q = q_ref[:, sl].astype(jnp.bfloat16)        # (S, dh)
        k = k_ref[:, sl].astype(jnp.bfloat16)        # (S, dh)
        v = v_ref[:, sl].astype(jnp.bfloat16)        # (S, dh)
        s = jax.lax.dot_general(q, k, (((1,), (1,)), ((), ())),
                                preferred_element_type=jnp.float32) * sm_scale
        s = s - jnp.max(s, axis=-1, keepdims=True)
        p = jnp.exp(s)
        p = p * pl.reciprocal(jnp.sum(p, axis=-1, keepdims=True), approx=True)
        o = jnp.dot(p.astype(jnp.bfloat16), v, preferred_element_type=jnp.float32)
        o_ref[:, sl] = o.astype(o_ref.dtype)


def attention(qkv, *, batch, seq, n_head, d_model, sm_scale, out_dtype):
    """qkv: (batch*seq, 3*d_model) -> context (batch*seq, d_model), heads merged in place."""
    assert seq % 8 == 0, "seq_len must be a multiple of 8"
    dh = d_model // n_head
    hb = _pick_head_block(n_head, dh)
    n_hblk = n_head // hb
    w = hb * dh
    rows = batch * seq

    # TODO(synk): for long sequences switch to an online-softmax (flash) kernel;
    # whole-row softmax per (batch, head) is fine at BERT-scale seq_len.
    q_spec = pl.BlockSpec((seq, w), lambda bi, hj: (bi, hj))
    k_spec = pl.BlockSpec((seq, w), lambda bi, hj: (bi, n_hblk + hj))
    v_spec = pl.BlockSpec((seq, w), lambda bi, hj: (bi, 2 * n_hblk + hj))
    o_spec = pl.BlockSpec((seq, w), lambda bi, hj: (bi, hj))
    kernel = functools.partial(_attention_kernel, sm_scale=sm_scale, hb=hb, dh=dh)
    return pl.pallas_call(
        kernel,
        out_shape=jax.ShapeDtypeStruct((rows, d_model), out_dtype),
        grid_spec=pltpu.PrefetchScalarGridSpec(
            num_scalar_prefetch=0,
            grid=(batch, n_hblk),
            in_specs=[q_spec, k_spec, v_spec],
            out_specs=o_spec,
        ),
        compiler_params=_compiler_params(("parallel", "parallel")),
    )(qkv, qkv, qkv)


# ---------------------------------------------------------------------------
# Kernel 4: LayerNorm fused with the residual add (used for LN1 only; LN2 is
# fused into the FFN2 matmul epilogue).
# ---------------------------------------------------------------------------
def _ln_residual_kernel(x_ref, res_ref, scale_ref, shift_ref, o_ref, *, eps):
    x = x_ref[...].astype(jnp.float32)
    d_inv = 1.0 / x.shape[-1]
    mean = jnp.sum(x, axis=-1, keepdims=True) * d_inv
    centered = x - mean
    var = jnp.sum(centered * centered, axis=-1, keepdims=True) * d_inv  # unbiased=False
    norm = centered * jax.lax.rsqrt(var + eps)
    out = (scale_ref[...].astype(jnp.float32) * norm
           + shift_ref[...].astype(jnp.float32)
           + res_ref[...].astype(jnp.float32))
    o_ref[...] = out.astype(o_ref.dtype)


def layer_norm_residual(x, residual, scale, shift, *, eps=1e-5, row_tile=1024):
    """scale * LayerNorm(x) + shift + residual, normalizing the last axis. x: (rows, d)."""
    rows, d = x.shape
    rt = rows if rows <= row_tile else row_tile     # no host-side padding; cdiv grid
    grid = (pl.cdiv(rows, rt),)
    kernel = functools.partial(_ln_residual_kernel, eps=eps)
    row_spec = pl.BlockSpec((rt, d), lambda i: (i, 0))
    par_spec = pl.BlockSpec((1, d), lambda i: (0, 0))
    return pl.pallas_call(
        kernel,
        out_shape=jax.ShapeDtypeStruct((rows, d), residual.dtype),
        grid_spec=pltpu.PrefetchScalarGridSpec(
            num_scalar_prefetch=0,
            grid=grid,
            in_specs=[row_spec, row_spec, par_spec, par_spec],
            out_specs=row_spec,
        ),
        compiler_params=_compiler_params(("parallel",)),
    )(x, residual, scale.reshape(1, d), shift.reshape(1, d))


# ---------------------------------------------------------------------------
# Parameter preparation (runs ONCE, outside jit): fuse QKV and cast weights to bf16.
# ---------------------------------------------------------------------------
def prepare_params(params, *, weight_dtype=jnp.bfloat16):
    w_qkv = jnp.concatenate([params["wq"], params["wk"], params["wv"]], axis=1)
    b_qkv = jnp.concatenate([params["bq"], params["bk"], params["bv"]], axis=0)
    return dict(
        w_qkv=w_qkv.astype(weight_dtype),
        b_qkv=b_qkv.astype(jnp.float32),
        w_ff1=params["w_ff1"].astype(weight_dtype),
        b_ff1=params["b_ff1"].astype(jnp.float32),
        w_ff2=params["w_ff2"].astype(weight_dtype),
        b_ff2=params["b_ff2"].astype(jnp.float32),
        ln1_scale=params["ln1_scale"], ln1_shift=params["ln1_shift"],
        ln2_scale=params["ln2_scale"], ln2_shift=params["ln2_shift"],
    )


# ---------------------------------------------------------------------------
# Full BertEncoder forward (expects prepare_params() output)
# ---------------------------------------------------------------------------
def bert_encoder_forward(x, p, *, n_head, eps=1e-5):
    b, s, d = x.shape
    dh = d // n_head
    rows = b * s
    x2 = x.reshape(rows, d)
    shortcut = x2  # used by BOTH residual adds (matches the PyTorch forward)

    # --- BertAttention ---
    # NOTE: out_proj is defined in BertAttention.__init__ but never applied in its
    # forward(); we match that and skip it.
    qkv = linear(x2, p["w_qkv"], p["b_qkv"], out_dtype=jnp.bfloat16)   # (rows, 3d), one pass over x
    attn_out = attention(qkv, batch=b, seq=s, n_head=n_head, d_model=d,
                         sm_scale=1.0 / math.sqrt(dh), out_dtype=x.dtype)  # (rows, d)

    # x = ln1(attn(x)) + shortcut  (LayerNorm fused with the residual add)
    x1 = layer_norm_residual(attn_out, shortcut, p["ln1_scale"], p["ln1_shift"], eps=eps)

    # --- BertFFN: exact GELU fused into the first matmul's epilogue ---
    h = linear(x1, p["w_ff1"], p["b_ff1"], activation="gelu", out_dtype=jnp.bfloat16)

    # x = ln2(ffn(x)) + shortcut   (LN2 + residual fused into the FFN2 matmul epilogue)
    out = linear_ln_residual(h, p["w_ff2"], p["b_ff2"], shortcut,
                             p["ln2_scale"], p["ln2_shift"], eps=eps, out_dtype=x.dtype)
    return out.reshape(b, s, d)


# ---------------------------------------------------------------------------
# Pure-JAX f32 reference (mirrors the PyTorch module exactly)
# ---------------------------------------------------------------------------
def _reference_encoder(x, params, *, n_head, eps=1e-5):
    b, s, d = x.shape
    dh = d // n_head

    def lin(t, w, bias):
        return t @ w + bias

    def ln(t, scale, shift):
        mean = jnp.mean(t, axis=-1, keepdims=True)
        var = jnp.mean((t - mean) ** 2, axis=-1, keepdims=True)
        return scale * ((t - mean) / jnp.sqrt(var + eps)) + shift

    shortcut = x
    q = lin(x, params["wq"], params["bq"]).reshape(b, s, n_head, dh).transpose(0, 2, 1, 3)
    k = lin(x, params["wk"], params["bk"]).reshape(b, s, n_head, dh).transpose(0, 2, 1, 3)
    v = lin(x, params["wv"], params["bv"]).reshape(b, s, n_head, dh).transpose(0, 2, 1, 3)
    scores = jnp.einsum("bhqd,bhkd->bhqk", q, k) / math.sqrt(dh)
    weights = jax.nn.softmax(scores, axis=-1)
    attn = jnp.einsum("bhqk,bhkd->bhqd", weights, v).transpose(0, 2, 1, 3).reshape(b, s, d)

    x1 = ln(attn, params["ln1_scale"], params["ln1_shift"]) + shortcut
    h = lin(x1, params["w_ff1"], params["b_ff1"])
    h = 0.5 * h * (1.0 + jax.lax.erf(h * _SQRT1_2))     # exact GELU (torch default)
    ffn = lin(h, params["w_ff2"], params["b_ff2"])
    return ln(ffn, params["ln2_scale"], params["ln2_shift"]) + shortcut


if __name__ == "__main__":
    key = jax.random.PRNGKey(0)
    # Small but lane-dense shapes (d_model and dff are multiples of 128).
    batch, seq, d_model, n_head, dff = 2, 16, 128, 4, 256

    ks = jax.random.split(key, 16)
    x = jax.random.normal(ks[0], (batch, seq, d_model), dtype=jnp.float32)

    def dense(kw, kb, fan_in, fan_out):
        w = jax.random.normal(kw, (fan_in, fan_out), jnp.float32) / math.sqrt(fan_in)
        bias = 0.02 * jax.random.normal(kb, (fan_out,), jnp.float32)
        return w, bias

    wq, bq = dense(ks[1], ks[2], d_model, d_model)
    wk, bk = dense(ks[3], ks[4], d_model, d_model)
    wv, bv = dense(ks[5], ks[6], d_model, d_model)
    w_ff1, b_ff1 = dense(ks[7], ks[8], d_model, dff)
    w_ff2, b_ff2 = dense(ks[9], ks[10], dff, d_model)

    params = dict(
        wq=wq, bq=bq, wk=wk, bk=bk, wv=wv, bv=bv,
        w_ff1=w_ff1, b_ff1=b_ff1, w_ff2=w_ff2, b_ff2=b_ff2,
        ln1_scale=jnp.ones((d_model,), jnp.float32)
                  + 0.05 * jax.random.normal(ks[11], (d_model,), jnp.float32),
        ln1_shift=0.05 * jax.random.normal(ks[12], (d_model,), jnp.float32),
        ln2_scale=jnp.ones((d_model,), jnp.float32)
                  + 0.05 * jax.random.normal(ks[13], (d_model,), jnp.float32),
        ln2_shift=0.05 * jax.random.normal(ks[14], (d_model,), jnp.float32),
    )

    kernel_params = prepare_params(params)   # QKV fusion + bf16 weight casts, outside jit
    fwd = jax.jit(functools.partial(bert_encoder_forward, n_head=n_head))
    out = jax.block_until_ready(fwd(x, kernel_params))

    ref = _reference_encoder(x, params, n_head=n_head)
    assert out.shape == x.shape
    max_err = float(jnp.max(jnp.abs(out - ref)))
    # Tolerance covers bf16 MXU operands / bf16 intermediates plus the approx erf / EUP reciprocal.
    assert jnp.allclose(out, ref, atol=5e-2, rtol=5e-2), (
        f"mismatch vs reference, max abs err = {max_err}")

    print("KERNEL_OK")
</pallas_src>

<mosaic_0001>
module attributes {stable_mosaic.version = 11 : i64} {
  func.func @_ln_residual_kernel(%arg0: i32, %arg1: memref<32x128xf32, #tpu.memory_space<vmem>>, %arg2: memref<32x128xf32, #tpu.memory_space<vmem>>, %arg3: memref<1x128xf32, #tpu.memory_space<vmem>>, %arg4: memref<1x128xf32, #tpu.memory_space<vmem>>, %arg5: memref<32x128xf32, #tpu.memory_space<vmem>>) attributes {dimension_semantics = [#tpu.dimension_semantics<parallel>], iteration_bounds = array<i64: 1>, scalar_prefetch = 0 : i64, scratch_operands = 0 : i64, tpu.core_type = #tpu.core_type<tc>, window_params = [{transform_indices = @transform_0, window_bounds = array<i64: 32, 128>}, {transform_indices = @transform_1, window_bounds = array<i64: 32, 128>}, {pipeline_mode = #tpu.pipeline_mode<synchronous>, transform_indices = @transform_2, window_bounds = array<i64: 1, 128>}, {pipeline_mode = #tpu.pipeline_mode<synchronous>, transform_indices = @transform_3, window_bounds = array<i64: 1, 128>}, {transform_indices = @transform_4, window_bounds = array<i64: 32, 128>}]} {
    %c0 = arith.constant 0 : index
    %c0_0 = arith.constant 0 : index
    %0 = vector.load %arg1[%c0, %c0_0] : memref<32x128xf32, #tpu.memory_space<vmem>>, vector<32x128xf32>
    %cst = arith.constant dense<0.000000e+00> : vector<32xf32>
    %1 = vector.multi_reduction <add>, %0, %cst [1] : vector<32x128xf32> to vector<32xf32>
    %2 = vector.shape_cast %1 : vector<32xf32> to vector<32x1xf32>
    %cst_1 = arith.constant 7.812500e-03 : f32
    %3 = vector.broadcast %cst_1 : f32 to vector<32x1xf32>
    %4 = arith.mulf %2, %3 : vector<32x1xf32>
    %5 = vector.broadcast %4 : vector<32x1xf32> to vector<32x128xf32>
    %6 = arith.subf %0, %5 : vector<32x128xf32>
    %7 = arith.mulf %6, %6 : vector<32x128xf32>
    %cst_2 = arith.constant dense<0.000000e+00> : vector<32xf32>
    %8 = vector.multi_reduction <add>, %7, %cst_2 [1] : vector<32x128xf32> to vector<32xf32>
    %9 = vector.shape_cast %8 : vector<32xf32> to vector<32x1xf32>
    %cst_3 = arith.constant 7.812500e-03 : f32
    %10 = vector.broadcast %cst_3 : f32 to vector<32x1xf32>
    %11 = arith.mulf %9, %10 : vector<32x1xf32>
    %cst_4 = arith.constant 9.99999974E-6 : f32
    %12 = vector.broadcast %cst_4 : f32 to vector<32x1xf32>
    %13 = arith.addf %11, %12 : vector<32x1xf32>
    %14 = math.rsqrt %13 : vector<32x1xf32>
    %15 = vector.broadcast %14 : vector<32x1xf32> to vector<32x128xf32>
    %16 = arith.mulf %6, %15 : vector<32x128xf32>
    %c0_5 = arith.constant 0 : index
    %c0_6 = arith.constant 0 : index
    %17 = vector.load %arg3[%c0_5, %c0_6] : memref<1x128xf32, #tpu.memory_space<vmem>>, vector<1x128xf32>
    %18 = vector.broadcast %17 : vector<1x128xf32> to vector<32x128xf32>
    %19 = arith.mulf %18, %16 : vector<32x128xf32>
    %c0_7 = arith.constant 0 : index
    %c0_8 = arith.constant 0 : index
    %20 = vector.load %arg4[%c0_7, %c0_8] : memref<1x128xf32, #tpu.memory_space<vmem>>, vector<1x128xf32>
    %21 = vector.broadcast %20 : vector<1x128xf32> to vector<32x128xf32>
    %22 = arith.addf %19, %21 : vector<32x128xf32>
    %c0_9 = arith.constant 0 : index
    %c0_10 = arith.constant 0 : index
    %23 = vector.load %arg2[%c0_9, %c0_10] : memref<32x128xf32, #tpu.memory_space<vmem>>, vector<32x128xf32>
    %24 = arith.addf %22, %23 : vector<32x128xf32>
    %c0_11 = arith.constant 0 : index
    %c0_12 = arith.constant 0 : index
    %25 = vector.load %arg5[%c0_11, %c0_12] : memref<32x128xf32, #tpu.memory_space<vmem>>, vector<32x128xf32>
    tpu.vector_store %arg5[%c0_11, %c0_12], %24 {strides = array<i32>} : memref<32x128xf32, #tpu.memory_space<vmem>>, vector<32x128xf32>,
    return
  }
  func.func @transform_0(%arg0: i32) -> (i32, i32) {
    %c0_i32 = arith.constant 0 : i32
    %c0_i32_0 = arith.constant 0 : i32
    return %arg0, %c0_i32 : i32, i32
  }
  func.func @transform_1(%arg0: i32) -> (i32, i32) {
    %c0_i32 = arith.constant 0 : i32
    %c0_i32_0 = arith.constant 0 : i32
    return %arg0, %c0_i32 : i32, i32
  }
  func.func @transform_2(%arg0: i32) -> (i32, i32) {
    %c0_i32 = arith.constant 0 : i32
    %c0_i32_0 = arith.constant 0 : i32
    %c0_i32_1 = arith.constant 0 : i32
    return %c0_i32, %c0_i32_0 : i32, i32
  }
  func.func @transform_3(%arg0: i32) -> (i32, i32) {
    %c0_i32 = arith.constant 0 : i32
    %c0_i32_0 = arith.constant 0 : i32
    %c0_i32_1 = arith.constant 0 : i32
    return %c0_i32, %c0_i32_0 : i32, i32
  }
  func.func @transform_4(%arg0: i32) -> (i32, i32) {
    %c0_i32 = arith.constant 0 : i32
    %c0_i32_0 = arith.constant 0 : i32
    return %arg0, %c0_i32 : i32, i32
  }
}

module attributes {stable_mosaic.version = 11 : i64} {
  func.func @_attention_kernel(%arg0: i32, %arg1: i32, %arg2: memref<16x128xbf16, #tpu.memory_space<vmem>>, %arg3: memref<16x128xbf16, #tpu.memory_space<vmem>>, %arg4: memref<16x128xbf16, #tpu.memory_space<vmem>>, %arg5: memref<16x128xf32, #tpu.memory_space<vmem>>) attributes {dimension_semantics = [#tpu.dimension_semantics<parallel>, #tpu.dimension_semantics<parallel>], iteration_bounds = array<i64: 2, 1>, scalar_prefetch = 0 : i64, scratch_operands = 0 : i64, tpu.core_type = #tpu.core_type<tc>, window_params = [{transform_indices = @transform_0, window_bounds = array<i64: 16, 128>}, {transform_indices = @transform_1, window_bounds = array<i64: 16, 128>}, {transform_indices = @transform_2, window_bounds = array<i64: 16, 128>}, {transform_indices = @transform_3, window_bounds = array<i64: 16, 128>}]} {
    %c0 = arith.constant 0 : index
    %c0_0 = arith.constant 0 : index
    %0 = vector.load %arg2[%c0, %c0_0] : memref<16x128xbf16, #tpu.memory_space<vmem>>, vector<16x32xbf16>
    %c0_1 = arith.constant 0 : index
    %c0_2 = arith.constant 0 : index
    %1 = vector.load %arg3[%c0_1, %c0_2] : memref<16x128xbf16, #tpu.memory_space<vmem>>, vector<16x32xbf16>
    %c0_3 = arith.constant 0 : index
    %c0_4 = arith.constant 0 : index
    %2 = vector.load %arg4[%c0_3, %c0_4] : memref<16x128xbf16, #tpu.memory_space<vmem>>, vector<16x32xbf16>
    %cst = arith.constant dense<0.000000e+00> : vector<16x16xf32>
    %3 = tpu.matmul %0, %1, %cst {dimension_numbers = #tpu.dot_dimension_numbers<[1], [1], [0], [0], [0, 0, 1, 0], [], []>} : vector<16x32xbf16>, vector<16x32xbf16>, vector<16x16xf32> -> vector<16x16xf32>
    %cst_5 = arith.constant 0.176776692 : f32
    %4 = vector.broadcast %cst_5 : f32 to vector<16x16xf32>
    %5 = arith.mulf %3, %4 : vector<16x16xf32>
    %cst_6 = arith.constant dense<0xFF800000> : vector<16xf32>
    %6 = vector.multi_reduction <maximumf>, %5, %cst_6 [1] : vector<16x16xf32> to vector<16xf32>
    %7 = vector.shape_cast %6 : vector<16xf32> to vector<16x1xf32>
    %8 = vector.broadcast %7 : vector<16x1xf32> to vector<16x16xf32>
    %9 = arith.subf %5, %8 : vector<16x16xf32>
    %10 = math.exp %9 : vector<16x16xf32>
    %cst_7 = arith.constant dense<0.000000e+00> : vector<16xf32>
    %11 = vector.multi_reduction <add>, %10, %cst_7 [1] : vector<16x16xf32> to vector<16xf32>
    %12 = vector.shape_cast %11 : vector<16xf32> to vector<16x1xf32>
    %13 = tpu.reciprocal %12 {approx = true} : vector<16x1xf32> -> vector<16x1xf32>
    %14 = vector.broadcast %13 : vector<16x1xf32> to vector<16x16xf32>
    %15 = arith.mulf %10, %14 : vector<16x16xf32>
    %16 = arith.truncf %15 : vector<16x16xf32> to vector<16x16xbf16>
    %cst_8 = arith.constant dense<0.000000e+00> : vector<16x32xf32>
    %17 = tpu.matmul %16, %2, %cst_8 {dimension_numbers = #tpu.dot_dimension_numbers<[1], [0], [0], [1], [0, 0, 1, 1], [], []>} : vector<16x16xbf16>, vector<16x32xbf16>, vector<16x32xf32> -> vector<16x32xf32>
    %c0_9 = arith.constant 0 : index
    %c0_10 = arith.constant 0 : index
    %18 = vector.load %arg5[%c0_9, %c0_10] : memref<16x128xf32, #tpu.memory_space<vmem>>, vector<16x32xf32>
    tpu.vector_store %arg5[%c0_9, %c0_10], %17 {strides = array<i32>} : memref<16x128xf32, #tpu.memory_space<vmem>>, vector<16x32xf32>,
    %c0_11 = arith.constant 0 : index
    %c32 = arith.constant 32 : index
    %19 = vector.load %arg2[%c0_11, %c32] : memref<16x128xbf16, #tpu.memory_space<vmem>>, vector<16x32xbf16>
    %c0_12 = arith.constant 0 : index
    %c32_13 = arith.constant 32 : index
    %20 = vector.load %arg3[%c0_12, %c32_13] : memref<16x128xbf16, #tpu.memory_space<vmem>>, vector<16x32xbf16>
    %c0_14 = arith.constant 0 : index
    %c32_15 = arith.constant 32 : index
    %21 = vector.load %arg4[%c0_14, %c32_15] : memref<16x128xbf16, #tpu.memory_space<vmem>>, vector<16x32xbf16>
    %cst_16 = arith.constant dense<0.000000e+00> : vector<16x16xf32>
    %22 = tpu.matmul %19, %20, %cst_16 {dimension_numbers = #tpu.dot_dimension_numbers<[1], [1], [0], [0], [0, 0, 1, 0], [], []>} : vector<16x32xbf16>, vector<16x32xbf16>, vector<16x16xf32> -> vector<16x16xf32>
    %cst_17 = arith.constant 0.176776692 : f32
    %23 = vector.broadcast %cst_17 : f32 to vector<16x16xf32>
    %24 = arith.mulf %22, %23 : vector<16x16xf32>
    %cst_18 = arith.constant dense<0xFF800000> : vector<16xf32>
    %25 = vector.multi_reduction <maximumf>, %24, %cst_18 [1] : vector<16x16xf32> to vector<16xf32>
    %26 = vector.shape_cast %25 : vector<16xf32> to vector<16x1xf32>
    %27 = vector.broadcast %26 : vector<16x1xf32> to vector<16x16xf32>
    %28 = arith.subf %24, %27 : vector<16x16xf32>
    %29 = math.exp %28 : vector<16x16xf32>
    %cst_19 = arith.constant dense<0.000000e+00> : vector<16xf32>
    %30 = vector.multi_reduction <add>, %29, %cst_19 [1] : vector<16x16xf32> to vector<16xf32>
    %31 = vector.shape_cast %30 : vector<16xf32> to vector<16x1xf32>
    %32 = tpu.reciprocal %31 {approx = true} : vector<16x1xf32> -> vector<16x1xf32>
    %33 = vector.broadcast %32 : vector<16x1xf32> to vector<16x16xf32>
    %34 = arith.mulf %29, %33 : vector<16x16xf32>
    %35 = arith.truncf %34 : vector<16x16xf32> to vector<16x16xbf16>
    %cst_20 = arith.constant dense<0.000000e+00> : vector<16x32xf32>
    %36 = tpu.matmul %35, %21, %cst_20 {dimension_numbers = #tpu.dot_dimension_numbers<[1], [0], [0], [1], [0, 0, 1, 1], [], []>} : vector<16x16xbf16>, vector<16x32xbf16>, vector<16x32xf32> -> vector<16x32xf32>
    %c0_21 = arith.constant 0 : index
    %c32_22 = arith.constant 32 : index
    %37 = vector.load %arg5[%c0_21, %c32_22] : memref<16x128xf32, #tpu.memory_space<vmem>>, vector<16x32xf32>
    tpu.vector_store %arg5[%c0_21, %c32_22], %36 {strides = array<i32>} : memref<16x128xf32, #tpu.memory_space<vmem>>, vector<16x32xf32>,
    %c0_23 = arith.constant 0 : index
    %c64 = arith.constant 64 : index
    %38 = vector.load %arg2[%c0_23, %c64] : memref<16x128xbf16, #tpu.memory_space<vmem>>, vector<16x32xbf16>
    %c0_24 = arith.constant 0 : index
    %c64_25 = arith.constant 64 : index
    %39 = vector.load %arg3[%c0_24, %c64_25] : memref<16x128xbf16, #tpu.memory_space<vmem>>, vector<16x32xbf16>
    %c0_26 = arith.constant 0 : index
    %c64_27 = arith.constant 64 : index
    %40 = vector.load %arg4[%c0_26, %c64_27] : memref<16x128xbf16, #tpu.memory_space<vmem>>, vector<16x32xbf16>
    %cst_28 = arith.constant dense<0.000000e+00> : vector<16x16xf32>
    %41 = tpu.matmul %38, %39, %cst_28 {dimension_numbers = #tpu.dot_dimension_numbers<[1], [1], [0], [0], [0, 0, 1, 0], [], []>} : vector<16x32xbf16>, vector<16x32xbf16>, vector<16x16xf32> -> vector<16x16xf32>
    %cst_29 = arith.constant 0.176776692 : f32
    %42 = vector.broadcast %cst_29 : f32 to vector<16x16xf32>
    %43 = arith.mulf %41, %42 : vector<16x16xf32>
    %cst_30 = arith.constant dense<0xFF800000> : vector<16xf32>
    %44 = vector.multi_reduction <maximumf>, %43, %cst_30 [1] : vector<16x16xf32> to vector<16xf32>
    %45 = vector.shape_cast %44 : vector<16xf32> to vector<16x1xf32>
    %46 = vector.broadcast %45 : vector<16x1xf32> to vector<16x16xf32>
    %47 = arith.subf %43, %46 : vector<16x16xf32>
    %48 = math.exp %47 : vector<16x16xf32>
    %cst_31 = arith.constant dense<0.000000e+00> : vector<16xf32>
    %49 = vector.multi_reduction <add>, %48, %cst_31 [1] : vector<16x16xf32> to vector<16xf32>
    %50 = vector.shape_cast %49 : vector<16xf32> to vector<16x1xf32>
    %51 = tpu.reciprocal %50 {approx = true} : vector<16x1xf32> -> vector<16x1xf32>
    %52 = vector.broadcast %51 : vector<16x1xf32> to vector<16x16xf32>
    %53 = arith.mulf %48, %52 : vector<16x16xf32>
    %54 = arith.truncf %53 : vector<16x16xf32> to vector<16x16xbf16>
    %cst_32 = arith.constant dense<0.000000e+00> : vector<16x32xf32>
    %55 = tpu.matmul %54, %40, %cst_32 {dimension_numbers = #tpu.dot_dimension_numbers<[1], [0], [0], [1], [0, 0, 1, 1], [], []>} : vector<16x16xbf16>, vector<16x32xbf16>, vector<16x32xf32> -> vector<16x32xf32>
    %c0_33 = arith.constant 0 : index
    %c64_34 = arith.constant 64 : index
    %56 = vector.load %arg5[%c0_33, %c64_34] : memref<16x128xf32, #tpu.memory_space<vmem>>, vector<16x32xf32>
    tpu.vector_store %arg5[%c0_33, %c64_34], %55 {strides = array<i32>} : memref<16x128xf32, #tpu.memory_space<vmem>>, vector<16x32xf32>,
    %c0_35 = arith.constant 0 : index
    %c96 = arith.constant 96 : index
    %57 = vector.load %arg2[%c0_35, %c96] : memref<16x128xbf16, #tpu.memory_space<vmem>>, vector<16x32xbf16>
    %c0_36 = arith.constant 0 : index
    %c96_37 = arith.constant 96 : index
    %58 = vector.load %arg3[%c0_36, %c96_37] : memref<16x128xbf16, #tpu.memory_space<vmem>>, vector<16x32xbf16>
    %c0_38 = arith.constant 0 : index
    %c96_39 = arith.constant 96 : index
    %59 = vector.load %arg4[%c0_38, %c96_39] : memref<16x128xbf16, #tpu.memory_space<vmem>>, vector<16x32xbf16>
    %cst_40 = arith.constant dense<0.000000e+00> : vector<16x16xf32>
    %60 = tpu.matmul %57, %58, %cst_40 {dimension_numbers = #tpu.dot_dimension_numbers<[1], [1], [0], [0], [0, 0, 1, 0], [], []>} : vector<16x32xbf16>, vector<16x32xbf16>, vector<16x16xf32> -> vector<16x16xf32>
    %cst_41 = arith.constant 0.176776692 : f32
    %61 = vector.broadcast %cst_41 : f32 to vector<16x16xf32>
    %62 = arith.mulf %60, %61 : vector<16x16xf32>
    %cst_42 = arith.constant dense<0xFF800000> : vector<16xf32>
    %63 = vector.multi_reduction <maximumf>, %62, %cst_42 [1] : vector<16x16xf32> to vector<16xf32>
    %64 = vector.shape_cast %63 : vector<16xf32> to vector<16x1xf32>
    %65 = vector.broadcast %64 : vector<16x1xf32> to vector<16x16xf32>
    %66 = arith.subf %62, %65 : vector<16x16xf32>
    %67 = math.exp %66 : vector<16x16xf32>
    %cst_43 = arith.constant dense<0.000000e+00> : vector<16xf32>
    %68 = vector.multi_reduction <add>, %67, %cst_43 [1] : vector<16x16xf32> to vector<16xf32>
    %69 = vector.shape_cast %68 : vector<16xf32> to vector<16x1xf32>
    %70 = tpu.reciprocal %69 {approx = true} : vector<16x1xf32> -> vector<16x1xf32>
    %71 = vector.broadcast %70 : vector<16x1xf32> to vector<16x16xf32>
    %72 = arith.mulf %67, %71 : vector<16x16xf32>
    %73 = arith.truncf %72 : vector<16x16xf32> to vector<16x16xbf16>
    %cst_44 = arith.constant dense<0.000000e+00> : vector<16x32xf32>
    %74 = tpu.matmul %73, %59, %cst_44 {dimension_numbers = #tpu.dot_dimension_numbers<[1], [0], [0], [1], [0, 0, 1, 1], [], []>} : vector<16x16xbf16>, vector<16x32xbf16>, vector<16x32xf32> -> vector<16x32xf32>
    %c0_45 = arith.constant 0 : index
    %c96_46 = arith.constant 96 : index
    %75 = vector.load %arg5[%c0_45, %c96_46] : memref<16x128xf32, #tpu.memory_space<vmem>>, vector<16x32xf32>
    tpu.vector_store %arg5[%c0_45, %c96_46], %74 {strides = array<i32>} : memref<16x128xf32, #tpu.memory_space<vmem>>, vector<16x32xf32>,
    return
  }
  func.func @transform_0(%arg0: i32, %arg1: i32) -> (i32, i32) {
    %c0_i32 = arith.constant 0 : i32
    return %arg0, %arg1 : i32, i32
  }
  func.func @transform_1(%arg0: i32, %arg1: i32) -> (i32, i32) {
    %c1_i32 = arith.constant 1 : i32
    %0 = arith.addi %c1_i32, %arg1 : i32
    %c0_i32 = arith.constant 0 : i32
    return %arg0, %0 : i32, i32
  }
  func.func @transform_2(%arg0: i32, %arg1: i32) -> (i32, i32) {
    %c2_i32 = arith.constant 2 : i32
    %0 = arith.addi %c2_i32, %arg1 : i32
    %c0_i32 = arith.constant 0 : i32
    return %arg0, %0 : i32, i32
  }
  func.func @transform_3(%arg0: i32, %arg1: i32) -> (i32, i32) {
    %c0_i32 = arith.constant 0 : i32
    return %arg0, %arg1 : i32, i32
  }
}

module attributes {stable_mosaic.version = 11 : i64} {
  func.func @_linear_kernel(%arg0: i32, %arg1: i32, %arg2: i32, %arg3: memref<32x128xf32, #tpu.memory_space<vmem>>, %arg4: memref<128x384xbf16, #tpu.memory_space<vmem>>, %arg5: memref<1x384xf32, #tpu.memory_space<vmem>>, %arg6: memref<32x384xbf16, #tpu.memory_space<vmem>>, %arg7: memref<32x384xf32, #tpu.memory_space<vmem>>) attributes {dimension_semantics = [#tpu.dimension_semantics<parallel>, #tpu.dimension_semantics<parallel>, #tpu.dimension_semantics<arbitrary>], iteration_bounds = array<i64: 1, 1, 1>, scalar_prefetch = 0 : i64, scratch_operands = 1 : i64, tpu.core_type = #tpu.core_type<tc>, window_params = [{transform_indices = @transform_0, window_bounds = array<i64: 32, 128>}, {transform_indices = @transform_1, window_bounds = array<i64: 128, 384>}, {transform_indices = @transform_2, window_bounds = array<i64: 1, 384>}, {transform_indices = @transform_3, window_bounds = array<i64: 32, 384>}]} {
    %c0_i32 = arith.constant 0 : i32
    %0 = arith.cmpi eq, %arg2, %c0_i32 : i32
    %1 = arith.extui %0 : i1 to i32
    %c0_i32_0 = arith.constant 0 : i32
    %2 = arith.cmpi ne, %1, %c0_i32_0 : i32
    scf.if %2 {
      %cst_10 = arith.constant 0.000000e+00 : f32
      %13 = vector.broadcast %cst_10 : f32 to vector<32x384xf32>
      %c0_11 = arith.constant 0 : index
      %c0_12 = arith.constant 0 : index
      %14 = vector.load %arg7[%c0_11, %c0_12] : memref<32x384xf32, #tpu.memory_space<vmem>>, vector<32x384xf32>
      tpu.vector_store %arg7[%c0_11, %c0_12], %13 {strides = array<i32>} : memref<32x384xf32, #tpu.memory_space<vmem>>, vector<32x384xf32>,
    } else {
    }
    %c0 = arith.constant 0 : index
    %c0_1 = arith.constant 0 : index
    %3 = vector.load %arg7[%c0, %c0_1] : memref<32x384xf32, #tpu.memory_space<vmem>>, vector<32x384xf32>
    %c0_2 = arith.constant 0 : index
    %c0_3 = arith.constant 0 : index
    %4 = vector.load %arg3[%c0_2, %c0_3] : memref<32x128xf32, #tpu.memory_space<vmem>>, vector<32x128xf32>
    %5 = arith.truncf %4 : vector<32x128xf32> to vector<32x128xbf16>
    %c0_4 = arith.constant 0 : index
    %c0_5 = arith.constant 0 : index
    %6 = vector.load %arg4[%c0_4, %c0_5] : memref<128x384xbf16, #tpu.memory_space<vmem>>, vector<128x384xbf16>
    %cst = arith.constant dense<0.000000e+00> : vector<32x384xf32>
    %7 = tpu.matmul %5, %6, %cst {dimension_numbers = #tpu.dot_dimension_numbers<[1], [0], [0], [1], [0, 0, 1, 1], [], []>} : vector<32x128xbf16>, vector<128x384xbf16>, vector<32x384xf32> -> vector<32x384xf32>
    %8 = arith.addf %3, %7 : vector<32x384xf32>
    %c0_6 = arith.constant 0 : index
    %c0_7 = arith.constant 0 : index
    %9 = vector.load %arg7[%c0_6, %c0_7] : memref<32x384xf32, #tpu.memory_space<vmem>>, vector<32x384xf32>
    tpu.vector_store %arg7[%c0_6, %c0_7], %8 {strides = array<i32>} : memref<32x384xf32, #tpu.memory_space<vmem>>, vector<32x384xf32>,
    %c0_i32_8 = arith.constant 0 : i32
    %10 = arith.cmpi eq, %arg2, %c0_i32_8 : i32
    %11 = arith.extui %10 : i1 to i32
    %c0_i32_9 = arith.constant 0 : i32
    %12 = arith.cmpi ne, %11, %c0_i32_9 : i32
    scf.if %12 {
      %c0_10 = arith.constant 0 : index
      %c0_11 = arith.constant 0 : index
      %13 = vector.load %arg7[%c0_10, %c0_11] : memref<32x384xf32, #tpu.memory_space<vmem>>, vector<32x384xf32>
      %c0_12 = arith.constant 0 : index
      %c0_13 = arith.constant 0 : index
      %14 = vector.load %arg5[%c0_12, %c0_13] : memref<1x384xf32, #tpu.memory_space<vmem>>, vector<1x384xf32>
      %15 = vector.broadcast %14 : vector<1x384xf32> to vector<32x384xf32>
      %16 = arith.addf %13, %15 : vector<32x384xf32>
      %17 = arith.truncf %16 : vector<32x384xf32> to vector<32x384xbf16>
      %c0_14 = arith.constant 0 : index
      %c0_15 = arith.constant 0 : index
      %18 = vector.load %arg6[%c0_14, %c0_15] : memref<32x384xbf16, #tpu.memory_space<vmem>>, vector<32x384xbf16>
      tpu.vector_store %arg6[%c0_14, %c0_15], %17 {strides = array<i32>} : memref<32x384xbf16, #tpu.memory_space<vmem>>, vector<32x384xbf16>,
    } else {
    }
    return
  }
  func.func @transform_0(%arg0: i32, %arg1: i32, %arg2: i32) -> (i32, i32) {
    %c0_i32 = arith.constant 0 : i32
    return %arg0, %arg2 : i32, i32
  }
  func.func @transform_1(%arg0: i32, %arg1: i32, %arg2: i32) -> (i32, i32) {
    %c0_i32 = arith.constant 0 : i32
    return %arg2, %arg1 : i32, i32
  }
  func.func @transform_2(%arg0: i32, %arg1: i32, %arg2: i32) -> (i32, i32) {
    %c0_i32 = arith.constant 0 : i32
    %c0_i32_0 = arith.constant 0 : i32
    return %c0_i32, %arg1 : i32, i32
  }
  func.func @transform_3(%arg0: i32, %arg1: i32, %arg2: i32) -> (i32, i32) {
    %c0_i32 = arith.constant 0 : i32
    return %arg0, %arg1 : i32, i32
  }
}

module attributes {stable_mosaic.version = 11 : i64} {
  func.func @_linear_kernel(%arg0: i32, %arg1: i32, %arg2: i32, %arg3: memref<32x128xf32, #tpu.memory_space<vmem>>, %arg4: memref<128x256xbf16, #tpu.memory_space<vmem>>, %arg5: memref<1x256xf32, #tpu.memory_space<vmem>>, %arg6: memref<32x256xbf16, #tpu.memory_space<vmem>>, %arg7: memref<32x256xf32, #tpu.memory_space<vmem>>) attributes {dimension_semantics = [#tpu.dimension_semantics<parallel>, #tpu.dimension_semantics<parallel>, #tpu.dimension_semantics<arbitrary>], iteration_bounds = array<i64: 1, 1, 1>, scalar_prefetch = 0 : i64, scratch_operands = 1 : i64, tpu.core_type = #tpu.core_type<tc>, window_params = [{transform_indices = @transform_0, window_bounds = array<i64: 32, 128>}, {transform_indices = @transform_1, window_bounds = array<i64: 128, 256>}, {transform_indices = @transform_2, window_bounds = array<i64: 1, 256>}, {transform_indices = @transform_3, window_bounds = array<i64: 32, 256>}]} {
    %c0_i32 = arith.constant 0 : i32
    %0 = arith.cmpi eq, %arg2, %c0_i32 : i32
    %1 = arith.extui %0 : i1 to i32
    %c0_i32_0 = arith.constant 0 : i32
    %2 = arith.cmpi ne, %1, %c0_i32_0 : i32
    scf.if %2 {
      %cst_10 = arith.constant 0.000000e+00 : f32
      %13 = vector.broadcast %cst_10 : f32 to vector<32x256xf32>
      %c0_11 = arith.constant 0 : index
      %c0_12 = arith.constant 0 : index
      %14 = vector.load %arg7[%c0_11, %c0_12] : memref<32x256xf32, #tpu.memory_space<vmem>>, vector<32x256xf32>
      tpu.vector_store %arg7[%c0_11, %c0_12], %13 {strides = array<i32>} : memref<32x256xf32, #tpu.memory_space<vmem>>, vector<32x256xf32>,
    } else {
    }
    %c0 = arith.constant 0 : index
    %c0_1 = arith.constant 0 : index
    %3 = vector.load %arg7[%c0, %c0_1] : memref<32x256xf32, #tpu.memory_space<vmem>>, vector<32x256xf32>
    %c0_2 = arith.constant 0 : index
    %c0_3 = arith.constant 0 : index
    %4 = vector.load %arg3[%c0_2, %c0_3] : memref<32x128xf32, #tpu.memory_space<vmem>>, vector<32x128xf32>
    %5 = arith.truncf %4 : vector<32x128xf32> to vector<32x128xbf16>
    %c0_4 = arith.constant 0 : index
    %c0_5 = arith.constant 0 : index
    %6 = vector.load %arg4[%c0_4, %c0_5] : memref<128x256xbf16, #tpu.memory_space<vmem>>, vector<128x256xbf16>
    %cst = arith.constant dense<0.000000e+00> : vector<32x256xf32>
    %7 = tpu.matmul %5, %6, %cst {dimension_numbers = #tpu.dot_dimension_numbers<[1], [0], [0], [1], [0, 0, 1, 1], [], []>} : vector<32x128xbf16>, vector<128x256xbf16>, vector<32x256xf32> -> vector<32x256xf32>
    %8 = arith.addf %3, %7 : vector<32x256xf32>
    %c0_6 = arith.constant 0 : index
    %c0_7 = arith.constant 0 : index
    %9 = vector.load %arg7[%c0_6, %c0_7] : memref<32x256xf32, #tpu.memory_space<vmem>>, vector<32x256xf32>
    tpu.vector_store %arg7[%c0_6, %c0_7], %8 {strides = array<i32>} : memref<32x256xf32, #tpu.memory_space<vmem>>, vector<32x256xf32>,
    %c0_i32_8 = arith.constant 0 : i32
    %10 = arith.cmpi eq, %arg2, %c0_i32_8 : i32
    %11 = arith.extui %10 : i1 to i32
    %c0_i32_9 = arith.constant 0 : i32
    %12 = arith.cmpi ne, %11, %c0_i32_9 : i32
    scf.if %12 {
      %c0_10 = arith.constant 0 : index
      %c0_11 = arith.constant 0 : index
      %13 = vector.load %arg7[%c0_10, %c0_11] : memref<32x256xf32, #tpu.memory_space<vmem>>, vector<32x256xf32>
      %c0_12 = arith.constant 0 : index
      %c0_13 = arith.constant 0 : index
      %14 = vector.load %arg5[%c0_12, %c0_13] : memref<1x256xf32, #tpu.memory_space<vmem>>, vector<1x256xf32>
      %15 = vector.broadcast %14 : vector<1x256xf32> to vector<32x256xf32>
      %16 = arith.addf %13, %15 : vector<32x256xf32>
      %cst_14 = arith.constant 5.000000e-01 : f32
      %17 = vector.broadcast %cst_14 : f32 to vector<32x256xf32>
      %18 = arith.mulf %17, %16 : vector<32x256xf32>
      %cst_15 = arith.constant 0.707106769 : f32
      %19 = vector.broadcast %cst_15 : f32 to vector<32x256xf32>
      %20 = arith.mulf %16, %19 : vector<32x256xf32>
      %21 = math.absf %20 : vector<32x256xf32>
      %cst_16 = arith.constant 0.327591091 : f32
      %22 = vector.broadcast %cst_16 : f32 to vector<32x256xf32>
      %23 = arith.mulf %22, %21 : vector<32x256xf32>
      %cst_17 = arith.constant 1.000000e+00 : f32
      %24 = vector.broadcast %cst_17 : f32 to vector<32x256xf32>
      %25 = arith.addf %24, %23 : vector<32x256xf32>
      %26 = tpu.reciprocal %25 {approx = true} : vector<32x256xf32> -> vector<32x256xf32>
      %cst_18 = arith.constant 1.06140542 : f32
      %27 = vector.broadcast %cst_18 : f32 to vector<32x256xf32>
      %28 = arith.mulf %27, %26 : vector<32x256xf32>
      %cst_19 = arith.constant -1.45315206 : f32
      %29 = vector.broadcast %cst_19 : f32 to vector<32x256xf32>
      %30 = arith.addf %28, %29 : vector<32x256xf32>
      %31 = arith.mulf %30, %26 : vector<32x256xf32>
      %cst_20 = arith.constant 1.42141378 : f32
      %32 = vector.broadcast %cst_20 : f32 to vector<32x256xf32>
      %33 = arith.addf %31, %32 : vector<32x256xf32>
      %34 = arith.mulf %33, %26 : vector<32x256xf32>
      %cst_21 = arith.constant -0.284496725 : f32
      %35 = vector.broadcast %cst_21 : f32 to vector<32x256xf32>
      %36 = arith.addf %34, %35 : vector<32x256xf32>
      %37 = arith.mulf %36, %26 : vector<32x256xf32>
      %cst_22 = arith.constant 0.254829586 : f32
      %38 = vector.broadcast %cst_22 : f32 to vector<32x256xf32>
      %39 = arith.addf %37, %38 : vector<32x256xf32>
      %40 = arith.mulf %39, %26 : vector<32x256xf32>
      %cst_23 = arith.constant 0.000000e+00 : f32
      %41 = vector.broadcast %cst_23 : f32 to vector<32x256xf32>
      %42 = arith.subf %41, %21 : vector<32x256xf32>
      %43 = arith.mulf %42, %21 : vector<32x256xf32>
      %44 = math.exp %43 : vector<32x256xf32>
      %45 = arith.mulf %40, %44 : vector<32x256xf32>
      %cst_24 = arith.constant 1.000000e+00 : f32
      %46 = vector.broadcast %cst_24 : f32 to vector<32x256xf32>
      %47 = arith.subf %46, %45 : vector<32x256xf32>
      %cst_25 = arith.constant 0.000000e+00 : f32
      %48 = vector.broadcast %cst_25 : f32 to vector<32x256xf32>
      %49 = arith.cmpf oge, %20, %48 : vector<32x256xf32>
      %cst_26 = arith.constant 0.000000e+00 : f32
      %50 = vector.broadcast %cst_26 : f32 to vector<32x256xf32>
      %51 = arith.subf %50, %47 : vector<32x256xf32>
      %52 = arith.select %49, %47, %51 : vector<32x256xi1>, vector<32x256xf32>
      %cst_27 = arith.constant 1.000000e+00 : f32
      %53 = vector.broadcast %cst_27 : f32 to vector<32x256xf32>
      %54 = arith.addf %53, %52 : vector<32x256xf32>
      %55 = arith.mulf %18, %54 : vector<32x256xf32>
      %56 = arith.truncf %55 : vector<32x256xf32> to vector<32x256xbf16>
      %c0_28 = arith.constant 0 : index
      %c0_29 = arith.constant 0 : index
      %57 = vector.load %arg6[%c0_28, %c0_29] : memref<32x256xbf16, #tpu.memory_space<vmem>>, vector<32x256xbf16>
      tpu.vector_store %arg6[%c0_28, %c0_29], %56 {strides = array<i32>} : memref<32x256xbf16, #tpu.memory_space<vmem>>, vector<32x256xbf16>,
    } else {
    }
    return
  }
  func.func @transform_0(%arg0: i32, %arg1: i32, %arg2: i32) -> (i32, i32) {
    %c0_i32 = arith.constant 0 : i32
    return %arg0, %arg2 : i32, i32
  }
  func.func @transform_1(%arg0: i32, %arg1: i32, %arg2: i32) -> (i32, i32) {
    %c0_i32 = arith.constant 0 : i32
    return %arg2, %arg1 : i32, i32
  }
  func.func @transform_2(%arg0: i32, %arg1: i32, %arg2: i32) -> (i32, i32) {
    %c0_i32 = arith.constant 0 : i32
    %c0_i32_0 = arith.constant 0 : i32
    return %c0_i32, %arg1 : i32, i32
  }
  func.func @transform_3(%arg0: i32, %arg1: i32, %arg2: i32) -> (i32, i32) {
    %c0_i32 = arith.constant 0 : i32
    return %arg0, %arg1 : i32, i32
  }
}

module attributes {stable_mosaic.version = 11 : i64} {
  func.func @_linear_ln_residual_kernel(%arg0: i32, %arg1: i32, %arg2: i32, %arg3: memref<32x256xbf16, #tpu.memory_space<vmem>>, %arg4: memref<256x128xbf16, #tpu.memory_space<vmem>>, %arg5: memref<1x128xf32, #tpu.memory_space<vmem>>, %arg6: memref<32x128xf32, #tpu.memory_space<vmem>>, %arg7: memref<1x128xf32, #tpu.memory_space<vmem>>, %arg8: memref<1x128xf32, #tpu.memory_space<vmem>>, %arg9: memref<32x128xf32, #tpu.memory_space<vmem>>, %arg10: memref<32x128xf32, #tpu.memory_space<vmem>>) attributes {dimension_semantics = [#tpu.dimension_semantics<parallel>, #tpu.dimension_semantics<parallel>, #tpu.dimension_semantics<arbitrary>], iteration_bounds = array<i64: 1, 1, 1>, scalar_prefetch = 0 : i64, scratch_operands = 1 : i64, tpu.core_type = #tpu.core_type<tc>, window_params = [{transform_indices = @transform_0, window_bounds = array<i64: 32, 256>}, {transform_indices = @transform_1, window_bounds = array<i64: 256, 128>}, {transform_indices = @transform_2, window_bounds = array<i64: 1, 128>}, {transform_indices = @transform_3, window_bounds = array<i64: 32, 128>}, {transform_indices = @transform_4, window_bounds = array<i64: 1, 128>}, {transform_indices = @transform_5, window_bounds = array<i64: 1, 128>}, {transform_indices = @transform_6, window_bounds = array<i64: 32, 128>}]} {
    %c0_i32 = arith.constant 0 : i32
    %0 = arith.cmpi eq, %arg2, %c0_i32 : i32
    %1 = arith.extui %0 : i1 to i32
    %c0_i32_0 = arith.constant 0 : i32
    %2 = arith.cmpi ne, %1, %c0_i32_0 : i32
    scf.if %2 {
      %cst_10 = arith.constant 0.000000e+00 : f32
      %12 = vector.broadcast %cst_10 : f32 to vector<32x128xf32>
      %c0_11 = arith.constant 0 : index
      %c0_12 = arith.constant 0 : index
      %13 = vector.load %arg10[%c0_11, %c0_12] : memref<32x128xf32, #tpu.memory_space<vmem>>, vector<32x128xf32>
      tpu.vector_store %arg10[%c0_11, %c0_12], %12 {strides = array<i32>} : memref<32x128xf32, #tpu.memory_space<vmem>>, vector<32x128xf32>,
    } else {
    }
    %c0 = arith.constant 0 : index
    %c0_1 = arith.constant 0 : index
    %3 = vector.load %arg10[%c0, %c0_1] : memref<32x128xf32, #tpu.memory_space<vmem>>, vector<32x128xf32>
    %c0_2 = arith.constant 0 : index
    %c0_3 = arith.constant 0 : index
    %4 = vector.load %arg3[%c0_2, %c0_3] : memref<32x256xbf16, #tpu.memory_space<vmem>>, vector<32x256xbf16>
    %c0_4 = arith.constant 0 : index
    %c0_5 = arith.constant 0 : index
    %5 = vector.load %arg4[%c0_4, %c0_5] : memref<256x128xbf16, #tpu.memory_space<vmem>>, vector<256x128xbf16>
    %cst = arith.constant dense<0.000000e+00> : vector<32x128xf32>
    %6 = tpu.matmul %4, %5, %cst {dimension_numbers = #tpu.dot_dimension_numbers<[1], [0], [0], [1], [0, 0, 1, 1], [], []>} : vector<32x256xbf16>, vector<256x128xbf16>, vector<32x128xf32> -> vector<32x128xf32>
    %7 = arith.addf %3, %6 : vector<32x128xf32>
    %c0_6 = arith.constant 0 : index
    %c0_7 = arith.constant 0 : index
    %8 = vector.load %arg10[%c0_6, %c0_7] : memref<32x128xf32, #tpu.memory_space<vmem>>, vector<32x128xf32>
    tpu.vector_store %arg10[%c0_6, %c0_7], %7 {strides = array<i32>} : memref<32x128xf32, #tpu.memory_space<vmem>>, vector<32x128xf32>,
    %c0_i32_8 = arith.constant 0 : i32
    %9 = arith.cmpi eq, %arg2, %c0_i32_8 : i32
    %10 = arith.extui %9 : i1 to i32
    %c0_i32_9 = arith.constant 0 : i32
    %11 = arith.cmpi ne, %10, %c0_i32_9 : i32
    scf.if %11 {
      %c0_10 = arith.constant 0 : index
      %c0_11 = arith.constant 0 : index
      %12 = vector.load %arg10[%c0_10, %c0_11] : memref<32x128xf32, #tpu.memory_space<vmem>>, vector<32x128xf32>
      %c0_12 = arith.constant 0 : index
      %c0_13 = arith.constant 0 : index
      %13 = vector.load %arg5[%c0_12, %c0_13] : memref<1x128xf32, #tpu.memory_space<vmem>>, vector<1x128xf32>
      %14 = vector.broadcast %13 : vector<1x128xf32> to vector<32x128xf32>
      %15 = arith.addf %12, %14 : vector<32x128xf32>
      %cst_14 = arith.constant dense<0.000000e+00> : vector<32xf32>
      %16 = vector.multi_reduction <add>, %15, %cst_14 [1] : vector<32x128xf32> to vector<32xf32>
      %17 = vector.shape_cast %16 : vector<32xf32> to vector<32x1xf32>
      %cst_15 = arith.constant 7.812500e-03 : f32
      %18 = vector.broadcast %cst_15 : f32 to vector<32x1xf32>
      %19 = arith.mulf %17, %18 : vector<32x1xf32>
      %20 = vector.broadcast %19 : vector<32x1xf32> to vector<32x128xf32>
      %21 = arith.subf %15, %20 : vector<32x128xf32>
      %22 = arith.mulf %21, %21 : vector<32x128xf32>
      %cst_16 = arith.constant dense<0.000000e+00> : vector<32xf32>
      %23 = vector.multi_reduction <add>, %22, %cst_16 [1] : vector<32x128xf32> to vector<32xf32>
      %24 = vector.shape_cast %23 : vector<32xf32> to vector<32x1xf32>
      %cst_17 = arith.constant 7.812500e-03 : f32
      %25 = vector.broadcast %cst_17 : f32 to vector<32x1xf32>
      %26 = arith.mulf %24, %25 : vector<32x1xf32>
      %cst_18 = arith.constant 9.99999974E-6 : f32
      %27 = vector.broadcast %cst_18 : f32 to vector<32x1xf32>
      %28 = arith.addf %26, %27 : vector<32x1xf32>
      %29 = math.rsqrt %28 : vector<32x1xf32>
      %30 = vector.broadcast %29 : vector<32x1xf32> to vector<32x128xf32>
      %31 = arith.mulf %21, %30 : vector<32x128xf32>
      %c0_19 = arith.constant 0 : index
      %c0_20 = arith.constant 0 : index
      %32 = vector.load %arg7[%c0_19, %c0_20] : memref<1x128xf32, #tpu.memory_space<vmem>>, vector<1x128xf32>
      %33 = vector.broadcast %32 : vector<1x128xf32> to vector<32x128xf32>
      %34 = arith.mulf %33, %31 : vector<32x128xf32>
      %c0_21 = arith.constant 0 : index
      %c0_22 = arith.constant 0 : index
      %35 = vector.load %arg8[%c0_21, %c0_22] : memref<1x128xf32, #tpu.memory_space<vmem>>, vector<1x128xf32>
      %36 = vector.broadcast %35 : vector<1x128xf32> to vector<32x128xf32>
      %37 = arith.addf %34, %36 : vector<32x128xf32>
      %c0_23 = arith.constant 0 : index
      %c0_24 = arith.constant 0 : index
      %38 = vector.load %arg6[%c0_23, %c0_24] : memref<32x128xf32, #tpu.memory_space<vmem>>, vector<32x128xf32>
      %39 = arith.addf %37, %38 : vector<32x128xf32>
      %c0_25 = arith.constant 0 : index
      %c0_26 = arith.constant 0 : index
      %40 = vector.load %arg9[%c0_25, %c0_26] : memref<32x128xf32, #tpu.memory_space<vmem>>, vector<32x128xf32>
      tpu.vector_store %arg9[%c0_25, %c0_26], %39 {strides = array<i32>} : memref<32x128xf32, #tpu.memory_space<vmem>>, vector<32x128xf32>,
    } else {
    }
    return
  }
  func.func @transform_0(%arg0: i32, %arg1: i32, %arg2: i32) -> (i32, i32) {
    %c0_i32 = arith.constant 0 : i32
    return %arg0, %arg2 : i32, i32
  }
  func.func @transform_1(%arg0: i32, %arg1: i32, %arg2: i32) -> (i32, i32) {
    %c0_i32 = arith.constant 0 : i32
    return %arg2, %arg1 : i32, i32
  }
  func.func @transform_2(%arg0: i32, %arg1: i32, %arg2: i32) -> (i32, i32) {
    %c0_i32 = arith.constant 0 : i32
    %c0_i32_0 = arith.constant 0 : i32
    return %c0_i32, %arg1 : i32, i32
  }
  func.func @transform_3(%arg0: i32, %arg1: i32, %arg2: i32) -> (i32, i32) {
    %c0_i32 = arith.constant 0 : i32
    return %arg0, %arg1 : i32, i32
  }
  func.func @transform_4(%arg0: i32, %arg1: i32, %arg2: i32) -> (i32, i32) {
    %c0_i32 = arith.constant 0 : i32
    %c0_i32_0 = arith.constant 0 : i32
    return %c0_i32, %arg1 : i32, i32
  }
  func.func @transform_5(%arg0: i32, %arg1: i32, %arg2: i32) -> (i32, i32) {
    %c0_i32 = arith.constant 0 : i32
    %c0_i32_0 = arith.constant 0 : i32
    return %c0_i32, %arg1 : i32, i32
  }
  func.func @transform_6(%arg0: i32, %arg1: i32, %arg2: i32) -> (i32, i32) {
    %c0_i32 = arith.constant 0 : i32
    return %arg0, %arg1 : i32, i32
  }
}

</mosaic_0001>

<llo_original>
// kernel: bert_encoder_forward.7
$region0: #{bert_encoder_forward.7}
  #allocation0 [shape = 'u32[]', space=smem, size = 0x4, offset = 0x4, fixed_abs, tag = 'smem constant byte address 0x4 - core index']
  #allocation1 [shape = 'u32[144,128]{1,0:T(1,128)}', space=vmem, size = 0x12000, scoped, tag = 'internal scratch']
  %s0 = inlined_call_operand.vmem [shape: f32[32,128], index: 0, kind: input, shape index: {}]
  %s1 = inlined_call_operand.vmem [shape: f32[32,128], index: 1, kind: input, shape index: {}]
  %s2 = inlined_call_operand.vmem [shape: f32[1,128], index: 2, kind: input, shape index: {}]
  %s3 = inlined_call_operand.vmem [shape: f32[1,128], index: 3, kind: input, shape index: {}]
  %s4 = inlined_call_operand.vmem [shape: f32[32,128], index: 4, kind: output, shape index: {}]
  %s5 = sld [smem:[#allocation0]]
  $region26: #{bert_encoder_forward.7} parent=0
    _
  %s7 = ssub.s32 1, %s5
  %s8 = scalar_select 0, %s7, %s5
  // Predicated region
  $region2: #{bert_encoder_forward.7} parent=0 // pred_check
    _
  $region3: #{bert_encoder_forward.7} parent=0 // pred_check_branch
    %10 = sbr.rel (0) target = $region5
  $region4: #{bert_encoder_forward.7} parent=0 // pred_region
    _
  $region5: #{bert_encoder_forward.7} parent=0 // pred_fallthru
    _
  // Predicated region
  $region6: #{bert_encoder_forward.7} parent=0 // pred_check
    _
  $region7: #{bert_encoder_forward.7} parent=0 // pred_check_branch
    %12 = sbr.rel (0) target = $region9
  $region8: #{bert_encoder_forward.7} parent=0 // pred_region
    _
  $region9: #{bert_encoder_forward.7} parent=0 // pred_fallthru
    _
  // Predicated region
  $region10: #{bert_encoder_forward.7} parent=0 // pred_check
    _
  $region11: #{bert_encoder_forward.7} parent=0 // pred_check_branch
    %14 = sbr.rel (0) target = $region13
  $region12: #{bert_encoder_forward.7} parent=0 // pred_region
    _
  $region13: #{bert_encoder_forward.7} parent=0 // pred_fallthru
    _
  // Predicated region
  $region14: #{bert_encoder_forward.7} parent=0 // pred_check
    _
  $region15: #{bert_encoder_forward.7} parent=0 // pred_check_branch
    %16 = sbr.rel (0) target = $region17
  $region16: #{bert_encoder_forward.7} parent=0 // pred_region
    _
  $region17: #{bert_encoder_forward.7} parent=0 // pred_fallthru
    _
  %v17 = vld [vmem:[%s0] sm:$0xff]
  %v18 = vld [vmem:[%s0 + $0x8] sm:$0xff]
  %v19 = vld [vmem:[%s0 + $0x10] sm:$0xff]
  %v20 = vld [vmem:[%s0 + $0x18] sm:$0xff]
  %21 = vadd.xlane.f32.xlu0 %v17
  %v22 = vpop.xlane.xlu0 %21
  %23 = vadd.xlane.f32.xlu0 %v18
  %v24 = vpop.xlane.xlu0 %23
  %25 = vadd.xlane.f32.xlu0 %v19
  %v26 = vpop.xlane.xlu0 %25
  %27 = vadd.xlane.f32.xlu0 %v20
  %v28 = vpop.xlane.xlu0 %27
  %v29 = vmul.f32 %v22, 0.0078125
  %v30 = vmul.f32 %v24, 0.0078125
  %v31 = vmul.f32 %v26, 0.0078125
  %v32 = vmul.f32 %v28, 0.0078125
  %v33 = vsub.f32 %v17, %v29
  %v34 = vsub.f32 %v18, %v30
  %v35 = vsub.f32 %v19, %v31
  %v36 = vsub.f32 %v20, %v32
  %v37 = vmul.f32 %v33, %v33
  %v38 = vmul.f32 %v34, %v34
  %v39 = vmul.f32 %v35, %v35
  %v40 = vmul.f32 %v36, %v36
  %41 = vadd.xlane.f32.xlu0 %v37
  %v42 = vpop.xlane.xlu0 %41
  %43 = vadd.xlane.f32.xlu0 %v38
  %v44 = vpop.xlane.xlu0 %43
  %45 = vadd.xlane.f32.xlu0 %v39
  %v46 = vpop.xlane.xlu0 %45
  %47 = vadd.xlane.f32.xlu0 %v40
  %v48 = vpop.xlane.xlu0 %47
  %v49 = vmul.f32 %v42, 0.0078125
  %v50 = vmul.f32 %v44, 0.0078125
  %v51 = vmul.f32 %v46, 0.0078125
  %v52 = vmul.f32 %v48, 0.0078125
  %v53 = vadd.f32 %v49, 1e-05
  %v54 = vadd.f32 %v50, 1e-05
  %v55 = vadd.f32 %v51, 1e-05
  %v56 = vadd.f32 %v52, 1e-05
  %v57 = vrsqrt.pop %v53
  %v58 = vrsqrt.pop %v54
  %v59 = vrsqrt.pop %v55
  %v60 = vrsqrt.pop %v56
  %v61 = vmul.f32 %v33, %v57
  %v62 = vmul.f32 %v34, %v58
  %v63 = vmul.f32 %v35, %v59
  %v64 = vmul.f32 %v36, %v60
  %v65 = vld [vmem:[%s2] sm:$0x1]
  %v67 = vlaneseq
  %v68 = vshrl.u32 %v67, 7
  %v69 = vsub.s32 0, %v68
  %v70 = vrot.slane %v65, %v69
  %v72 = vmul.f32 %v70, %v61
  %v73 = vmul.f32 %v70, %v62
  %v74 = vmul.f32 %v70, %v63
  %v75 = vmul.f32 %v70, %v64
  %v76 = vld [vmem:[%s3] sm:$0x1]
  %v78 = vlaneseq
  %v79 = vshrl.u32 %v78, 7
  %v80 = vsub.s32 0, %v79
  %v81 = vrot.slane %v76, %v80
  %v83 = vadd.f32 %v72, %v81
  %v84 = vadd.f32 %v73, %v81
  %v85 = vadd.f32 %v74, %v81
  %v86 = vadd.f32 %v75, %v81
  %v87 = vld [vmem:[%s1] sm:$0xff]
  %v88 = vld [vmem:[%s1 + $0x8] sm:$0xff]
  %v89 = vld [vmem:[%s1 + $0x10] sm:$0xff]
  %v90 = vld [vmem:[%s1 + $0x18] sm:$0xff]
  %v91 = vadd.f32 %v83, %v87
  %v92 = vadd.f32 %v84, %v88
  %v93 = vadd.f32 %v85, %v89
  %v94 = vadd.f32 %v86, %v90
  %95 = vst [vmem:[%s4] sm:$0xff] %v91
  %96 = vst [vmem:[%s4 + $0x8] sm:$0xff] %v92
  %97 = vst [vmem:[%s4 + $0x10] sm:$0xff] %v93
  %98 = vst [vmem:[%s4 + $0x18] sm:$0xff] %v94
  // Predicated region
  $region18: #{bert_encoder_forward.7} parent=0 // pred_check
    _
  $region19: #{bert_encoder_forward.7} parent=0 // pred_check_branch
    %100 = sbr.rel (0) target = $region21
  $region20: #{bert_encoder_forward.7} parent=0 // pred_region
    _
  $region21: #{bert_encoder_forward.7} parent=0 // pred_fallthru
    _
  // Predicated region
  $region22: #{bert_encoder_forward.7} parent=0 // pred_check
    _
  $region23: #{bert_encoder_forward.7} parent=0 // pred_check_branch
    %102 = sbr.rel (0) target = $region25
  $region24: #{bert_encoder_forward.7} parent=0 // pred_region
    _
  $region25: #{bert_encoder_forward.7} parent=0 // pred_fallthru
    _

// kernel: bert_encoder_forward.6
$region0: #{bert_encoder_forward.6}
  #allocation0 [shape = 'u32[]', space=smem, size = 0x4, offset = 0x4, fixed_abs, tag = 'smem constant byte address 0x4 - core index']
  #allocation1 [shape = 'u32[144,128]{1,0:T(1,128)}', space=vmem, size = 0x12000, scoped, tag = 'internal scratch']
  %s0 = inlined_call_operand.vmem [shape: bf16[32,384], index: 0, kind: input, shape index: {}, may-alias: {0,1,2}]
  %s1 = inlined_call_operand.vmem [shape: bf16[32,384], index: 1, kind: input, shape index: {}, may-alias: {0,1,2}]
  %s2 = inlined_call_operand.vmem [shape: bf16[32,384], index: 2, kind: input, shape index: {}, may-alias: {0,1,2}]
  %s3 = inlined_call_operand.vmem [shape: f32[32,128], index: 3, kind: output, shape index: {}]
  %s4 = sld [smem:[#allocation0]]
  $region168: #{bert_encoder_forward.6} parent=0
    _
  %s6 = ssub.s32 1, %s4
  %s7 = scalar_select 0, %s6, %s4
  $region1: #{bert_encoder_forward.6} parent=0
    #allocation2 [shape = 'u8[8192]{0}', space=vmem, size = 0x2000, scoped, tag = 'input window, operand 0']
    #allocation3 [shape = 'u8[8192]{0}', space=vmem, size = 0x2000, scoped, tag = 'input window, operand 1']
    #allocation4 [shape = 'u8[8192]{0}', space=vmem, size = 0x2000, scoped, tag = 'input window, operand 2']
    loop: start=0, step=1, limit=4
    $region2: #{bert_encoder_forward.6} parent=1 // loop_pre_header
      _
    $region3: #{bert_encoder_forward.6} parent=1 // loop_header
      %s9 = sphi 0, %s13
      %p10 = scmp.ge.s32.totalorder %s9, 4
      %s16 = sphi 0, %s28
      %s17 = sphi 0, %s24
      %s18 = sphi 0, %s16
      %s19 = sphi 0, %s17
      %s20 = sphi 0, %s18
      %s21 = sphi 0, %s19
      %s33 = sphi 0, %s35
      %s36 = sphi 0, %s33
      %s37 = sphi 0, %s36
      %s53 = sphi 0, %s37
      %s63 = sphi 0, %s65
      %s66 = sphi 0, %s63
      %s67 = sphi 0, %s66
      %s83 = sphi 0, %s67
      %s93 = sphi 0, %s95
      %s96 = sphi 0, %s93
      %s97 = sphi 0, %s96
      %s113 = sphi 0, %s97
      %s121 = sphi 0, %s123
      %s124 = sphi 0, %s121
      %s125 = sphi 0, %s124
      %s141 = sphi 0, %s125
    $region4: #{bert_encoder_forward.6} parent=1 // loop_header_branch
      %12 = sbr.rel (%p10) target = $region8
    $region5: #{bert_encoder_forward.6} parent=1 // loop_body
      %s14 = ssub.s32 %s9, 1
      %s15 = ssub.s32 %s9, 2
      %s22 = sadd.s32 1, %s17
      %p23 = scmp.ge.s32.totalorder %s22, 1
      %s24 = scalar_select %p23, 0, %s22
      %s25 = sadd.s32 1, %s16
      %s26 = scalar_select %p23, %s25, %s16
      %p27 = scmp.ge.s32.totalorder %s26, 2
      %s28 = scalar_select %p27, 0, %s26
      %s29 = ssub.s32 %s16, %s28
      %s30 = ssub.s32 %s17, %s24
      %s31 = sor.u32 %s29, %s30
      %p32 = scmp.eq.s32.totalorder %s31, 0
      %s34 = sadd.s32 %s33, 1
      %s35 = scalar_select %p32, %s33, %s34
      %p38 = pneg %p32
      %p39 = scmp.eq.s32.totalorder %s9, 1
      %p40 = por %p38, %p39
      %p41 = scmp.ne.s32.totalorder %s33, %s36
      %p42 = scmp.eq.s32.totalorder %s9, 0
      %p43 = por %p41, %p42
      %p44 = scmp.ne.s32.totalorder %s33, %s36
      %p45 = scmp.eq.s32.totalorder %s14, 1
      %p46 = por %p44, %p45
      %p47 = scmp.ne.s32.totalorder %s36, %s37
      %p48 = scmp.eq.s32.totalorder %s14, 0
      %p49 = por %p47, %p48
      %p50 = scmp.ne.s32.totalorder %s36, %s37
      %p51 = scmp.eq.s32.totalorder %s15, 1
      %p52 = por %p50, %p51
      %p54 = scmp.ne.s32.totalorder %s37, %s53
      %p55 = scmp.eq.s32.totalorder %s15, 0
      %p56 = por %p54, %p55
      %s57 = sadd.s32 %s17, 1
      %s58 = sadd.s32 %s24, 1
      %s59 = ssub.s32 %s16, %s28
      %s60 = ssub.s32 %s57, %s58
      %s61 = sor.u32 %s59, %s60
      %p62 = scmp.eq.s32.totalorder %s61, 0
      %s64 = sadd.s32 %s63, 1
      %s65 = scalar_select %p62, %s63, %s64
      %p68 = pneg %p62
      %p69 = scmp.eq.s32.totalorder %s9, 1
      %p70 = por %p68, %p69
      %p71 = scmp.ne.s32.totalorder %s63, %s66
      %p72 = scmp.eq.s32.totalorder %s9, 0
      %p73 = por %p71, %p72
      %p74 = scmp.ne.s32.totalorder %s63, %s66
      %p75 = scmp.eq.s32.totalorder %s14, 1
      %p76 = por %p74, %p75
      %p77 = scmp.ne.s32.totalorder %s66, %s67
      %p78 = scmp.eq.s32.totalorder %s14, 0
      %p79 = por %p77, %p78
      %p80 = scmp.ne.s32.totalorder %s66, %s67
      %p81 = scmp.eq.s32.totalorder %s15, 1
      %p82 = por %p80, %p81
      %p84 = scmp.ne.s32.totalorder %s67, %s83
      %p85 = scmp.eq.s32.totalorder %s15, 0
      %p86 = por %p84, %p85
      %s87 = sadd.s32 %s17, 2
      %s88 = sadd.s32 %s24, 2
      %s89 = ssub.s32 %s16, %s28
      %s90 = ssub.s32 %s87, %s88
      %s91 = sor.u32 %s89, %s90
      %p92 = scmp.eq.s32.totalorder %s91, 0
      %s94 = sadd.s32 %s93, 1
      %s95 = scalar_select %p92, %s93, %s94
      %p98 = pneg %p92
      %p99 = scmp.eq.s32.totalorder %s9, 1
      %p100 = por %p98, %p99
      %p101 = scmp.ne.s32.totalorder %s93, %s96
      %p102 = scmp.eq.s32.totalorder %s9, 0
      %p103 = por %p101, %p102
      %p104 = scmp.ne.s32.totalorder %s93, %s96
      %p105 = scmp.eq.s32.totalorder %s14, 1
      %p106 = por %p104, %p105
      %p107 = scmp.ne.s32.totalorder %s96, %s97
      %p108 = scmp.eq.s32.totalorder %s14, 0
      %p109 = por %p107, %p108
      %p110 = scmp.ne.s32.totalorder %s96, %s97
      %p111 = scmp.eq.s32.totalorder %s15, 1
      %p112 = por %p110, %p111
      %p114 = scmp.ne.s32.totalorder %s97, %s113
      %p115 = scmp.eq.s32.totalorder %s15, 0
      %p116 = por %p114, %p115
      %s117 = ssub.s32 %s16, %s28
      %s118 = ssub.s32 %s17, %s24
      %s119 = sor.u32 %s117, %s118
      %p120 = scmp.eq.s32.totalorder %s119, 0
      %s122 = sadd.s32 %s121, 1
      %s123 = scalar_select %p120, %s121, %s122
      %p126 = pneg %p120
      %p127 = scmp.eq.s32.totalorder %s9, 1
      %p128 = por %p126, %p127
      %p129 = scmp.ne.s32.totalorder %s121, %s124
      %p130 = scmp.eq.s32.totalorder %s9, 0
      %p131 = por %p129, %p130
      %p132 = scmp.ne.s32.totalorder %s121, %s124
      %p133 = scmp.eq.s32.totalorder %s14, 1
      %p134 = por %p132, %p133
      %p135 = scmp.ne.s32.totalorder %s124, %s125
      %p136 = scmp.eq.s32.totalorder %s14, 0
      %p137 = por %p135, %p136
      %p138 = scmp.ne.s32.totalorder %s124, %s125
      %p139 = scmp.eq.s32.totalorder %s15, 1
      %p140 = por %p138, %p139
      %p142 = scmp.ne.s32.totalorder %s125, %s141
      %p143 = scmp.eq.s32.totalorder %s15, 0
      %p144 = por %p142, %p143
      %p145 = scmp.le.s32.totalorder 1, %s9
      %p146 = scmp.lt.s32.totalorder %s9, 3
      %p147 = pnand %p145, %p146
      %p148 = pneg %p147
      // Predicated region
      $region9: #{bert_encoder_forward.6} parent=5 // pred_check
        _
      $region10: #{bert_encoder_forward.6} parent=5 // pred_check_branch
        %150 = sbr.rel (%p147) target = $region12
      $region11: #{bert_encoder_forward.6} parent=5 // pred_region
        %s151 = ssub.s32 %s9, 1
      $region12: #{bert_encoder_forward.6} parent=5 // pred_fallthru
        _
      %p152 = scmp.lt.s32.totalorder %s9, 2
      // Predicated region
      $region13: #{bert_encoder_forward.6} parent=5 // pred_check
        %p153 = pneg %p152
      $region14: #{bert_encoder_forward.6} parent=5 // pred_check_branch
        %155 = sbr.rel (%p153) target = $region16
      $region15: #{bert_encoder_forward.6} parent=5 // pred_region
        // Predicated region
        $region17: #{bert_encoder_forward.6} parent=15 // pred_check
          %p156 = pneg %p43
        $region18: #{bert_encoder_forward.6} parent=15 // pred_check_branch
          %158 = sbr.rel (%p156) target = $region20
        $region19: #{bert_encoder_forward.6} parent=15 // pred_region
          %s159 = sand.u32 %s33, 1
          %s160 = sand.u32 %s33, 1
          %s161 = smul.addr %s160, 8
          %s162 = scalar_lea.vmem [#allocation2], %s161
          %s163 = smul.u32 2, %s16
          %s164 = smul.addr %s163, 3
          %s165 = sadd.s32 %s17, %s164
          %s166 = smul.addr %s165, 4
          %s167 = scalar_lea.vmem %s0, %s166
          // Predicated region
          $region21: #{bert_encoder_forward.6} parent=19 // pred_check
            _
          $region22: #{bert_encoder_forward.6} parent=19 // pred_check_branch
            %169 = sbr.rel (0) target = $region24
          $region23: #{bert_encoder_forward.6} parent=19 // pred_region
            // Predicated region
            $region25: #{bert_encoder_forward.6} parent=23 // pred_check
              _
            $region26: #{bert_encoder_forward.6} parent=23 // pred_check_branch
              %171 = sbr.rel target = $region28
            $region27: #{bert_encoder_forward.6} parent=23 // pred_region
              // Predicated region
              $region40: #{bert_encoder_forward.6} parent=27 // pred_check
                _
              $region41: #{bert_encoder_forward.6} parent=27 // pred_check_branch
                %189 = sbr.rel (0) target = $region43
              $region42: #{bert_encoder_forward.6} parent=27 // pred_region
                loop: start=0, step=1, limit=1
                $region44: #{bert_encoder_forward.6} parent=42 // loop_pre_header
                  _
                $region45: #{bert_encoder_forward.6} parent=42 // loop_header
                  %s191 = sphi 0, %s195
                  %p192 = scmp.ge.s32.totalorder %s191, 1
                  %s196 = sphi %s167, %s167
                  %s197 = sphi %s162, %s162
                $region46: #{bert_encoder_forward.6} parent=42 // loop_header_branch
                  %194 = sbr.rel (%p192) target = $region50
                $region47: #{bert_encoder_forward.6} parent=42 // loop_body
                  _
                $region48: #{bert_encoder_forward.6} parent=42 // loop_footer
                  %s195 = sadd.s32 1, %s191
                $region49: #{bert_encoder_forward.6} parent=42 // loop_footer_branch
                  %190 = sbr.rel target = $region45
                $region50: #{bert_encoder_forward.6} parent=42 // loop_exit
                  _
                %s199 = ssub.s32 16, 1
                loop: start=0, step=1, limit=1
                $region51: #{bert_encoder_forward.6} parent=42 // loop_pre_header
                  _
                $region52: #{bert_encoder_forward.6} parent=42 // loop_header
                  %s201 = sphi 0, %s205
                  %p202 = scmp.ge.s32.totalorder %s201, 1
                  %s206 = sphi %s167, %s167
                  %s207 = sphi %s162, %s162
                $region53: #{bert_encoder_forward.6} parent=42 // loop_header_branch
                  %204 = sbr.rel (%p202) target = $region57
                $region54: #{bert_encoder_forward.6} parent=42 // loop_body
                  %v208 = vld [vmem:[%s206] sm:%s199]
                  %209 = vst [vmem:[%s207] sm:%s199] %v208
                  %v210 = vld [vmem:[%s206 + $0xc] sm:%s199]
                  %211 = vst [vmem:[%s207 + $0x4] sm:%s199] %v210
                $region55: #{bert_encoder_forward.6} parent=42 // loop_footer
                  %s205 = sadd.s32 1, %s201
                $region56: #{bert_encoder_forward.6} parent=42 // loop_footer_branch
                  %200 = sbr.rel target = $region52
                $region57: #{bert_encoder_forward.6} parent=42 // loop_exit
                  _
              $region43: #{bert_encoder_forward.6} parent=27 // pred_fallthru
                _
            $region28: #{bert_encoder_forward.6} parent=23 // pred_fallthru
              _
            // Predicated region
            $region29: #{bert_encoder_forward.6} parent=23 // pred_check
              _
            $region30: #{bert_encoder_forward.6} parent=23 // pred_check_branch
              %173 = sbr.rel (0) target = $region32
            $region31: #{bert_encoder_forward.6} parent=23 // pred_region
              %s175 = ssub.s32 16, 1
              loop: start=0, step=1, limit=1
              $region33: #{bert_encoder_forward.6} parent=31 // loop_pre_header
                _
              $region34: #{bert_encoder_forward.6} parent=31 // loop_header
                %s177 = sphi 0, %s181
                %p178 = scmp.ge.s32.totalorder %s177, 1
                %s182 = sphi %s167, %s167
                %s183 = sphi %s162, %s162
              $region35: #{bert_encoder_forward.6} parent=31 // loop_header_branch
                %180 = sbr.rel (%p178) target = $region39
              $region36: #{bert_encoder_forward.6} parent=31 // loop_body
                %v184 = vld [vmem:[%s182] sm:%s175]
                %185 = vst [vmem:[%s183] sm:%s175] %v184
                %v186 = vld [vmem:[%s182 + $0xc] sm:%s175]
                %187 = vst [vmem:[%s183 + $0x4] sm:%s175] %v186
              $region37: #{bert_encoder_forward.6} parent=31 // loop_footer
                %s181 = sadd.s32 1, %s177
              $region38: #{bert_encoder_forward.6} parent=31 // loop_footer_branch
                %176 = sbr.rel target = $region34
              $region39: #{bert_encoder_forward.6} parent=31 // loop_exit
                _
            $region32: #{bert_encoder_forward.6} parent=23 // pred_fallthru
              _
          $region24: #{bert_encoder_forward.6} parent=19 // pred_fallthru
            _
          %212 = vnop
        $region20: #{bert_encoder_forward.6} parent=15 // pred_fallthru
          _
        // Predicated region
        $region58: #{bert_encoder_forward.6} parent=15 // pred_check
          %p213 = pneg %p73
        $region59: #{bert_encoder_forward.6} parent=15 // pred_check_branch
          %215 = sbr.rel (%p213) target = $region61
        $region60: #{bert_encoder_forward.6} parent=15 // pred_region
          %s216 = sand.u32 %s63, 1
          %s217 = sand.u32 %s63, 1
          %s218 = smul.addr %s217, 8
          %s219 = scalar_lea.vmem [#allocation3], %s218
          %s220 = sadd.s32 %s17, 1
          %s221 = smul.u32 2, %s16
          %s222 = smul.addr %s221, 3
          %s223 = sadd.s32 %s220, %s222
          %s224 = smul.addr %s223, 4
          %s225 = scalar_lea.vmem %s1, %s224
          // Predicated region
          $region62: #{bert_encoder_forward.6} parent=60 // pred_check
            _
          $region63: #{bert_encoder_forward.6} parent=60 // pred_check_branch
            %227 = sbr.rel (0) target = $region65
          $region64: #{bert_encoder_forward.6} parent=60 // pred_region
            // Predicated region
            $region66: #{bert_encoder_forward.6} parent=64 // pred_check
              _
            $region67: #{bert_encoder_forward.6} parent=64 // pred_check_branch
              %229 = sbr.rel target = $region69
            $region68: #{bert_encoder_forward.6} parent=64 // pred_region
              // Predicated region
              $region81: #{bert_encoder_forward.6} parent=68 // pred_check
                _
              $region82: #{bert_encoder_forward.6} parent=68 // pred_check_branch
                %247 = sbr.rel (0) target = $region84
              $region83: #{bert_encoder_forward.6} parent=68 // pred_region
                loop: start=0, step=1, limit=1
                $region85: #{bert_encoder_forward.6} parent=83 // loop_pre_header
                  _
                $region86: #{bert_encoder_forward.6} parent=83 // loop_header
                  %s249 = sphi 0, %s253
                  %p250 = scmp.ge.s32.totalorder %s249, 1
                  %s254 = sphi %s225, %s225
                  %s255 = sphi %s219, %s219
                $region87: #{bert_encoder_forward.6} parent=83 // loop_header_branch
                  %252 = sbr.rel (%p250) target = $region91
                $region88: #{bert_encoder_forward.6} parent=83 // loop_body
                  _
                $region89: #{bert_encoder_forward.6} parent=83 // loop_footer
                  %s253 = sadd.s32 1, %s249
                $region90: #{bert_encoder_forward.6} parent=83 // loop_footer_branch
                  %248 = sbr.rel target = $region86
                $region91: #{bert_encoder_forward.6} parent=83 // loop_exit
                  _
                %s257 = ssub.s32 16, 1
                loop: start=0, step=1, limit=1
                $region92: #{bert_encoder_forward.6} parent=83 // loop_pre_header
                  _
                $region93: #{bert_encoder_forward.6} parent=83 // loop_header
                  %s259 = sphi 0, %s263
                  %p260 = scmp.ge.s32.totalorder %s259, 1
                  %s264 = sphi %s225, %s225
                  %s265 = sphi %s219, %s219
                $region94: #{bert_encoder_forward.6} parent=83 // loop_header_branch
                  %262 = sbr.rel (%p260) target = $region98
                $region95: #{bert_encoder_forward.6} parent=83 // loop_body
                  %v266 = vld [vmem:[%s264] sm:%s257]
                  %267 = vst [vmem:[%s265] sm:%s257] %v266
                  %v268 = vld [vmem:[%s264 + $0xc] sm:%s257]
                  %269 = vst [vmem:[%s265 + $0x4] sm:%s257] %v268
                $region96: #{bert_encoder_forward.6} parent=83 // loop_footer
                  %s263 = sadd.s32 1, %s259
                $region97: #{bert_encoder_forward.6} parent=83 // loop_footer_branch
                  %258 = sbr.rel target = $region93
                $region98: #{bert_encoder_forward.6} parent=83 // loop_exit
                  _
              $region84: #{bert_encoder_forward.6} parent=68 // pred_fallthru
                _
            $region69: #{bert_encoder_forward.6} parent=64 // pred_fallthru
              _
            // Predicated region
            $region70: #{bert_encoder_forward.6} parent=64 // pred_check
              _
            $region71: #{bert_encoder_forward.6} parent=64 // pred_check_branch
              %231 = sbr.rel (0) target = $region73
            $region72: #{bert_encoder_forward.6} parent=64 // pred_region
              %s233 = ssub.s32 16, 1
              loop: start=0, step=1, limit=1
              $region74: #{bert_encoder_forward.6} parent=72 // loop_pre_header
                _
              $region75: #{bert_encoder_forward.6} parent=72 // loop_header
                %s235 = sphi 0, %s239
                %p236 = scmp.ge.s32.totalorder %s235, 1
                %s240 = sphi %s225, %s225
                %s241 = sphi %s219, %s219
              $region76: #{bert_encoder_forward.6} parent=72 // loop_header_branch
                %238 = sbr.rel (%p236) target = $region80
              $region77: #{bert_encoder_forward.6} parent=72 // loop_body
                %v242 = vld [vmem:[%s240] sm:%s233]
                %243 = vst [vmem:[%s241] sm:%s233] %v242
                %v244 = vld [vmem:[%s240 + $0xc] sm:%s233]
                %245 = vst [vmem:[%s241 + $0x4] sm:%s233] %v244
              $region78: #{bert_encoder_forward.6} parent=72 // loop_footer
                %s239 = sadd.s32 1, %s235
              $region79: #{bert_encoder_forward.6} parent=72 // loop_footer_branch
                %234 = sbr.rel target = $region75
              $region80: #{bert_encoder_forward.6} parent=72 // loop_exit
                _
            $region73: #{bert_encoder_forward.6} parent=64 // pred_fallthru
              _
          $region65: #{bert_encoder_forward.6} parent=60 // pred_fallthru
            _
          %270 = vnop
        $region61: #{bert_encoder_forward.6} parent=15 // pred_fallthru
          _
        // Predicated region
        $region99: #{bert_encoder_forward.6} parent=15 // pred_check
          %p271 = pneg %p103
        $region100: #{bert_encoder_forward.6} parent=15 // pred_check_branch
          %273 = sbr.rel (%p271) target = $region102
        $region101: #{bert_encoder_forward.6} parent=15 // pred_region
          %s274 = sand.u32 %s93, 1
          %s275 = sand.u32 %s93, 1
          %s276 = smul.addr %s275, 8
          %s277 = scalar_lea.vmem [#allocation4], %s276
          %s278 = sadd.s32 %s17, 2
          %s279 = smul.u32 2, %s16
          %s280 = smul.addr %s279, 3
          %s281 = sadd.s32 %s278, %s280
          %s282 = smul.addr %s281, 4
          %s283 = scalar_lea.vmem %s2, %s282
          // Predicated region
          $region103: #{bert_encoder_forward.6} parent=101 // pred_check
            _
          $region104: #{bert_encoder_forward.6} parent=101 // pred_check_branch
            %285 = sbr.rel (0) target = $region106
          $region105: #{bert_encoder_forward.6} parent=101 // pred_region
            // Predicated region
            $region107: #{bert_encoder_forward.6} parent=105 // pred_check
              _
            $region108: #{bert_encoder_forward.6} parent=105 // pred_check_branch
              %287 = sbr.rel target = $region110
            $region109: #{bert_encoder_forward.6} parent=105 // pred_region
              // Predicated region
              $region122: #{bert_encoder_forward.6} parent=109 // pred_check
                _
              $region123: #{bert_encoder_forward.6} parent=109 // pred_check_branch
                %305 = sbr.rel (0) target = $region125
              $region124: #{bert_encoder_forward.6} parent=109 // pred_region
                loop: start=0, step=1, limit=1
                $region126: #{bert_encoder_forward.6} parent=124 // loop_pre_header
                  _
                $region127: #{bert_encoder_forward.6} parent=124 // loop_header
                  %s307 = sphi 0, %s311
                  %p308 = scmp.ge.s32.totalorder %s307, 1
                  %s312 = sphi %s283, %s283
                  %s313 = sphi %s277, %s277
                $region128: #{bert_encoder_forward.6} parent=124 // loop_header_branch
                  %310 = sbr.rel (%p308) target = $region132
                $region129: #{bert_encoder_forward.6} parent=124 // loop_body
                  _
                $region130: #{bert_encoder_forward.6} parent=124 // loop_footer
                  %s311 = sadd.s32 1, %s307
                $region131: #{bert_encoder_forward.6} parent=124 // loop_footer_branch
                  %306 = sbr.rel target = $region127
                $region132: #{bert_encoder_forward.6} parent=124 // loop_exit
                  _
                %s315 = ssub.s32 16, 1
                loop: start=0, step=1, limit=1
                $region133: #{bert_encoder_forward.6} parent=124 // loop_pre_header
                  _
                $region134: #{bert_encoder_forward.6} parent=124 // loop_header
                  %s317 = sphi 0, %s321
                  %p318 = scmp.ge.s32.totalorder %s317, 1
                  %s322 = sphi %s283, %s283
                  %s323 = sphi %s277, %s277
                $region135: #{bert_encoder_forward.6} parent=124 // loop_header_branch
                  %320 = sbr.rel (%p318) target = $region139
                $region136: #{bert_encoder_forward.6} parent=124 // loop_body
                  %v324 = vld [vmem:[%s322] sm:%s315]
                  %325 = vst [vmem:[%s323] sm:%s315] %v324
                  %v326 = vld [vmem:[%s322 + $0xc] sm:%s315]
                  %327 = vst [vmem:[%s323 + $0x4] sm:%s315] %v326
                $region137: #{bert_encoder_forward.6} parent=124 // loop_footer
                  %s321 = sadd.s32 1, %s317
                $region138: #{bert_encoder_forward.6} parent=124 // loop_footer_branch
                  %316 = sbr.rel target = $region134
                $region139: #{bert_encoder_forward.6} parent=124 // loop_exit
                  _
              $region125: #{bert_encoder_forward.6} parent=109 // pred_fallthru
                _
            $region110: #{bert_encoder_forward.6} parent=105 // pred_fallthru
              _
            // Predicated region
            $region111: #{bert_encoder_forward.6} parent=105 // pred_check
              _
            $region112: #{bert_encoder_forward.6} parent=105 // pred_check_branch
              %289 = sbr.rel (0) target = $region114
            $region113: #{bert_encoder_forward.6} parent=105 // pred_region
              %s291 = ssub.s32 16, 1
              loop: start=0, step=1, limit=1
              $region115: #{bert_encoder_forward.6} parent=113 // loop_pre_header
                _
              $region116: #{bert_encoder_forward.6} parent=113 // loop_header
                %s293 = sphi 0, %s297
                %p294 = scmp.ge.s32.totalorder %s293, 1
                %s298 = sphi %s283, %s283
                %s299 = sphi %s277, %s277
              $region117: #{bert_encoder_forward.6} parent=113 // loop_header_branch
                %296 = sbr.rel (%p294) target = $region121
              $region118: #{bert_encoder_forward.6} parent=113 // loop_body
                %v300 = vld [vmem:[%s298] sm:%s291]
                %301 = vst [vmem:[%s299] sm:%s291] %v300
                %v302 = vld [vmem:[%s298 + $0xc] sm:%s291]
                %303 = vst [vmem:[%s299 + $0x4] sm:%s291] %v302
              $region119: #{bert_encoder_forward.6} parent=113 // loop_footer
                %s297 = sadd.s32 1, %s293
              $region120: #{bert_encoder_forward.6} parent=113 // loop_footer_branch
                %292 = sbr.rel target = $region116
              $region121: #{bert_encoder_forward.6} parent=113 // loop_exit
                _
            $region114: #{bert_encoder_forward.6} parent=105 // pred_fallthru
              _
          $region106: #{bert_encoder_forward.6} parent=101 // pred_fallthru
            _
          %328 = vnop
        $region102: #{bert_encoder_forward.6} parent=15 // pred_fallthru
          _
      $region16: #{bert_encoder_forward.6} parent=5 // pred_fallthru
        _
      %p329 = scmp.le.s32.totalorder 1, %s9
      %p330 = scmp.lt.s32.totalorder %s9, 3
      %p331 = pnand %p329, %p330
      %p332 = pneg %p331
      // Predicated region
      $region140: #{bert_encoder_forward.6} parent=5 // pred_check
        _
      $region141: #{bert_encoder_forward.6} parent=5 // pred_check_branch
        %334 = sbr.rel (%p331) target = $region143
      $region142: #{bert_encoder_forward.6} parent=5 // pred_region
        %s335 = ssub.s32 %s9, 1
        %s336 = sand.u32 %s36, 1
        %s337 = sand.u32 %s36, 1
        %s338 = smul.addr %s337, 8
        %s339 = scalar_lea.vmem [#allocation2], %s338
        // Predicated region
        $region144: #{bert_encoder_forward.6} parent=142 // pred_check
          %p340 = pneg %p49
        $region145: #{bert_encoder_forward.6} parent=142 // pred_check_branch
          %342 = sbr.rel (%p340) target = $region147
        $region146: #{bert_encoder_forward.6} parent=142 // pred_region
          _
        $region147: #{bert_encoder_forward.6} parent=142 // pred_fallthru
          _
        %s343 = sand.u32 %s66, 1
        %s344 = sand.u32 %s66, 1
        %s345 = smul.addr %s344, 8
        %s346 = scalar_lea.vmem [#allocation3], %s345
        // Predicated region
        $region148: #{bert_encoder_forward.6} parent=142 // pred_check
          %p347 = pneg %p79
        $region149: #{bert_encoder_forward.6} parent=142 // pred_check_branch
          %349 = sbr.rel (%p347) target = $region151
        $region150: #{bert_encoder_forward.6} parent=142 // pred_region
          _
        $region151: #{bert_encoder_forward.6} parent=142 // pred_fallthru
          _
        %s350 = sand.u32 %s96, 1
        %s351 = sand.u32 %s96, 1
        %s352 = smul.addr %s351, 8
        %s353 = scalar_lea.vmem [#allocation4], %s352
        // Predicated region
        $region152: #{bert_encoder_forward.6} parent=142 // pred_check
          %p354 = pneg %p109
        $region153: #{bert_encoder_forward.6} parent=142 // pred_check_branch
          %356 = sbr.rel (%p354) target = $region155
        $region154: #{bert_encoder_forward.6} parent=142 // pred_region
          _
        $region155: #{bert_encoder_forward.6} parent=142 // pred_fallthru
          _
        %s357 = sand.u32 %s36, 1
        %s358 = sand.u32 %s36, 1
        %s359 = smul.addr %s358, 8
        %s360 = scalar_lea.vmem [#allocation2], %s359
        %p361 = pneg %p49
        %p362 = pneg %p46
        %s363 = sand.u32 %s66, 1
        %s364 = sand.u32 %s66, 1
        %s365 = smul.addr %s364, 8
        %s366 = scalar_lea.vmem [#allocation3], %s365
        %p367 = pneg %p79
        %p368 = pneg %p76
        %s369 = sand.u32 %s96, 1
        %s370 = sand.u32 %s96, 1
        %s371 = smul.addr %s370, 8
        %s372 = scalar_lea.vmem [#allocation4], %s371
        %p373 = pneg %p109
        %p374 = pneg %p106
        %p375 = pneg %p137
        %p376 = pneg %p134
        %s377 = smul.u32 2, %s18
        %p378 = scmp.lt.s32.totalorder %s377, 3
        %s379 = scalar_select %p378, %s377, 3
        %p380 = scmp.lt.s32.totalorder %s19, 0
        %s381 = scalar_select %p380, %s19, 0
        %s382 = sadd.s32 %s381, %s379
        %s383 = smul.addr %s382, 8
        %s384 = scalar_lea.vmem %s3, %s383
        %s385 = smul.u32 2, %s18
        %s386 = sadd.s32 %s19, 1
        %s387 = smul.u32 2, %s18
        %s388 = sadd.s32 %s19, 2
        %s389 = smul.u32 2, %s18
        %s390 = smul.u32 2, %s18
        %p391 = scmp.lt.s32.totalorder %s390, 3
        %s392 = scalar_select %p391, %s390, 3
        %p393 = scmp.lt.s32.totalorder %s19, 0
        %s394 = scalar_select %p393, %s19, 0
        %s395 = sadd.s32 %s394, %s392
        %s396 = smul.addr %s395, 8
        %s397 = scalar_lea.vmem %s3, %s396
        %s398 = smul.u32 2, %s18
        %v400 = vld [vmem:[%s339] sm:$0xf]
        %v401 = vld [vmem:[%s339 + $0x4] sm:$0xf]
        %v402 = vld [vmem:[%s346] sm:$0xf]
        %v403 = vld [vmem:[%s346 + $0x4] sm:$0xf]
        %v404 = vld [vmem:[%s353] sm:$0xf]
        %v405 = vld [vmem:[%s353 + $0x4] sm:$0xf]
        %v408 = vunpack.c.l.b16 %v400
        %v409 = vunpack.c.l.b16 %v401
        %v410 = vpack.c.b16 %v409, %v408
        %v413 = vunpack.c.l.b16 %v402
        %v414 = vunpack.c.l.b16 %v403
        %v415 = vpack.c.b16 %v414, %v413
        %vm416 = vcmask 261120
        %v418 = vsel %vm416, %v410, 0
        %v421 = vsel %vm416, %v415, 0
        %423 = vmatprep.subr.bf16.mxu0 0
        %424 = vmatpush1.bf16.xpose.msra.mxu0 0
        %425 = vmatprep.subr.bf16.mxu0 0
        %426 = vmatpush1.bf16.xpose.msra.mxu0 0
        %427 = vmatprep.subr.bf16.mxu0 0
        %428 = vmatpush1.bf16.xpose.msra.mxu0 0
        %429 = vmatprep.subr.bf16.mxu0 0
        %430 = vmatpush1.bf16.xpose.msra.mxu0 0
        %431 = vmatprep.subr.bf16.mxu0 0
        %432 = vmatpush1.bf16.xpose.msra.mxu0 0
        %433 = vmatprep.subr.bf16.mxu0 0
        %434 = vmatpush1.bf16.xpose.msra.mxu0 0
        %435 = vmatprep.subr.bf16.mxu0 0
        %436 = vmatpush1.bf16.xpose.msra.mxu0 0
        %437 = vmatprep.subr.bf16.mxu0 0
        %438 = vmatpush1.bf16.xpose.msra.mxu0 %v421
        %439 = vmatprep.subr.bf16.mxu0 0
        %440 = vmatpush2.bf16.xpose.msra.mxu0 0
        %441 = vmatprep.subr.bf16.mxu0 0
        %442 = vmatpush2.bf16.xpose.msra.mxu0 0
        %443 = vmatprep.subr.bf16.mxu0 0
        %444 = vmatpush2.bf16.xpose.msra.mxu0 0
        %445 = vmatprep.subr.bf16.mxu0 0
        %446 = vmatpush2.bf16.xpose.msra.mxu0 0
        %447 = vmatprep.subr.bf16.mxu0 0
        %448 = vmatpush2.bf16.xpose.msra.mxu0 0
        %449 = vmatprep.subr.bf16.mxu0 0
        %450 = vmatpush2.bf16.xpose.msra.mxu0 0
        %451 = vmatprep.subr.bf16.mxu0 0
        %452 = vmatpush2.bf16.xpose.msra.mxu0 0
        %453 = vmatprep.subr.bf16.mxu0 0
        %454 = vmatpush2.bf16.xpose.msra.mxu0 0
        %455 = vmatprep.mubr.bf16.mxu0 0
        %456 = vmatmul.mubr.bf16.gmra.mxu0 %v418
        %v457 = vpop.f32.mrf.mxu0
        %v458 = vadd.f32 0.0, %v457
        %v459 = vpop.f32.mrf.mxu0
        %v460 = vpop.f32.mrf.mxu0
        %v461 = vadd.f32 0.0, %v460
        %v462 = vpop.f32.mrf.mxu0
        %463 = vdwg.mxu0
        %v464 = vmul.f32 %v458, 0.17677669
        %v465 = vmul.f32 %v461, 0.17677669
        %vm466 = vcmask 130048
        %v467 = vsel %vm466, %v464, -inf
        %468 = vmax.xlane.f32.xlu0 %v467
        %v469 = vpop.xlane.xlu0 %468
        %v470 = vsel %vm466, %v465, -inf
        %471 = vmax.xlane.f32.xlu0 %v470
        %v472 = vpop.xlane.xlu0 %471
        %v473 = vsub.f32 %v464, %v469
        %v474 = vsub.f32 %v465, %v472
        %v475 = vmul.f32 %v473, 1.442695
        %v476 = vpow.pop %v475
        %v477 = vmul.f32 %v474, 1.442695
        %v478 = vpow.pop %v477
        %v479 = vsel %vm466, %v476, 0.0
        %480 = vadd.xlane.f32.xlu0 %v479
        %v481 = vpop.xlane.xlu0 %480
        %v482 = vsel %vm466, %v478, 0.0
        %483 = vadd.xlane.f32.xlu0 %v482
        %v484 = vpop.xlane.xlu0 %483
        %v485 = vrcp.pop %v481
        %v486 = vrcp.pop %v484
        %v487 = vmul.f32 %v476, %v485
        %v488 = vmul.f32 %v478, %v486
        %v489 = vpack.c.bf16 %v488, %v487
        %v492 = vunpack.c.l.b16 %v404
        %v493 = vunpack.c.l.b16 %v405
        %v494 = vpack.c.b16 %v493, %v492
        %v497 = vsel %vm466, %v489, 0
        %499 = vmatprep.subr.bf16.mxu0 0
        %500 = vmatpush1.bf16.msra.mxu0 0
        %501 = vmatprep.subr.bf16.mxu0 0
        %502 = vmatpush1.bf16.msra.mxu0 0
        %503 = vmatprep.subr.bf16.mxu0 0
        %504 = vmatpush1.bf16.msra.mxu0 0
        %505 = vmatprep.subr.bf16.mxu0 0
        %506 = vmatpush1.bf16.msra.mxu0 0
        %507 = vmatprep.subr.bf16.mxu0 0
        %508 = vmatpush1.bf16.msra.mxu0 0
        %509 = vmatprep.subr.bf16.mxu0 0
        %510 = vmatpush1.bf16.msra.mxu0 0
        %511 = vmatprep.subr.bf16.mxu0 0
        %512 = vmatpush1.bf16.msra.mxu0 0
        %513 = vmatprep.subr.bf16.mxu0 0
        %514 = vmatpush1.bf16.msra.mxu0 %v494
        %515 = vmatprep.subr.bf16.mxu0 0
        %516 = vmatpush2.bf16.msra.mxu0 0
        %517 = vmatprep.subr.bf16.mxu0 0
        %518 = vmatpush2.bf16.msra.mxu0 0
        %519 = vmatprep.subr.bf16.mxu0 0
        %520 = vmatpush2.bf16.msra.mxu0 0
        %521 = vmatprep.subr.bf16.mxu0 0
        %522 = vmatpush2.bf16.msra.mxu0 0
        %523 = vmatprep.subr.bf16.mxu0 0
        %524 = vmatpush2.bf16.msra.mxu0 0
        %525 = vmatprep.subr.bf16.mxu0 0
        %526 = vmatpush2.bf16.msra.mxu0 0
        %527 = vmatprep.subr.bf16.mxu0 0
        %528 = vmatpush2.bf16.msra.mxu0 0
        %529 = vmatprep.subr.bf16.mxu0 0
        %530 = vmatpush2.bf16.msra.mxu0 0
        %531 = vmatprep.mubr.bf16.mxu0 0
        %532 = vmatmul.mubr.bf16.gmra.mxu0 %v497
        %v533 = vpop.f32.mrf.mxu0
        %v534 = vadd.f32 0.0, %v533
        %v535 = vpop.f32.mrf.mxu0
        %v536 = vpop.f32.mrf.mxu0
        %v537 = vadd.f32 0.0, %v536
        %v538 = vpop.f32.mrf.mxu0
        %539 = vdwg.mxu0
        %540 = vst.msk [vmem:[%s397] sm:$0xff] %vm416, %v534
        %541 = vst.msk [vmem:[%s397 + $0x8] sm:$0xff] %vm416, %v537
        %v542 = vld [vmem:[%s339] sm:$0xf]
        %v543 = vld [vmem:[%s339 + $0x4] sm:$0xf]
        %v544 = vld [vmem:[%s346] sm:$0xf]
        %v545 = vld [vmem:[%s346 + $0x4] sm:$0xf]
        %v546 = vld [vmem:[%s353] sm:$0xf]
        %v547 = vld [vmem:[%s353 + $0x4] sm:$0xf]
        %v550 = vunpack.c.l.b16 %v542
        %v551 = vunpack.c.l.b16 %v543
        %v552 = vpack.c.b16 %v551, %v550
        %553 = vrot.lane.b32.xlu0 %v552, 96
        %v554 = vpop.permute.xlu0 %553
        %v557 = vunpack.c.l.b16 %v544
        %v558 = vunpack.c.l.b16 %v545
        %v559 = vpack.c.b16 %v558, %v557
        %560 = vrot.lane.b32.xlu0 %v559, 96
        %v561 = vpop.permute.xlu0 %560
        %v563 = vsel %vm416, %v554, 0
        %v566 = vsel %vm416, %v561, 0
        %568 = vmatprep.subr.bf16.mxu0 0
        %569 = vmatpush1.bf16.xpose.msra.mxu0 0
        %570 = vmatprep.subr.bf16.mxu0 0
        %571 = vmatpush1.bf16.xpose.msra.mxu0 0
        %572 = vmatprep.subr.bf16.mxu0 0
        %573 = vmatpush1.bf16.xpose.msra.mxu0 0
        %574 = vmatprep.subr.bf16.mxu0 0
        %575 = vmatpush1.bf16.xpose.msra.mxu0 0
        %576 = vmatprep.subr.bf16.mxu0 0
        %577 = vmatpush1.bf16.xpose.msra.mxu0 0
        %578 = vmatprep.subr.bf16.mxu0 0
        %579 = vmatpush1.bf16.xpose.msra.mxu0 0
        %580 = vmatprep.subr.bf16.mxu0 0
        %581 = vmatpush1.bf16.xpose.msra.mxu0 0
        %582 = vmatprep.subr.bf16.mxu0 0
        %583 = vmatpush1.bf16.xpose.msra.mxu0 %v566
        %584 = vmatprep.subr.bf16.mxu0 0
        %585 = vmatpush2.bf16.xpose.msra.mxu0 0
        %586 = vmatprep.subr.bf16.mxu0 0
        %587 = vmatpush2.bf16.xpose.msra.mxu0 0
        %588 = vmatprep.subr.bf16.mxu0 0
        %589 = vmatpush2.bf16.xpose.msra.mxu0 0
        %590 = vmatprep.subr.bf16.mxu0 0
        %591 = vmatpush2.bf16.xpose.msra.mxu0 0
        %592 = vmatprep.subr.bf16.mxu0 0
        %593 = vmatpush2.bf16.xpose.msra.mxu0 0
        %594 = vmatprep.subr.bf16.mxu0 0
        %595 = vmatpush2.bf16.xpose.msra.mxu0 0
        %596 = vmatprep.subr.bf16.mxu0 0
        %597 = vmatpush2.bf16.xpose.msra.mxu0 0
        %598 = vmatprep.subr.bf16.mxu0 0
        %599 = vmatpush2.bf16.xpose.msra.mxu0 0
        %600 = vmatprep.mubr.bf16.mxu0 0
        %601 = vmatmul.mubr.bf16.gmra.mxu0 %v563
        %v602 = vpop.f32.mrf.mxu0
        %v603 = vadd.f32 0.0, %v602
        %v604 = vpop.f32.mrf.mxu0
        %v605 = vpop.f32.mrf.mxu0
        %v606 = vadd.f32 0.0, %v605
        %v607 = vpop.f32.mrf.mxu0
        %608 = vdwg.mxu0
        %v609 = vmul.f32 %v603, 0.17677669
        %v610 = vmul.f32 %v606, 0.17677669
        %v611 = vsel %vm466, %v609, -inf
        %612 = vmax.xlane.f32.xlu0 %v611
        %v613 = vpop.xlane.xlu0 %612
        %v614 = vsel %vm466, %v610, -inf
        %615 = vmax.xlane.f32.xlu0 %v614
        %v616 = vpop.xlane.xlu0 %615
        %v617 = vsub.f32 %v609, %v613
        %v618 = vsub.f32 %v610, %v616
        %v619 = vmul.f32 %v617, 1.442695
        %v620 = vpow.pop %v619
        %v621 = vmul.f32 %v618, 1.442695
        %v622 = vpow.pop %v621
        %v623 = vsel %vm466, %v620, 0.0
        %624 = vadd.xlane.f32.xlu0 %v623
        %v625 = vpop.xlane.xlu0 %624
        %v626 = vsel %vm466, %v622, 0.0
        %627 = vadd.xlane.f32.xlu0 %v626
        %v628 = vpop.xlane.xlu0 %627
        %v629 = vrcp.pop %v625
        %v630 = vrcp.pop %v628
        %v631 = vmul.f32 %v620, %v629
        %v632 = vmul.f32 %v622, %v630
        %v633 = vpack.c.bf16 %v632, %v631
        %v636 = vunpack.c.l.b16 %v546
        %v637 = vunpack.c.l.b16 %v547
        %v638 = vpack.c.b16 %v637, %v636
        %639 = vrot.lane.b32.xlu0 %v638, 96
        %v640 = vpop.permute.xlu0 %639
        %v643 = vsel %vm466, %v633, 0
        %645 = vmatprep.subr.bf16.mxu0 0
        %646 = vmatpush1.bf16.msra.mxu0 0
        %647 = vmatprep.subr.bf16.mxu0 0
        %648 = vmatpush1.bf16.msra.mxu0 0
        %649 = vmatprep.subr.bf16.mxu0 0
        %650 = vmatpush1.bf16.msra.mxu0 0
        %651 = vmatprep.subr.bf16.mxu0 0
        %652 = vmatpush1.bf16.msra.mxu0 0
        %653 = vmatprep.subr.bf16.mxu0 0
        %654 = vmatpush1.bf16.msra.mxu0 0
        %655 = vmatprep.subr.bf16.mxu0 0
        %656 = vmatpush1.bf16.msra.mxu0 0
        %657 = vmatprep.subr.bf16.mxu0 0
        %658 = vmatpush1.bf16.msra.mxu0 0
        %659 = vmatprep.subr.bf16.mxu0 0
        %660 = vmatpush1.bf16.msra.mxu0 %v640
        %661 = vmatprep.subr.bf16.mxu0 0
        %662 = vmatpush2.bf16.msra.mxu0 0
        %663 = vmatprep.subr.bf16.mxu0 0
        %664 = vmatpush2.bf16.msra.mxu0 0
        %665 = vmatprep.subr.bf16.mxu0 0
        %666 = vmatpush2.bf16.msra.mxu0 0
        %667 = vmatprep.subr.bf16.mxu0 0
        %668 = vmatpush2.bf16.msra.mxu0 0
        %669 = vmatprep.subr.bf16.mxu0 0
        %670 = vmatpush2.bf16.msra.mxu0 0
        %671 = vmatprep.subr.bf16.mxu0 0
        %672 = vmatpush2.bf16.msra.mxu0 0
        %673 = vmatprep.subr.bf16.mxu0 0
        %674 = vmatpush2.bf16.msra.mxu0 0
        %675 = vmatprep.subr.bf16.mxu0 0
        %676 = vmatpush2.bf16.msra.mxu0 0
        %677 = vmatprep.mubr.bf16.mxu0 0
        %678 = vmatmul.mubr.bf16.gmra.mxu0 %v643
        %v679 = vpop.f32.mrf.mxu0
        %v680 = vadd.f32 0.0, %v679
        %v681 = vpop.f32.mrf.mxu0
        %v682 = vpop.f32.mrf.mxu0
        %v683 = vadd.f32 0.0, %v682
        %v684 = vpop.f32.mrf.mxu0
        %685 = vdwg.mxu0
        %688 = vrot.lane.b32.xlu0 %v680, 32
        %v689 = vpop.permute.xlu0 %688
        %690 = vrot.lane.b32.xlu0 %v683, 32
        %v691 = vpop.permute.xlu0 %690
        %vm694 = vcmask 523520
        %695 = vst.msk [vmem:[%s397] sm:$0xff] %vm694, %v689
        %696 = vst.msk [vmem:[%s397 + $0x8] sm:$0xff] %vm694, %v691
        %v697 = vld [vmem:[%s339] sm:$0xf]
        %v698 = vld [vmem:[%s339 + $0x4] sm:$0xf]
        %v699 = vld [vmem:[%s346] sm:$0xf]
        %v700 = vld [vmem:[%s346 + $0x4] sm:$0xf]
        %v701 = vld [vmem:[%s353] sm:$0xf]
        %v702 = vld [vmem:[%s353 + $0x4] sm:$0xf]
        %v705 = vunpack.c.l.b16 %v697
        %v706 = vunpack.c.l.b16 %v698
        %v707 = vpack.c.b16 %v706, %v705
        %708 = vrot.lane.b32.xlu0 %v707, 64
        %v709 = vpop.permute.xlu0 %708
        %v712 = vunpack.c.l.b16 %v699
        %v713 = vunpack.c.l.b16 %v700
        %v714 = vpack.c.b16 %v713, %v712
        %715 = vrot.lane.b32.xlu0 %v714, 64
        %v716 = vpop.permute.xlu0 %715
        %v718 = vsel %vm416, %v709, 0
        %v721 = vsel %vm416, %v716, 0
        %723 = vmatprep.subr.bf16.mxu0 0
        %724 = vmatpush1.bf16.xpose.msra.mxu0 0
        %725 = vmatprep.subr.bf16.mxu0 0
        %726 = vmatpush1.bf16.xpose.msra.mxu0 0
        %727 = vmatprep.subr.bf16.mxu0 0
        %728 = vmatpush1.bf16.xpose.msra.mxu0 0
        %729 = vmatprep.subr.bf16.mxu0 0
        %730 = vmatpush1.bf16.xpose.msra.mxu0 0
        %731 = vmatprep.subr.bf16.mxu0 0
        %732 = vmatpush1.bf16.xpose.msra.mxu0 0
        %733 = vmatprep.subr.bf16.mxu0 0
        %734 = vmatpush1.bf16.xpose.msra.mxu0 0
        %735 = vmatprep.subr.bf16.mxu0 0
        %736 = vmatpush1.bf16.xpose.msra.mxu0 0
        %737 = vmatprep.subr.bf16.mxu0 0
        %738 = vmatpush1.bf16.xpose.msra.mxu0 %v721
        %739 = vmatprep.subr.bf16.mxu0 0
        %740 = vmatpush2.bf16.xpose.msra.mxu0 0
        %741 = vmatprep.subr.bf16.mxu0 0
        %742 = vmatpush2.bf16.xpose.msra.mxu0 0
        %743 = vmatprep.subr.bf16.mxu0 0
        %744 = vmatpush2.bf16.xpose.msra.mxu0 0
        %745 = vmatprep.subr.bf16.mxu0 0
        %746 = vmatpush2.bf16.xpose.msra.mxu0 0
        %747 = vmatprep.subr.bf16.mxu0 0
        %748 = vmatpush2.bf16.xpose.msra.mxu0 0
        %749 = vmatprep.subr.bf16.mxu0 0
        %750 = vmatpush2.bf16.xpose.msra.mxu0 0
        %751 = vmatprep.subr.bf16.mxu0 0
        %752 = vmatpush2.bf16.xpose.msra.mxu0 0
        %753 = vmatprep.subr.bf16.mxu0 0
        %754 = vmatpush2.bf16.xpose.msra.mxu0 0
        %755 = vmatprep.mubr.bf16.mxu0 0
        %756 = vmatmul.mubr.bf16.gmra.mxu0 %v718
        %v757 = vpop.f32.mrf.mxu0
        %v758 = vadd.f32 0.0, %v757
        %v759 = vpop.f32.mrf.mxu0
        %v760 = vpop.f32.mrf.mxu0
        %v761 = vadd.f32 0.0, %v760
        %v762 = vpop.f32.mrf.mxu0
        %763 = vdwg.mxu0
        %v764 = vmul.f32 %v758, 0.17677669
        %v765 = vmul.f32 %v761, 0.17677669
        %v766 = vsel %vm466, %v764, -inf
        %767 = vmax.xlane.f32.xlu0 %v766
        %v768 = vpop.xlane.xlu0 %767
        %v769 = vsel %vm466, %v765, -inf
        %770 = vmax.xlane.f32.xlu0 %v769
        %v771 = vpop.xlane.xlu0 %770
        %v772 = vsub.f32 %v764, %v768
        %v773 = vsub.f32 %v765, %v771
        %v774 = vmul.f32 %v772, 1.442695
        %v775 = vpow.pop %v774
        %v776 = vmul.f32 %v773, 1.442695
        %v777 = vpow.pop %v776
        %v778 = vsel %vm466, %v775, 0.0
        %779 = vadd.xlane.f32.xlu0 %v778
        %v780 = vpop.xlane.xlu0 %779
        %v781 = vsel %vm466, %v777, 0.0
        %782 = vadd.xlane.f32.xlu0 %v781
        %v783 = vpop.xlane.xlu0 %782
        %v784 = vrcp.pop %v780
        %v785 = vrcp.pop %v783
        %v786 = vmul.f32 %v775, %v784
        %v787 = vmul.f32 %v777, %v785
        %v788 = vpack.c.bf16 %v787, %v786
        %v791 = vunpack.c.l.b16 %v701
        %v792 = vunpack.c.l.b16 %v702
        %v793 = vpack.c.b16 %v792, %v791
        %794 = vrot.lane.b32.xlu0 %v793, 64
        %v795 = vpop.permute.xlu0 %794
        %v798 = vsel %vm466, %v788, 0
        %800 = vmatprep.subr.bf16.mxu0 0
        %801 = vmatpush1.bf16.msra.mxu0 0
        %802 = vmatprep.subr.bf16.mxu0 0
        %803 = vmatpush1.bf16.msra.mxu0 0
        %804 = vmatprep.subr.bf16.mxu0 0
        %805 = vmatpush1.bf16.msra.mxu0 0
        %806 = vmatprep.subr.bf16.mxu0 0
        %807 = vmatpush1.bf16.msra.mxu0 0
        %808 = vmatprep.subr.bf16.mxu0 0
        %809 = vmatpush1.bf16.msra.mxu0 0
        %810 = vmatprep.subr.bf16.mxu0 0
        %811 = vmatpush1.bf16.msra.mxu0 0
        %812 = vmatprep.subr.bf16.mxu0 0
        %813 = vmatpush1.bf16.msra.mxu0 0
        %814 = vmatprep.subr.bf16.mxu0 0
        %815 = vmatpush1.bf16.msra.mxu0 %v795
        %816 = vmatprep.subr.bf16.mxu0 0
        %817 = vmatpush2.bf16.msra.mxu0 0
        %818 = vmatprep.subr.bf16.mxu0 0
        %819 = vmatpush2.bf16.msra.mxu0 0
        %820 = vmatprep.subr.bf16.mxu0 0
        %821 = vmatpush2.bf16.msra.mxu0 0
        %822 = vmatprep.subr.bf16.mxu0 0
        %823 = vmatpush2.bf16.msra.mxu0 0
        %824 = vmatprep.subr.bf16.mxu0 0
        %825 = vmatpush2.bf16.msra.mxu0 0
        %826 = vmatprep.subr.bf16.mxu0 0
        %827 = vmatpush2.bf16.msra.mxu0 0
        %828 = vmatprep.subr.bf16.mxu0 0
        %829 = vmatpush2.bf16.msra.mxu0 0
        %830 = vmatprep.subr.bf16.mxu0 0
        %831 = vmatpush2.bf16.msra.mxu0 0
        %832 = vmatprep.mubr.bf16.mxu0 0
        %833 = vmatmul.mubr.bf16.gmra.mxu0 %v798
        %v834 = vpop.f32.mrf.mxu0
        %v835 = vadd.f32 0.0, %v834
        %v836 = vpop.f32.mrf.mxu0
        %v837 = vpop.f32.mrf.mxu0
        %v838 = vadd.f32 0.0, %v837
        %v839 = vpop.f32.mrf.mxu0
        %840 = vdwg.mxu0
        %843 = vrot.lane.b32.xlu0 %v835, 64
        %v844 = vpop.permute.xlu0 %843
        %845 = vrot.lane.b32.xlu0 %v838, 64
        %v846 = vpop.permute.xlu0 %845
        %vm849 = vcmask 785920
        %850 = vst.msk [vmem:[%s397] sm:$0xff] %vm849, %v844
        %851 = vst.msk [vmem:[%s397 + $0x8] sm:$0xff] %vm849, %v846
        %v852 = vld [vmem:[%s339] sm:$0xf]
        %v853 = vld [vmem:[%s339 + $0x4] sm:$0xf]
        %v854 = vld [vmem:[%s346] sm:$0xf]
        %v855 = vld [vmem:[%s346 + $0x4] sm:$0xf]
        %v856 = vld [vmem:[%s353] sm:$0xf]
        %v857 = vld [vmem:[%s353 + $0x4] sm:$0xf]
        %v860 = vunpack.c.l.b16 %v852
        %v861 = vunpack.c.l.b16 %v853
        %v862 = vpack.c.b16 %v861, %v860
        %863 = vrot.lane.b32.xlu0 %v862, 32
        %v864 = vpop.permute.xlu0 %863
        %v867 = vunpack.c.l.b16 %v854
        %v868 = vunpack.c.l.b16 %v855
        %v869 = vpack.c.b16 %v868, %v867
        %870 = vrot.lane.b32.xlu0 %v869, 32
        %v871 = vpop.permute.xlu0 %870
        %v873 = vsel %vm416, %v864, 0
        %v876 = vsel %vm416, %v871, 0
        %878 = vmatprep.subr.bf16.mxu0 0
        %879 = vmatpush1.bf16.xpose.msra.mxu0 0
        %880 = vmatprep.subr.bf16.mxu0 0
        %881 = vmatpush1.bf16.xpose.msra.mxu0 0
        %882 = vmatprep.subr.bf16.mxu0 0
        %883 = vmatpush1.bf16.xpose.msra.mxu0 0
        %884 = vmatprep.subr.bf16.mxu0 0
        %885 = vmatpush1.bf16.xpose.msra.mxu0 0
        %886 = vmatprep.subr.bf16.mxu0 0
        %887 = vmatpush1.bf16.xpose.msra.mxu0 0
        %888 = vmatprep.subr.bf16.mxu0 0
        %889 = vmatpush1.bf16.xpose.msra.mxu0 0
        %890 = vmatprep.subr.bf16.mxu0 0
        %891 = vmatpush1.bf16.xpose.msra.mxu0 0
        %892 = vmatprep.subr.bf16.mxu0 0
        %893 = vmatpush1.bf16.xpose.msra.mxu0 %v876
        %894 = vmatprep.subr.bf16.mxu0 0
        %895 = vmatpush2.bf16.xpose.msra.mxu0 0
        %896 = vmatprep.subr.bf16.mxu0 0
        %897 = vmatpush2.bf16.xpose.msra.mxu0 0
        %898 = vmatprep.subr.bf16.mxu0 0
        %899 = vmatpush2.bf16.xpose.msra.mxu0 0
        %900 = vmatprep.subr.bf16.mxu0 0
        %901 = vmatpush2.bf16.xpose.msra.mxu0 0
        %902 = vmatprep.subr.bf16.mxu0 0
        %903 = vmatpush2.bf16.xpose.msra.mxu0 0
        %904 = vmatprep.subr.bf16.mxu0 0
        %905 = vmatpush2.bf16.xpose.msra.mxu0 0
        %906 = vmatprep.subr.bf16.mxu0 0
        %907 = vmatpush2.bf16.xpose.msra.mxu0 0
        %908 = vmatprep.subr.bf16.mxu0 0
        %909 = vmatpush2.bf16.xpose.msra.mxu0 0
        %910 = vmatprep.mubr.bf16.mxu0 0
        %911 = vmatmul.mubr.bf16.gmra.mxu0 %v873
        %v912 = vpop.f32.mrf.mxu0
        %v913 = vadd.f32 0.0, %v912
        %v914 = vpop.f32.mrf.mxu0
        %v915 = vpop.f32.mrf.mxu0
        %v916 = vadd.f32 0.0, %v915
        %v917 = vpop.f32.mrf.mxu0
        %918 = vdwg.mxu0
        %v919 = vmul.f32 %v913, 0.17677669
        %v920 = vmul.f32 %v916, 0.17677669
        %v921 = vsel %vm466, %v919, -inf
        %922 = vmax.xlane.f32.xlu0 %v921
        %v923 = vpop.xlane.xlu0 %922
        %v924 = vsel %vm466, %v920, -inf
        %925 = vmax.xlane.f32.xlu0 %v924
        %v926 = vpop.xlane.xlu0 %925
        %v927 = vsub.f32 %v919, %v923
        %v928 = vsub.f32 %v920, %v926
        %v929 = vmul.f32 %v927, 1.442695
        %v930 = vpow.pop %v929
        %v931 = vmul.f32 %v928, 1.442695
        %v932 = vpow.pop %v931
        %v933 = vsel %vm466, %v930, 0.0
        %934 = vadd.xlane.f32.xlu0 %v933
        %v935 = vpop.xlane.xlu0 %934
        %v936 = vsel %vm466, %v932, 0.0
        %937 = vadd.xlane.f32.xlu0 %v936
        %v938 = vpop.xlane.xlu0 %937
        %v939 = vrcp.pop %v935
        %v940 = vrcp.pop %v938
        %v941 = vmul.f32 %v930, %v939
        %v942 = vmul.f32 %v932, %v940
        %v943 = vpack.c.bf16 %v942, %v941
        %v946 = vunpack.c.l.b16 %v856
        %v947 = vunpack.c.l.b16 %v857
        %v948 = vpack.c.b16 %v947, %v946
        %949 = vrot.lane.b32.xlu0 %v948, 32
        %v950 = vpop.permute.xlu0 %949
        %v953 = vsel %vm466, %v943, 0
        %955 = vmatprep.subr.bf16.mxu0 0
        %956 = vmatpush1.bf16.msra.mxu0 0
        %957 = vmatprep.subr.bf16.mxu0 0
        %958 = vmatpush1.bf16.msra.mxu0 0
        %959 = vmatprep.subr.bf16.mxu0 0
        %960 = vmatpush1.bf16.msra.mxu0 0
        %961 = vmatprep.subr.bf16.mxu0 0
        %962 = vmatpush1.bf16.msra.mxu0 0
        %963 = vmatprep.subr.bf16.mxu0 0
        %964 = vmatpush1.bf16.msra.mxu0 0
        %965 = vmatprep.subr.bf16.mxu0 0
        %966 = vmatpush1.bf16.msra.mxu0 0
        %967 = vmatprep.subr.bf16.mxu0 0
        %968 = vmatpush1.bf16.msra.mxu0 0
        %969 = vmatprep.subr.bf16.mxu0 0
        %970 = vmatpush1.bf16.msra.mxu0 %v950
        %971 = vmatprep.subr.bf16.mxu0 0
        %972 = vmatpush2.bf16.msra.mxu0 0
        %973 = vmatprep.subr.bf16.mxu0 0
        %974 = vmatpush2.bf16.msra.mxu0 0
        %975 = vmatprep.subr.bf16.mxu0 0
        %976 = vmatpush2.bf16.msra.mxu0 0
        %977 = vmatprep.subr.bf16.mxu0 0
        %978 = vmatpush2.bf16.msra.mxu0 0
        %979 = vmatprep.subr.bf16.mxu0 0
        %980 = vmatpush2.bf16.msra.mxu0 0
        %981 = vmatprep.subr.bf16.mxu0 0
        %982 = vmatpush2.bf16.msra.mxu0 0
        %983 = vmatprep.subr.bf16.mxu0 0
        %984 = vmatpush2.bf16.msra.mxu0 0
        %985 = vmatprep.subr.bf16.mxu0 0
        %986 = vmatpush2.bf16.msra.mxu0 0
        %987 = vmatprep.mubr.bf16.mxu0 0
        %988 = vmatmul.mubr.bf16.gmra.mxu0 %v953
        %v989 = vpop.f32.mrf.mxu0
        %v990 = vadd.f32 0.0, %v989
        %v991 = vpop.f32.mrf.mxu0
        %v992 = vpop.f32.mrf.mxu0
        %v993 = vadd.f32 0.0, %v992
        %v994 = vpop.f32.mrf.mxu0
        %995 = vdwg.mxu0
        %998 = vrot.lane.b32.xlu0 %v990, 96
        %v999 = vpop.permute.xlu0 %998
        %1000 = vrot.lane.b32.xlu0 %v993, 96
        %v1001 = vpop.permute.xlu0 %1000
        %vm1004 = vcmask 1048320
        %1005 = vst.msk [vmem:[%s397] sm:$0xff] %vm1004, %v999
        %1006 = vst.msk [vmem:[%s397 + $0x8] sm:$0xff] %vm1004, %v1001
        %s1007 = smul.u32 2, %s18
        %p1008 = scmp.lt.s32.totalorder %s1007, 3
        %s1009 = scalar_select %p1008, %s1007, 3
        %p1010 = scmp.lt.s32.totalorder %s19, 0
        %s1011 = scalar_select %p1010, %s19, 0
        %s1012 = sadd.s32 %s1011, %s1009
        %s1013 = smul.addr %s1012, 8
        %s1014 = scalar_lea.vmem %s3, %s1013
        // Predicated region
        $region156: #{bert_encoder_forward.6} parent=142 // pred_check
          %p1015 = pneg %p134
        $region157: #{bert_encoder_forward.6} parent=142 // pred_check_branch
          %1017 = sbr.rel (%p1015) target = $region159
        $region158: #{bert_encoder_forward.6} parent=142 // pred_region
          %s1018 = smul.u32 2, %s18
        $region159: #{bert_encoder_forward.6} parent=142 // pred_fallthru
          _
      $region143: #{bert_encoder_forward.6} parent=5 // pred_fallthru
        _
      %p1019 = scmp.le.s32.totalorder 2, %s9
      // Predicated region
      $region160: #{bert_encoder_forward.6} parent=5 // pred_check
        %p1020 = pneg %p1019
      $region161: #{bert_encoder_forward.6} parent=5 // pred_check_branch
        %1022 = sbr.rel (%p1020) target = $region163
      $region162: #{bert_encoder_forward.6} parent=5 // pred_region
        %s1023 = ssub.s32 %s9, 2
        // Predicated region
        $region164: #{bert_encoder_forward.6} parent=162 // pred_check
          %p1024 = pneg %p140
        $region165: #{bert_encoder_forward.6} parent=162 // pred_check_branch
          %1026 = sbr.rel (%p1024) target = $region167
        $region166: #{bert_encoder_forward.6} parent=162 // pred_region
          %s1027 = smul.u32 2, %s20
          %p1028 = scmp.lt.s32.totalorder %s1027, 3
          %s1029 = scalar_select %p1028, %s1027, 3
          %p1030 = scmp.lt.s32.totalorder %s21, 0
          %s1031 = scalar_select %p1030, %s21, 0
          %s1032 = sadd.s32 %s1031, %s1029
          %s1033 = smul.addr %s1032, 8
          %s1034 = scalar_lea.vmem %s3, %s1033
        $region167: #{bert_encoder_forward.6} parent=162 // pred_fallthru
          _
      $region163: #{bert_encoder_forward.6} parent=5 // pred_fallthru
        _
    $region6: #{bert_encoder_forward.6} parent=1 // loop_footer
      %s13 = sadd.s32 1, %s9
    $region7: #{bert_encoder_forward.6} parent=1 // loop_footer_branch
      %8 = sbr.rel target = $region3
    $region8: #{bert_encoder_forward.6} parent=1 // loop_exit
      _

// kernel: bert_encoder_forward.5
$region0: #{bert_encoder_forward.5}
  #allocation0 [shape = 'u32[]', space=smem, size = 0x4, offset = 0x4, fixed_abs, tag = 'smem constant byte address 0x4 - core index']
  #allocation1 [shape = 'u32[144,128]{1,0:T(1,128)}', space=vmem, size = 0x12000, scoped, tag = 'internal scratch']
  #allocation2 [shape = 'f32[32,384]{1,0:T(8,128)}', space=vmem, size = 0xc000, scoped, tag = 'scratch operand']
  %s0 = inlined_call_operand.hbm [shape: f32[32,128], index: 0, kind: input, shape index: {}]
  %s1 = inlined_call_operand.hbm [shape: bf16[128,384], index: 1, kind: input, shape index: {}]
  %s2 = inlined_call_operand.vmem [shape: f32[1,384], index: 2, kind: input, shape index: {}]
  %s3 = inlined_call_operand.vmem [shape: bf16[32,384], index: 3, kind: output, shape index: {}]
  %s4 = sld [smem:[#allocation0]]
  $region38: #{bert_encoder_forward.5} parent=0
    _
  %s6 = ssub.s32 1, %s4
  %s7 = scalar_select 0, %s6, %s4
  $region1: #{bert_encoder_forward.5} parent=0
    #allocation3 [shape = 'u8[16384]{0}', space=vmem, size = 0x4000, scoped, tag = 'input window, operand 0, single buffered']
    #allocation4 [shape = 's32[1]{0}', space=sflag, size = 0x4, scoped, tag = 'scoped memory for bert_encoder_forward.5']
    #allocation5 [shape = 'u8[98304]{0}', space=vmem, size = 0x18000, scoped, tag = 'input window, operand 1, single buffered']
    #allocation6 [shape = 's32[1]{0}', space=sflag, size = 0x4, scoped, tag = 'scoped memory for bert_encoder_forward.5']
    %8 = vsyncpa [#allocation4], 0
    %9 = vsyncpa [#allocation6], 0
    // Predicated region
    $region2: #{bert_encoder_forward.5} parent=1 // pred_check
      _
    $region3: #{bert_encoder_forward.5} parent=1 // pred_check_branch
      %11 = sbr.rel (0) target = $region5
    $region4: #{bert_encoder_forward.5} parent=1 // pred_region
      %s13 = ssub.s32 512, 512
      %14 = vsyncadd [#allocation4], %s13
      %s15 = sshll.u32 [#allocation3], 4
      %s16 = int_to_ptr.vmem [resolvable:$true] %s15
      %21 = dma.hbm_to_vmem [thread:$0]  %s0, 512, %s16, [#allocation4], 128, 128, 8
    $region5: #{bert_encoder_forward.5} parent=1 // pred_fallthru
      _
    // Predicated region
    $region6: #{bert_encoder_forward.5} parent=1 // pred_check
      _
    $region7: #{bert_encoder_forward.5} parent=1 // pred_check_branch
      %23 = sbr.rel (0) target = $region9
    $region8: #{bert_encoder_forward.5} parent=1 // pred_region
      %s25 = ssub.s32 3072, 3072
      %26 = vsyncadd [#allocation6], %s25
      %s27 = sshll.u32 [#allocation5], 4
      %s28 = int_to_ptr.vmem [resolvable:$true] %s27
      %33 = dma.hbm_to_vmem [thread:$0]  %s1, 3072, %s28, [#allocation6], 192, 192, 12
    $region9: #{bert_encoder_forward.5} parent=1 // pred_fallthru
      _
    // Predicated region
    $region10: #{bert_encoder_forward.5} parent=1 // pred_check
      _
    $region11: #{bert_encoder_forward.5} parent=1 // pred_check_branch
      %35 = sbr.rel (0) target = $region13
    $region12: #{bert_encoder_forward.5} parent=1 // pred_region
      _
    $region13: #{bert_encoder_forward.5} parent=1 // pred_fallthru
      _
    // Predicated region
    $region14: #{bert_encoder_forward.5} parent=1 // pred_check
      _
    $region15: #{bert_encoder_forward.5} parent=1 // pred_check_branch
      %37 = sbr.rel (0) target = $region17
    $region16: #{bert_encoder_forward.5} parent=1 // pred_region
      %38 = dma.done [#allocation4], 512
    $region17: #{bert_encoder_forward.5} parent=1 // pred_fallthru
      _
    // Predicated region
    $region18: #{bert_encoder_forward.5} parent=1 // pred_check
      _
    $region19: #{bert_encoder_forward.5} parent=1 // pred_check_branch
      %40 = sbr.rel (0) target = $region21
    $region20: #{bert_encoder_forward.5} parent=1 // pred_region
      %41 = dma.done [#allocation6], 3072
    $region21: #{bert_encoder_forward.5} parent=1 // pred_fallthru
      _
    %p43 = scmp.eq.s32.totalorder 0, 0
    // Predicated region
    $region22: #{bert_encoder_forward.5} parent=1 // pred_check
      %p44 = pneg %p43
    $region23: #{bert_encoder_forward.5} parent=1 // pred_check_branch
      %46 = sbr.rel (%p44) target = $region25
    $region24: #{bert_encoder_forward.5} parent=1 // pred_region
      %47 = vst [vmem:[#allocation2] sm:$0xff] 0.0
      %48 = vst [vmem:[#allocation2 + $0x8] sm:$0xff] 0.0
      %49 = vst [vmem:[#allocation2 + $0x10] sm:$0xff] 0.0
      %50 = vst [vmem:[#allocation2 + $0x18] sm:$0xff] 0.0
      %51 = vst [vmem:[#allocation2 + $0x20] sm:$0xff] 0.0
      %52 = vst [vmem:[#allocation2 + $0x28] sm:$0xff] 0.0
      %53 = vst [vmem:[#allocation2 + $0x30] sm:$0xff] 0.0
      %54 = vst [vmem:[#allocation2 + $0x38] sm:$0xff] 0.0
      %55 = vst [vmem:[#allocation2 + $0x40] sm:$0xff] 0.0
      %56 = vst [vmem:[#allocation2 + $0x48] sm:$0xff] 0.0
      %57 = vst [vmem:[#allocation2 + $0x50] sm:$0xff] 0.0
      %58 = vst [vmem:[#allocation2 + $0x58] sm:$0xff] 0.0
    $region25: #{bert_encoder_forward.5} parent=1 // pred_fallthru
      _
    %v59 = vld [vmem:[#allocation2] sm:$0xff]
    %v60 = vld [vmem:[#allocation2 + $0x8] sm:$0xff]
    %v61 = vld [vmem:[#allocation2 + $0x10] sm:$0xff]
    %v62 = vld [vmem:[#allocation2 + $0x18] sm:$0xff]
    %v63 = vld [vmem:[#allocation2 + $0x20] sm:$0xff]
    %v64 = vld [vmem:[#allocation2 + $0x28] sm:$0xff]
    %v65 = vld [vmem:[#allocation2 + $0x30] sm:$0xff]
    %v66 = vld [vmem:[#allocation2 + $0x38] sm:$0xff]
    %v67 = vld [vmem:[#allocation2 + $0x40] sm:$0xff]
    %v68 = vld [vmem:[#allocation2 + $0x48] sm:$0xff]
    %v69 = vld [vmem:[#allocation2 + $0x50] sm:$0xff]
    %v70 = vld [vmem:[#allocation2 + $0x58] sm:$0xff]
    %v71 = vld [vmem:[#allocation3] sm:$0xff]
    %v72 = vld [vmem:[#allocation3 + $0x8] sm:$0xff]
    %v73 = vld [vmem:[#allocation3 + $0x10] sm:$0xff]
    %v74 = vld [vmem:[#allocation3 + $0x18] sm:$0xff]
    %v75 = vpack.c.bf16 %v72, %v71
    %v76 = vpack.c.bf16 %v74, %v73
    %v77 = vld [vmem:[#allocation5] sm:$0xff]
    %v78 = vld [vmem:[#allocation5 + $0x8] sm:$0xf]
    %v79 = vld [vmem:[#allocation5 + $0xc] sm:$0xff]
    %v80 = vld [vmem:[#allocation5 + $0x14] sm:$0xf]
    %v81 = vld [vmem:[#allocation5 + $0x18] sm:$0xff]
    %v82 = vld [vmem:[#allocation5 + $0x20] sm:$0xf]
    %v83 = vld [vmem:[#allocation5 + $0x24] sm:$0xff]
    %v84 = vld [vmem:[#allocation5 + $0x2c] sm:$0xf]
    %v85 = vld [vmem:[#allocation5 + $0x30] sm:$0xff]
    %v86 = vld [vmem:[#allocation5 + $0x38] sm:$0xf]
    %v87 = vld [vmem:[#allocation5 + $0x3c] sm:$0xff]
    %v88 = vld [vmem:[#allocation5 + $0x44] sm:$0xf]
    %v89 = vld [vmem:[#allocation5 + $0x48] sm:$0xff]
    %v90 = vld [vmem:[#allocation5 + $0x50] sm:$0xf]
    %v91 = vld [vmem:[#allocation5 + $0x54] sm:$0xff]
    %v92 = vld [vmem:[#allocation5 + $0x5c] sm:$0xf]
    %v93 = vld [vmem:[#allocation5 + $0x60] sm:$0xff]
    %v94 = vld [vmem:[#allocation5 + $0x68] sm:$0xf]
    %v95 = vld [vmem:[#allocation5 + $0x6c] sm:$0xff]
    %v96 = vld [vmem:[#allocation5 + $0x74] sm:$0xf]
    %v97 = vld [vmem:[#allocation5 + $0x78] sm:$0xff]
    %v98 = vld [vmem:[#allocation5 + $0x80] sm:$0xf]
    %v99 = vld [vmem:[#allocation5 + $0x84] sm:$0xff]
    %v100 = vld [vmem:[#allocation5 + $0x8c] sm:$0xf]
    %v101 = vld [vmem:[#allocation5 + $0x90] sm:$0xff]
    %v102 = vld [vmem:[#allocation5 + $0x98] sm:$0xf]
    %v103 = vld [vmem:[#allocation5 + $0x9c] sm:$0xff]
    %v104 = vld [vmem:[#allocation5 + $0xa4] sm:$0xf]
    %v105 = vld [vmem:[#allocation5 + $0xa8] sm:$0xff]
    %v106 = vld [vmem:[#allocation5 + $0xb0] sm:$0xf]
    %v107 = vld [vmem:[#allocation5 + $0xb4] sm:$0xff]
    %v108 = vld [vmem:[#allocation5 + $0xbc] sm:$0xf]
    %v141 = vunpack.c.l.b16 %v77
    %v142 = vunpack.c.h.b16 %v77
    %v143 = vunpack.c.l.b16 %v78
    %v144 = vunpack.c.l.b16 %v79
    %v145 = vunpack.c.h.b16 %v79
    %v146 = vunpack.c.l.b16 %v80
    %v147 = vunpack.c.l.b16 %v81
    %v148 = vunpack.c.h.b16 %v81
    %v149 = vunpack.c.l.b16 %v82
    %v150 = vunpack.c.l.b16 %v83
    %v151 = vunpack.c.h.b16 %v83
    %v152 = vunpack.c.l.b16 %v84
    %v153 = vunpack.c.l.b16 %v85
    %v154 = vunpack.c.h.b16 %v85
    %v155 = vunpack.c.l.b16 %v86
    %v156 = vunpack.c.l.b16 %v87
    %v157 = vunpack.c.h.b16 %v87
    %v158 = vunpack.c.l.b16 %v88
    %v159 = vunpack.c.l.b16 %v89
    %v160 = vunpack.c.h.b16 %v89
    %v161 = vunpack.c.l.b16 %v90
    %v162 = vunpack.c.l.b16 %v91
    %v163 = vunpack.c.h.b16 %v91
    %v164 = vunpack.c.l.b16 %v92
    %v165 = vunpack.c.l.b16 %v93
    %v166 = vunpack.c.h.b16 %v93
    %v167 = vunpack.c.l.b16 %v94
    %v168 = vunpack.c.l.b16 %v95
    %v169 = vunpack.c.h.b16 %v95
    %v170 = vunpack.c.l.b16 %v96
    %v171 = vunpack.c.l.b16 %v97
    %v172 = vunpack.c.h.b16 %v97
    %v173 = vunpack.c.l.b16 %v98
    %v174 = vunpack.c.l.b16 %v99
    %v175 = vunpack.c.h.b16 %v99
    %v176 = vunpack.c.l.b16 %v100
    %v177 = vunpack.c.l.b16 %v101
    %v178 = vunpack.c.h.b16 %v101
    %v179 = vunpack.c.l.b16 %v102
    %v180 = vunpack.c.l.b16 %v103
    %v181 = vunpack.c.h.b16 %v103
    %v182 = vunpack.c.l.b16 %v104
    %v183 = vunpack.c.l.b16 %v105
    %v184 = vunpack.c.h.b16 %v105
    %v185 = vunpack.c.l.b16 %v106
    %v186 = vunpack.c.l.b16 %v107
    %v187 = vunpack.c.h.b16 %v107
    %v188 = vunpack.c.l.b16 %v108
    %v189 = vpack.c.b16 %v144, %v141
    %v190 = vpack.c.b16 %v145, %v142
    %v191 = vpack.c.b16 %v146, %v143
    %v192 = vpack.c.b16 %v150, %v147
    %v193 = vpack.c.b16 %v151, %v148
    %v194 = vpack.c.b16 %v152, %v149
    %v195 = vpack.c.b16 %v156, %v153
    %v196 = vpack.c.b16 %v157, %v154
    %v197 = vpack.c.b16 %v158, %v155
    %v198 = vpack.c.b16 %v162, %v159
    %v199 = vpack.c.b16 %v163, %v160
    %v200 = vpack.c.b16 %v164, %v161
    %v201 = vpack.c.b16 %v168, %v165
    %v202 = vpack.c.b16 %v169, %v166
    %v203 = vpack.c.b16 %v170, %v167
    %v204 = vpack.c.b16 %v174, %v171
    %v205 = vpack.c.b16 %v175, %v172
    %v206 = vpack.c.b16 %v176, %v173
    %v207 = vpack.c.b16 %v180, %v177
    %v208 = vpack.c.b16 %v181, %v178
    %v209 = vpack.c.b16 %v182, %v179
    %v210 = vpack.c.b16 %v186, %v183
    %v211 = vpack.c.b16 %v187, %v184
    %v212 = vpack.c.b16 %v188, %v185
    %237 = vmatprep.subr.bf16.mxu0 %v211
    %238 = vmatpush1.bf16.msra.mxu0 %v210
    %239 = vmatprep.subr.bf16.mxu0 %v208
    %240 = vmatpush1.bf16.msra.mxu0 %v207
    %241 = vmatprep.subr.bf16.mxu0 %v205
    %242 = vmatpush1.bf16.msra.mxu0 %v204
    %243 = vmatprep.subr.bf16.mxu0 %v202
    %244 = vmatpush1.bf16.msra.mxu0 %v201
    %245 = vmatprep.subr.bf16.mxu0 %v199
    %246 = vmatpush1.bf16.msra.mxu0 %v198
    %247 = vmatprep.subr.bf16.mxu0 %v196
    %248 = vmatpush1.bf16.msra.mxu0 %v195
    %249 = vmatprep.subr.bf16.mxu0 %v193
    %250 = vmatpush1.bf16.msra.mxu0 %v192
    %251 = vmatprep.subr.bf16.mxu0 %v190
    %252 = vmatpush1.bf16.msra.mxu0 %v189
    %253 = vmatprep.subr.bf16.mxu0 0
    %254 = vmatpush2.bf16.msra.mxu0 0
    %255 = vmatprep.subr.bf16.mxu0 0
    %256 = vmatpush2.bf16.msra.mxu0 0
    %257 = vmatprep.subr.bf16.mxu0 0
    %258 = vmatpush2.bf16.msra.mxu0 0
    %259 = vmatprep.subr.bf16.mxu0 0
    %260 = vmatpush2.bf16.msra.mxu0 0
    %261 = vmatprep.subr.bf16.mxu0 0
    %262 = vmatpush2.bf16.msra.mxu0 0
    %263 = vmatprep.subr.bf16.mxu0 0
    %264 = vmatpush2.bf16.msra.mxu0 0
    %265 = vmatprep.subr.bf16.mxu0 0
    %266 = vmatpush2.bf16.msra.mxu0 0
    %267 = vmatprep.subr.bf16.mxu0 0
    %268 = vmatpush2.bf16.msra.mxu0 0
    %269 = vmatprep.mubr.bf16.mxu0 0
    %270 = vmatmul.mubr.bf16.gmra.mxu0 %v75
    %v271 = vpop.f32.mrf.mxu0
    %v272 = vadd.f32 0.0, %v271
    %v273 = vpop.f32.mrf.mxu0
    %v274 = vadd.f32 0.0, %v273
    %v275 = vpop.f32.mrf.mxu0
    %v276 = vadd.f32 0.0, %v275
    %v277 = vpop.f32.mrf.mxu0
    %v278 = vadd.f32 0.0, %v277
    %279 = vmatprep.mubr.bf16.mxu0 0
    %280 = vmatmul.mubr.bf16.gmra.mxu0 %v76
    %v281 = vpop.f32.mrf.mxu0
    %v282 = vadd.f32 0.0, %v281
    %v283 = vpop.f32.mrf.mxu0
    %v284 = vadd.f32 0.0, %v283
    %v285 = vpop.f32.mrf.mxu0
    %v286 = vadd.f32 0.0, %v285
    %v287 = vpop.f32.mrf.mxu0
    %v288 = vadd.f32 0.0, %v287
    %289 = vdwg.mxu0
    %290 = vmatprep.subr.bf16.mxu0 0
    %291 = vmatpush1.bf16.msra.mxu0 %v212
    %292 = vmatprep.subr.bf16.mxu0 0
    %293 = vmatpush1.bf16.msra.mxu0 %v209
    %294 = vmatprep.subr.bf16.mxu0 0
    %295 = vmatpush1.bf16.msra.mxu0 %v206
    %296 = vmatprep.subr.bf16.mxu0 0
    %297 = vmatpush1.bf16.msra.mxu0 %v203
    %298 = vmatprep.subr.bf16.mxu0 0
    %299 = vmatpush1.bf16.msra.mxu0 %v200
    %300 = vmatprep.subr.bf16.mxu0 0
    %301 = vmatpush1.bf16.msra.mxu0 %v197
    %302 = vmatprep.subr.bf16.mxu0 0
    %303 = vmatpush1.bf16.msra.mxu0 %v194
    %304 = vmatprep.subr.bf16.mxu0 0
    %305 = vmatpush1.bf16.msra.mxu0 %v191
    %306 = vmatprep.subr.bf16.mxu0 0
    %307 = vmatpush2.bf16.msra.mxu0 0
    %308 = vmatprep.subr.bf16.mxu0 0
    %309 = vmatpush2.bf16.msra.mxu0 0
    %310 = vmatprep.subr.bf16.mxu0 0
    %311 = vmatpush2.bf16.msra.mxu0 0
    %312 = vmatprep.subr.bf16.mxu0 0
    %313 = vmatpush2.bf16.msra.mxu0 0
    %314 = vmatprep.subr.bf16.mxu0 0
    %315 = vmatpush2.bf16.msra.mxu0 0
    %316 = vmatprep.subr.bf16.mxu0 0
    %317 = vmatpush2.bf16.msra.mxu0 0
    %318 = vmatprep.subr.bf16.mxu0 0
    %319 = vmatpush2.bf16.msra.mxu0 0
    %320 = vmatprep.subr.bf16.mxu0 0
    %321 = vmatpush2.bf16.msra.mxu0 0
    %322 = vmatprep.mubr.bf16.mxu0 0
    %323 = vmatmul.mubr.bf16.gmra.mxu0 %v75
    %v324 = vpop.f32.mrf.mxu0
    %v325 = vadd.f32 0.0, %v324
    %v326 = vpop.f32.mrf.mxu0
    %v327 = vpop.f32.mrf.mxu0
    %v328 = vadd.f32 0.0, %v327
    %v329 = vpop.f32.mrf.mxu0
    %330 = vmatprep.mubr.bf16.mxu0 0
    %331 = vmatmul.mubr.bf16.gmra.mxu0 %v76
    %v332 = vpop.f32.mrf.mxu0
    %v333 = vadd.f32 0.0, %v332
    %v334 = vpop.f32.mrf.mxu0
    %v335 = vpop.f32.mrf.mxu0
    %v336 = vadd.f32 0.0, %v335
    %v337 = vpop.f32.mrf.mxu0
    %338 = vdwg.mxu0
    %v339 = vadd.f32 %v59, %v272
    %v340 = vadd.f32 %v60, %v274
    %v341 = vadd.f32 %v61, %v325
    %v342 = vadd.f32 %v62, %v276
    %v343 = vadd.f32 %v63, %v278
    %v344 = vadd.f32 %v64, %v328
    %v345 = vadd.f32 %v65, %v282
    %v346 = vadd.f32 %v66, %v284
    %v347 = vadd.f32 %v67, %v333
    %v348 = vadd.f32 %v68, %v286
    %v349 = vadd.f32 %v69, %v288
    %v350 = vadd.f32 %v70, %v336
    %351 = vst [vmem:[#allocation2] sm:$0xff] %v339
    %352 = vst [vmem:[#allocation2 + $0x8] sm:$0xff] %v340
    %353 = vst [vmem:[#allocation2 + $0x10] sm:$0xff] %v341
    %354 = vst [vmem:[#allocation2 + $0x18] sm:$0xff] %v342
    %355 = vst [vmem:[#allocation2 + $0x20] sm:$0xff] %v343
    %356 = vst [vmem:[#allocation2 + $0x28] sm:$0xff] %v344
    %357 = vst [vmem:[#allocation2 + $0x30] sm:$0xff] %v345
    %358 = vst [vmem:[#allocation2 + $0x38] sm:$0xff] %v346
    %359 = vst [vmem:[#allocation2 + $0x40] sm:$0xff] %v347
    %360 = vst [vmem:[#allocation2 + $0x48] sm:$0xff] %v348
    %361 = vst [vmem:[#allocation2 + $0x50] sm:$0xff] %v349
    %362 = vst [vmem:[#allocation2 + $0x58] sm:$0xff] %v350
    // Predicated region
    $region26: #{bert_encoder_forward.5} parent=1 // pred_check
      %p363 = pneg %p43
    $region27: #{bert_encoder_forward.5} parent=1 // pred_check_branch
      %365 = sbr.rel (%p363) target = $region29
    $region28: #{bert_encoder_forward.5} parent=1 // pred_region
      %v366 = vld [vmem:[#allocation2] sm:$0xff]
      %v367 = vld [vmem:[#allocation2 + $0x8] sm:$0xff]
      %v368 = vld [vmem:[#allocation2 + $0x10] sm:$0xff]
      %v369 = vld [vmem:[#allocation2 + $0x18] sm:$0xff]
      %v370 = vld [vmem:[#allocation2 + $0x20] sm:$0xff]
      %v371 = vld [vmem:[#allocation2 + $0x28] sm:$0xff]
      %v372 = vld [vmem:[#allocation2 + $0x30] sm:$0xff]
      %v373 = vld [vmem:[#allocation2 + $0x38] sm:$0xff]
      %v374 = vld [vmem:[#allocation2 + $0x40] sm:$0xff]
      %v375 = vld [vmem:[#allocation2 + $0x48] sm:$0xff]
      %v376 = vld [vmem:[#allocation2 + $0x50] sm:$0xff]
      %v377 = vld [vmem:[#allocation2 + $0x58] sm:$0xff]
      %v378 = vld [vmem:[%s2] sm:$0x7]
      %v380 = vlaneseq
      %v381 = vshrl.u32 %v380, 7
      %v382 = vsub.s32 0, %v381
      %v383 = vrot.slane %v378, %v382
      %v384 = vlaneseq
      %v385 = vshrl.u32 %v384, 7
      %v386 = vsub.s32 1, %v385
      %v387 = vrot.slane %v378, %v386
      %v388 = vlaneseq
      %v389 = vshrl.u32 %v388, 7
      %v390 = vsub.s32 2, %v389
      %v391 = vrot.slane %v378, %v390
      %v395 = vadd.f32 %v366, %v383
      %v396 = vadd.f32 %v367, %v387
      %v397 = vadd.f32 %v368, %v391
      %v398 = vadd.f32 %v369, %v383
      %v399 = vadd.f32 %v370, %v387
      %v400 = vadd.f32 %v371, %v391
      %v401 = vadd.f32 %v372, %v383
      %v402 = vadd.f32 %v373, %v387
      %v403 = vadd.f32 %v374, %v391
      %v404 = vadd.f32 %v375, %v383
      %v405 = vadd.f32 %v376, %v387
      %v406 = vadd.f32 %v377, %v391
      %v407 = vpack.c.bf16 %v398, %v395
      %v408 = vpack.c.bf16 %v399, %v396
      %v409 = vpack.c.bf16 %v400, %v397
      %v410 = vpack.c.bf16 %v404, %v401
      %v411 = vpack.c.bf16 %v405, %v402
      %v412 = vpack.c.bf16 %v406, %v403
      %v419 = vunpack.c.l.b16 %v407
      %v420 = vunpack.c.l.b16 %v408
      %v421 = vunpack.c.l.b16 %v409
      %v422 = vunpack.c.h.b16 %v407
      %v423 = vunpack.c.h.b16 %v408
      %v424 = vunpack.c.h.b16 %v409
      %v425 = vunpack.c.l.b16 %v410
      %v426 = vunpack.c.l.b16 %v411
      %v427 = vunpack.c.l.b16 %v412
      %v428 = vunpack.c.h.b16 %v410
      %v429 = vunpack.c.h.b16 %v411
      %v430 = vunpack.c.h.b16 %v412
      %v431 = vpack.c.b16 %v420, %v419
      %v432 = vpack.c.b16 %v421, %v421
      %v433 = vpack.c.b16 %v423, %v422
      %v434 = vpack.c.b16 %v424, %v424
      %v435 = vpack.c.b16 %v426, %v425
      %v436 = vpack.c.b16 %v427, %v427
      %v437 = vpack.c.b16 %v429, %v428
      %v438 = vpack.c.b16 %v430, %v430
      %447 = vst [vmem:[%s3] sm:$0xff] %v431
      %448 = vst [vmem:[%s3 + $0x8] sm:$0xf] %v432
      %449 = vst [vmem:[%s3 + $0xc] sm:$0xff] %v433
      %450 = vst [vmem:[%s3 + $0x14] sm:$0xf] %v434
      %451 = vst [vmem:[%s3 + $0x18] sm:$0xff] %v435
      %452 = vst [vmem:[%s3 + $0x20] sm:$0xf] %v436
      %453 = vst [vmem:[%s3 + $0x24] sm:$0xff] %v437
      %454 = vst [vmem:[%s3 + $0x2c] sm:$0xf] %v438
    $region29: #{bert_encoder_forward.5} parent=1 // pred_fallthru
      _
    // Predicated region
    $region30: #{bert_encoder_forward.5} parent=1 // pred_check
      _
    $region31: #{bert_encoder_forward.5} parent=1 // pred_check_branch
      %456 = sbr.rel (0) target = $region33
    $region32: #{bert_encoder_forward.5} parent=1 // pred_region
      _
    $region33: #{bert_encoder_forward.5} parent=1 // pred_fallthru
      _
    // Predicated region
    $region34: #{bert_encoder_forward.5} parent=1 // pred_check
      _
    $region35: #{bert_encoder_forward.5} parent=1 // pred_check_branch
      %458 = sbr.rel (0) target = $region37
    $region36: #{bert_encoder_forward.5} parent=1 // pred_region
      _
    $region37: #{bert_encoder_forward.5} parent=1 // pred_fallthru
      _
    %459 = vsyncpa [#allocation4], 1
    %460 = vsyncpa [#allocation6], 1

// kernel: bert_encoder_forward.8
$region0: #{bert_encoder_forward.8}
  #allocation0 [shape = 'u32[]', space=smem, size = 0x4, offset = 0x4, fixed_abs, tag = 'smem constant byte address 0x4 - core index']
  #allocation1 [shape = 'u32[144,128]{1,0:T(1,128)}', space=vmem, size = 0x12000, scoped, tag = 'internal scratch']
  #allocation2 [shape = 'f32[32,256]{1,0:T(8,128)}', space=vmem, size = 0x8000, scoped, tag = 'scratch operand']
  %s0 = inlined_call_operand.vmem [shape: f32[32,128], index: 0, kind: input, shape index: {}]
  %s1 = inlined_call_operand.vmem [shape: bf16[128,256], index: 1, kind: input, shape index: {}]
  %s2 = inlined_call_operand.vmem [shape: f32[1,256], index: 2, kind: input, shape index: {}]
  %s3 = inlined_call_operand.vmem [shape: bf16[32,256], index: 3, kind: output, shape index: {}]
  %s4 = sld [smem:[#allocation0]]
  $region30: #{bert_encoder_forward.8} parent=0
    _
  %s6 = ssub.s32 1, %s4
  %s7 = scalar_select 0, %s6, %s4
  // Predicated region
  $region2: #{bert_encoder_forward.8} parent=0 // pred_check
    _
  $region3: #{bert_encoder_forward.8} parent=0 // pred_check_branch
    %9 = sbr.rel (0) target = $region5
  $region4: #{bert_encoder_forward.8} parent=0 // pred_region
    _
  $region5: #{bert_encoder_forward.8} parent=0 // pred_fallthru
    _
  // Predicated region
  $region6: #{bert_encoder_forward.8} parent=0 // pred_check
    _
  $region7: #{bert_encoder_forward.8} parent=0 // pred_check_branch
    %11 = sbr.rel (0) target = $region9
  $region8: #{bert_encoder_forward.8} parent=0 // pred_region
    _
  $region9: #{bert_encoder_forward.8} parent=0 // pred_fallthru
    _
  // Predicated region
  $region10: #{bert_encoder_forward.8} parent=0 // pred_check
    _
  $region11: #{bert_encoder_forward.8} parent=0 // pred_check_branch
    %13 = sbr.rel (0) target = $region13
  $region12: #{bert_encoder_forward.8} parent=0 // pred_region
    _
  $region13: #{bert_encoder_forward.8} parent=0 // pred_fallthru
    _
  %p15 = scmp.eq.s32.totalorder 0, 0
  // Predicated region
  $region14: #{bert_encoder_forward.8} parent=0 // pred_check
    %p16 = pneg %p15
  $region15: #{bert_encoder_forward.8} parent=0 // pred_check_branch
    %18 = sbr.rel (%p16) target = $region17
  $region16: #{bert_encoder_forward.8} parent=0 // pred_region
    %19 = vst [vmem:[#allocation2] sm:$0xff] 0.0
    %20 = vst [vmem:[#allocation2 + $0x8] sm:$0xff] 0.0
    %21 = vst [vmem:[#allocation2 + $0x10] sm:$0xff] 0.0
    %22 = vst [vmem:[#allocation2 + $0x18] sm:$0xff] 0.0
    %23 = vst [vmem:[#allocation2 + $0x20] sm:$0xff] 0.0
    %24 = vst [vmem:[#allocation2 + $0x28] sm:$0xff] 0.0
    %25 = vst [vmem:[#allocation2 + $0x30] sm:$0xff] 0.0
    %26 = vst [vmem:[#allocation2 + $0x38] sm:$0xff] 0.0
  $region17: #{bert_encoder_forward.8} parent=0 // pred_fallthru
    _
  %v27 = vld [vmem:[#allocation2] sm:$0xff]
  %v28 = vld [vmem:[#allocation2 + $0x8] sm:$0xff]
  %v29 = vld [vmem:[#allocation2 + $0x10] sm:$0xff]
  %v30 = vld [vmem:[#allocation2 + $0x18] sm:$0xff]
  %v31 = vld [vmem:[#allocation2 + $0x20] sm:$0xff]
  %v32 = vld [vmem:[#allocation2 + $0x28] sm:$0xff]
  %v33 = vld [vmem:[#allocation2 + $0x30] sm:$0xff]
  %v34 = vld [vmem:[#allocation2 + $0x38] sm:$0xff]
  %v35 = vld [vmem:[%s0] sm:$0xff]
  %v36 = vld [vmem:[%s0 + $0x8] sm:$0xff]
  %v37 = vld [vmem:[%s0 + $0x10] sm:$0xff]
  %v38 = vld [vmem:[%s0 + $0x18] sm:$0xff]
  %v39 = vpack.c.bf16 %v36, %v35
  %v40 = vpack.c.bf16 %v38, %v37
  %v41 = vld [vmem:[%s1] sm:$0xff]
  %v42 = vld [vmem:[%s1 + $0x8] sm:$0xff]
  %v43 = vld [vmem:[%s1 + $0x10] sm:$0xff]
  %v44 = vld [vmem:[%s1 + $0x18] sm:$0xff]
  %v45 = vld [vmem:[%s1 + $0x20] sm:$0xff]
  %v46 = vld [vmem:[%s1 + $0x28] sm:$0xff]
  %v47 = vld [vmem:[%s1 + $0x30] sm:$0xff]
  %v48 = vld [vmem:[%s1 + $0x38] sm:$0xff]
  %v49 = vld [vmem:[%s1 + $0x40] sm:$0xff]
  %v50 = vld [vmem:[%s1 + $0x48] sm:$0xff]
  %v51 = vld [vmem:[%s1 + $0x50] sm:$0xff]
  %v52 = vld [vmem:[%s1 + $0x58] sm:$0xff]
  %v53 = vld [vmem:[%s1 + $0x60] sm:$0xff]
  %v54 = vld [vmem:[%s1 + $0x68] sm:$0xff]
  %v55 = vld [vmem:[%s1 + $0x70] sm:$0xff]
  %v56 = vld [vmem:[%s1 + $0x78] sm:$0xff]
  %v73 = vunpack.c.l.b16 %v41
  %v74 = vunpack.c.h.b16 %v41
  %v75 = vunpack.c.l.b16 %v42
  %v76 = vunpack.c.h.b16 %v42
  %v77 = vunpack.c.l.b16 %v43
  %v78 = vunpack.c.h.b16 %v43
  %v79 = vunpack.c.l.b16 %v44
  %v80 = vunpack.c.h.b16 %v44
  %v81 = vunpack.c.l.b16 %v45
  %v82 = vunpack.c.h.b16 %v45
  %v83 = vunpack.c.l.b16 %v46
  %v84 = vunpack.c.h.b16 %v46
  %v85 = vunpack.c.l.b16 %v47
  %v86 = vunpack.c.h.b16 %v47
  %v87 = vunpack.c.l.b16 %v48
  %v88 = vunpack.c.h.b16 %v48
  %v89 = vunpack.c.l.b16 %v49
  %v90 = vunpack.c.h.b16 %v49
  %v91 = vunpack.c.l.b16 %v50
  %v92 = vunpack.c.h.b16 %v50
  %v93 = vunpack.c.l.b16 %v51
  %v94 = vunpack.c.h.b16 %v51
  %v95 = vunpack.c.l.b16 %v52
  %v96 = vunpack.c.h.b16 %v52
  %v97 = vunpack.c.l.b16 %v53
  %v98 = vunpack.c.h.b16 %v53
  %v99 = vunpack.c.l.b16 %v54
  %v100 = vunpack.c.h.b16 %v54
  %v101 = vunpack.c.l.b16 %v55
  %v102 = vunpack.c.h.b16 %v55
  %v103 = vunpack.c.l.b16 %v56
  %v104 = vunpack.c.h.b16 %v56
  %v105 = vpack.c.b16 %v75, %v73
  %v106 = vpack.c.b16 %v76, %v74
  %v107 = vpack.c.b16 %v79, %v77
  %v108 = vpack.c.b16 %v80, %v78
  %v109 = vpack.c.b16 %v83, %v81
  %v110 = vpack.c.b16 %v84, %v82
  %v111 = vpack.c.b16 %v87, %v85
  %v112 = vpack.c.b16 %v88, %v86
  %v113 = vpack.c.b16 %v91, %v89
  %v114 = vpack.c.b16 %v92, %v90
  %v115 = vpack.c.b16 %v95, %v93
  %v116 = vpack.c.b16 %v96, %v94
  %v117 = vpack.c.b16 %v99, %v97
  %v118 = vpack.c.b16 %v100, %v98
  %v119 = vpack.c.b16 %v103, %v101
  %v120 = vpack.c.b16 %v104, %v102
  %137 = vmatprep.subr.bf16.mxu0 %v120
  %138 = vmatpush1.bf16.msra.mxu0 %v119
  %139 = vmatprep.subr.bf16.mxu0 %v118
  %140 = vmatpush1.bf16.msra.mxu0 %v117
  %141 = vmatprep.subr.bf16.mxu0 %v116
  %142 = vmatpush1.bf16.msra.mxu0 %v115
  %143 = vmatprep.subr.bf16.mxu0 %v114
  %144 = vmatpush1.bf16.msra.mxu0 %v113
  %145 = vmatprep.subr.bf16.mxu0 %v112
  %146 = vmatpush1.bf16.msra.mxu0 %v111
  %147 = vmatprep.subr.bf16.mxu0 %v110
  %148 = vmatpush1.bf16.msra.mxu0 %v109
  %149 = vmatprep.subr.bf16.mxu0 %v108
  %150 = vmatpush1.bf16.msra.mxu0 %v107
  %151 = vmatprep.subr.bf16.mxu0 %v106
  %152 = vmatpush1.bf16.msra.mxu0 %v105
  %153 = vmatprep.subr.bf16.mxu0 0
  %154 = vmatpush2.bf16.msra.mxu0 0
  %155 = vmatprep.subr.bf16.mxu0 0
  %156 = vmatpush2.bf16.msra.mxu0 0
  %157 = vmatprep.subr.bf16.mxu0 0
  %158 = vmatpush2.bf16.msra.mxu0 0
  %159 = vmatprep.subr.bf16.mxu0 0
  %160 = vmatpush2.bf16.msra.mxu0 0
  %161 = vmatprep.subr.bf16.mxu0 0
  %162 = vmatpush2.bf16.msra.mxu0 0
  %163 = vmatprep.subr.bf16.mxu0 0
  %164 = vmatpush2.bf16.msra.mxu0 0
  %165 = vmatprep.subr.bf16.mxu0 0
  %166 = vmatpush2.bf16.msra.mxu0 0
  %167 = vmatprep.subr.bf16.mxu0 0
  %168 = vmatpush2.bf16.msra.mxu0 0
  %169 = vmatprep.mubr.bf16.mxu0 0
  %170 = vmatmul.mubr.bf16.gmra.mxu0 %v39
  %v171 = vpop.f32.mrf.mxu0
  %v172 = vadd.f32 0.0, %v171
  %v173 = vpop.f32.mrf.mxu0
  %v174 = vadd.f32 0.0, %v173
  %v175 = vpop.f32.mrf.mxu0
  %v176 = vadd.f32 0.0, %v175
  %v177 = vpop.f32.mrf.mxu0
  %v178 = vadd.f32 0.0, %v177
  %179 = vmatprep.mubr.bf16.mxu0 0
  %180 = vmatmul.mubr.bf16.gmra.mxu0 %v40
  %v181 = vpop.f32.mrf.mxu0
  %v182 = vadd.f32 0.0, %v181
  %v183 = vpop.f32.mrf.mxu0
  %v184 = vadd.f32 0.0, %v183
  %v185 = vpop.f32.mrf.mxu0
  %v186 = vadd.f32 0.0, %v185
  %v187 = vpop.f32.mrf.mxu0
  %v188 = vadd.f32 0.0, %v187
  %189 = vdwg.mxu0
  %v190 = vadd.f32 %v27, %v172
  %v191 = vadd.f32 %v28, %v174
  %v192 = vadd.f32 %v29, %v176
  %v193 = vadd.f32 %v30, %v178
  %v194 = vadd.f32 %v31, %v182
  %v195 = vadd.f32 %v32, %v184
  %v196 = vadd.f32 %v33, %v186
  %v197 = vadd.f32 %v34, %v188
  %198 = vst [vmem:[#allocation2] sm:$0xff] %v190
  %199 = vst [vmem:[#allocation2 + $0x8] sm:$0xff] %v191
  %200 = vst [vmem:[#allocation2 + $0x10] sm:$0xff] %v192
  %201 = vst [vmem:[#allocation2 + $0x18] sm:$0xff] %v193
  %202 = vst [vmem:[#allocation2 + $0x20] sm:$0xff] %v194
  %203 = vst [vmem:[#allocation2 + $0x28] sm:$0xff] %v195
  %204 = vst [vmem:[#allocation2 + $0x30] sm:$0xff] %v196
  %205 = vst [vmem:[#allocation2 + $0x38] sm:$0xff] %v197
  // Predicated region
  $region18: #{bert_encoder_forward.8} parent=0 // pred_check
    %p206 = pneg %p15
  $region19: #{bert_encoder_forward.8} parent=0 // pred_check_branch
    %208 = sbr.rel (%p206) target = $region21
  $region20: #{bert_encoder_forward.8} parent=0 // pred_region
    %v209 = vld [vmem:[#allocation2] sm:$0xff]
    %v210 = vld [vmem:[#allocation2 + $0x8] sm:$0xff]
    %v211 = vld [vmem:[#allocation2 + $0x10] sm:$0xff]
    %v212 = vld [vmem:[#allocation2 + $0x18] sm:$0xff]
    %v213 = vld [vmem:[#allocation2 + $0x20] sm:$0xff]
    %v214 = vld [vmem:[#allocation2 + $0x28] sm:$0xff]
    %v215 = vld [vmem:[#allocation2 + $0x30] sm:$0xff]
    %v216 = vld [vmem:[#allocation2 + $0x38] sm:$0xff]
    %v217 = vld [vmem:[%s2] sm:$0x3]
    %v219 = vlaneseq
    %v220 = vshrl.u32 %v219, 7
    %v221 = vsub.s32 0, %v220
    %v222 = vrot.slane %v217, %v221
    %v223 = vlaneseq
    %v224 = vshrl.u32 %v223, 7
    %v225 = vsub.s32 1, %v224
    %v226 = vrot.slane %v217, %v225
    %v229 = vadd.f32 %v209, %v222
    %v230 = vadd.f32 %v210, %v226
    %v231 = vadd.f32 %v211, %v222
    %v232 = vadd.f32 %v212, %v226
    %v233 = vadd.f32 %v213, %v222
    %v234 = vadd.f32 %v214, %v226
    %v235 = vadd.f32 %v215, %v222
    %v236 = vadd.f32 %v216, %v226
    %v237 = vmul.f32 %v229, 0.5
    %v238 = vmul.f32 %v230, 0.5
    %v239 = vmul.f32 %v231, 0.5
    %v240 = vmul.f32 %v232, 0.5
    %v241 = vmul.f32 %v233, 0.5
    %v242 = vmul.f32 %v234, 0.5
    %v243 = vmul.f32 %v235, 0.5
    %v244 = vmul.f32 %v236, 0.5
    %v245 = vmul.f32 %v229, 0.70710677
    %v246 = vmul.f32 %v230, 0.70710677
    %v247 = vmul.f32 %v231, 0.70710677
    %v248 = vmul.f32 %v232, 0.70710677
    %v249 = vmul.f32 %v233, 0.70710677
    %v250 = vmul.f32 %v234, 0.70710677
    %v251 = vmul.f32 %v235, 0.70710677
    %v252 = vmul.f32 %v236, 0.70710677
    %v253 = vand.u32 2147483647, %v245
    %v254 = vand.u32 2147483647, %v246
    %v255 = vand.u32 2147483647, %v247
    %v256 = vand.u32 2147483647, %v248
    %v257 = vand.u32 2147483647, %v249
    %v258 = vand.u32 2147483647, %v250
    %v259 = vand.u32 2147483647, %v251
    %v260 = vand.u32 2147483647, %v252
    %v261 = vmul.f32 %v253, 0.3275911
    %v262 = vmul.f32 %v254, 0.3275911
    %v263 = vmul.f32 %v255, 0.3275911
    %v264 = vmul.f32 %v256, 0.3275911
    %v265 = vmul.f32 %v257, 0.3275911
    %v266 = vmul.f32 %v258, 0.3275911
    %v267 = vmul.f32 %v259, 0.3275911
    %v268 = vmul.f32 %v260, 0.3275911
    %v269 = vadd.f32 %v261, 1.0
    %v270 = vadd.f32 %v262, 1.0
    %v271 = vadd.f32 %v263, 1.0
    %v272 = vadd.f32 %v264, 1.0
    %v273 = vadd.f32 %v265, 1.0
    %v274 = vadd.f32 %v266, 1.0
    %v275 = vadd.f32 %v267, 1.0
    %v276 = vadd.f32 %v268, 1.0
    %v277 = vrcp.pop %v269
    %v278 = vrcp.pop %v270
    %v279 = vrcp.pop %v271
    %v280 = vrcp.pop %v272
    %v281 = vrcp.pop %v273
    %v282 = vrcp.pop %v274
    %v283 = vrcp.pop %v275
    %v284 = vrcp.pop %v276
    %v285 = vmul.f32 %v277, 1.0614054
    %v286 = vmul.f32 %v278, 1.0614054
    %v287 = vmul.f32 %v279, 1.0614054
    %v288 = vmul.f32 %v280, 1.0614054
    %v289 = vmul.f32 %v281, 1.0614054
    %v290 = vmul.f32 %v282, 1.0614054
    %v291 = vmul.f32 %v283, 1.0614054
    %v292 = vmul.f32 %v284, 1.0614054
    %v293 = vadd.f32 %v285, -1.4531521
    %v294 = vadd.f32 %v286, -1.4531521
    %v295 = vadd.f32 %v287, -1.4531521
    %v296 = vadd.f32 %v288, -1.4531521
    %v297 = vadd.f32 %v289, -1.4531521
    %v298 = vadd.f32 %v290, -1.4531521
    %v299 = vadd.f32 %v291, -1.4531521
    %v300 = vadd.f32 %v292, -1.4531521
    %v301 = vmul.f32 %v293, %v277
    %v302 = vmul.f32 %v294, %v278
    %v303 = vmul.f32 %v295, %v279
    %v304 = vmul.f32 %v296, %v280
    %v305 = vmul.f32 %v297, %v281
    %v306 = vmul.f32 %v298, %v282
    %v307 = vmul.f32 %v299, %v283
    %v308 = vmul.f32 %v300, %v284
    %v309 = vadd.f32 %v301, 1.4214138
    %v310 = vadd.f32 %v302, 1.4214138
    %v311 = vadd.f32 %v303, 1.4214138
    %v312 = vadd.f32 %v304, 1.4214138
    %v313 = vadd.f32 %v305, 1.4214138
    %v314 = vadd.f32 %v306, 1.4214138
    %v315 = vadd.f32 %v307, 1.4214138
    %v316 = vadd.f32 %v308, 1.4214138
    %v317 = vmul.f32 %v309, %v277
    %v318 = vmul.f32 %v310, %v278
    %v319 = vmul.f32 %v311, %v279
    %v320 = vmul.f32 %v312, %v280
    %v321 = vmul.f32 %v313, %v281
    %v322 = vmul.f32 %v314, %v282
    %v323 = vmul.f32 %v315, %v283
    %v324 = vmul.f32 %v316, %v284
    %v325 = vadd.f32 %v317, -0.28449672
    %v326 = vadd.f32 %v318, -0.28449672
    %v327 = vadd.f32 %v319, -0.28449672
    %v328 = vadd.f32 %v320, -0.28449672
    %v329 = vadd.f32 %v321, -0.28449672
    %v330 = vadd.f32 %v322, -0.28449672
    %v331 = vadd.f32 %v323, -0.28449672
    %v332 = vadd.f32 %v324, -0.28449672
    %v333 = vmul.f32 %v325, %v277
    %v334 = vmul.f32 %v326, %v278
    %v335 = vmul.f32 %v327, %v279
    %v336 = vmul.f32 %v328, %v280
    %v337 = vmul.f32 %v329, %v281
    %v338 = vmul.f32 %v330, %v282
    %v339 = vmul.f32 %v331, %v283
    %v340 = vmul.f32 %v332, %v284
    %v341 = vadd.f32 %v333, 0.2548296
    %v342 = vadd.f32 %v334, 0.2548296
    %v343 = vadd.f32 %v335, 0.2548296
    %v344 = vadd.f32 %v336, 0.2548296
    %v345 = vadd.f32 %v337, 0.2548296
    %v346 = vadd.f32 %v338, 0.2548296
    %v347 = vadd.f32 %v339, 0.2548296
    %v348 = vadd.f32 %v340, 0.2548296
    %v349 = vmul.f32 %v341, %v277
    %v350 = vmul.f32 %v342, %v278
    %v351 = vmul.f32 %v343, %v279
    %v352 = vmul.f32 %v344, %v280
    %v353 = vmul.f32 %v345, %v281
    %v354 = vmul.f32 %v346, %v282
    %v355 = vmul.f32 %v347, %v283
    %v356 = vmul.f32 %v348, %v284
    %v357 = vsub.f32 0.0, %v253
    %v358 = vsub.f32 0.0, %v254
    %v359 = vsub.f32 0.0, %v255
    %v360 = vsub.f32 0.0, %v256
    %v361 = vsub.f32 0.0, %v257
    %v362 = vsub.f32 0.0, %v258
    %v363 = vsub.f32 0.0, %v259
    %v364 = vsub.f32 0.0, %v260
    %v365 = vmul.f32 %v357, %v253
    %v366 = vmul.f32 %v358, %v254
    %v367 = vmul.f32 %v359, %v255
    %v368 = vmul.f32 %v360, %v256
    %v369 = vmul.f32 %v361, %v257
    %v370 = vmul.f32 %v362, %v258
    %v371 = vmul.f32 %v363, %v259
    %v372 = vmul.f32 %v364, %v260
    %v373 = vmul.f32 %v365, 1.442695
    %v374 = vpow.pop %v373
    %v375 = vmul.f32 %v366, 1.442695
    %v376 = vpow.pop %v375
    %v377 = vmul.f32 %v367, 1.442695
    %v378 = vpow.pop %v377
    %v379 = vmul.f32 %v368, 1.442695
    %v380 = vpow.pop %v379
    %v381 = vmul.f32 %v369, 1.442695
    %v382 = vpow.pop %v381
    %v383 = vmul.f32 %v370, 1.442695
    %v384 = vpow.pop %v383
    %v385 = vmul.f32 %v371, 1.442695
    %v386 = vpow.pop %v385
    %v387 = vmul.f32 %v372, 1.442695
    %v388 = vpow.pop %v387
    %v389 = vmul.f32 %v349, %v374
    %v390 = vmul.f32 %v350, %v376
    %v391 = vmul.f32 %v351, %v378
    %v392 = vmul.f32 %v352, %v380
    %v393 = vmul.f32 %v353, %v382
    %v394 = vmul.f32 %v354, %v384
    %v395 = vmul.f32 %v355, %v386
    %v396 = vmul.f32 %v356, %v388
    %v397 = vsub.f32 1.0, %v389
    %v398 = vsub.f32 1.0, %v390
    %v399 = vsub.f32 1.0, %v391
    %v400 = vsub.f32 1.0, %v392
    %v401 = vsub.f32 1.0, %v393
    %v402 = vsub.f32 1.0, %v394
    %v403 = vsub.f32 1.0, %v395
    %v404 = vsub.f32 1.0, %v396
    %vm405 = vcmp.ge.f32.partialorder %v245, 0.0
    %vm406 = vcmp.ge.f32.partialorder %v246, 0.0
    %vm407 = vcmp.ge.f32.partialorder %v247, 0.0
    %vm408 = vcmp.ge.f32.partialorder %v248, 0.0
    %vm409 = vcmp.ge.f32.partialorder %v249, 0.0
    %vm410 = vcmp.ge.f32.partialorder %v250, 0.0
    %vm411 = vcmp.ge.f32.partialorder %v251, 0.0
    %vm412 = vcmp.ge.f32.partialorder %v252, 0.0
    %v413 = vsub.f32 0.0, %v397
    %v414 = vsub.f32 0.0, %v398
    %v415 = vsub.f32 0.0, %v399
    %v416 = vsub.f32 0.0, %v400
    %v417 = vsub.f32 0.0, %v401
    %v418 = vsub.f32 0.0, %v402
    %v419 = vsub.f32 0.0, %v403
    %v420 = vsub.f32 0.0, %v404
    %v421 = vsel %vm405, %v397, %v413
    %v422 = vsel %vm406, %v398, %v414
    %v423 = vsel %vm407, %v399, %v415
    %v424 = vsel %vm408, %v400, %v416
    %v425 = vsel %vm409, %v401, %v417
    %v426 = vsel %vm410, %v402, %v418
    %v427 = vsel %vm411, %v403, %v419
    %v428 = vsel %vm412, %v404, %v420
    %v429 = vadd.f32 %v421, 1.0
    %v430 = vadd.f32 %v422, 1.0
    %v431 = vadd.f32 %v423, 1.0
    %v432 = vadd.f32 %v424, 1.0
    %v433 = vadd.f32 %v425, 1.0
    %v434 = vadd.f32 %v426, 1.0
    %v435 = vadd.f32 %v427, 1.0
    %v436 = vadd.f32 %v428, 1.0
    %v437 = vmul.f32 %v237, %v429
    %v438 = vmul.f32 %v238, %v430
    %v439 = vmul.f32 %v239, %v431
    %v440 = vmul.f32 %v240, %v432
    %v441 = vmul.f32 %v241, %v433
    %v442 = vmul.f32 %v242, %v434
    %v443 = vmul.f32 %v243, %v435
    %v444 = vmul.f32 %v244, %v436
    %v445 = vpack.c.bf16 %v439, %v437
    %v446 = vpack.c.bf16 %v440, %v438
    %v447 = vpack.c.bf16 %v443, %v441
    %v448 = vpack.c.bf16 %v444, %v442
    %v453 = vunpack.c.l.b16 %v445
    %v454 = vunpack.c.l.b16 %v446
    %v455 = vunpack.c.h.b16 %v445
    %v456 = vunpack.c.h.b16 %v446
    %v457 = vunpack.c.l.b16 %v447
    %v458 = vunpack.c.l.b16 %v448
    %v459 = vunpack.c.h.b16 %v447
    %v460 = vunpack.c.h.b16 %v448
    %v461 = vpack.c.b16 %v454, %v453
    %v462 = vpack.c.b16 %v456, %v455
    %v463 = vpack.c.b16 %v458, %v457
    %v464 = vpack.c.b16 %v460, %v459
    %469 = vst [vmem:[%s3] sm:$0xff] %v461
    %470 = vst [vmem:[%s3 + $0x8] sm:$0xff] %v462
    %471 = vst [vmem:[%s3 + $0x10] sm:$0xff] %v463
    %472 = vst [vmem:[%s3 + $0x18] sm:$0xff] %v464
  $region21: #{bert_encoder_forward.8} parent=0 // pred_fallthru
    _
  // Predicated region
  $region22: #{bert_encoder_forward.8} parent=0 // pred_check
    _
  $region23: #{bert_encoder_forward.8} parent=0 // pred_check_branch
    %474 = sbr.rel (0) target = $region25
  $region24: #{bert_encoder_forward.8} parent=0 // pred_region
    _
  $region25: #{bert_encoder_forward.8} parent=0 // pred_fallthru
    _
  // Predicated region
  $region26: #{bert_encoder_forward.8} parent=0 // pred_check
    _
  $region27: #{bert_encoder_forward.8} parent=0 // pred_check_branch
    %476 = sbr.rel (0) target = $region29
  $region28: #{bert_encoder_forward.8} parent=0 // pred_region
    _
  $region29: #{bert_encoder_forward.8} parent=0 // pred_fallthru
    _

// kernel: bert_encoder_forward.9
$region0: #{bert_encoder_forward.9}
  #allocation0 [shape = 'u32[]', space=smem, size = 0x4, offset = 0x4, fixed_abs, tag = 'smem constant byte address 0x4 - core index']
  #allocation1 [shape = 'u32[144,128]{1,0:T(1,128)}', space=vmem, size = 0x12000, scoped, tag = 'internal scratch']
  #allocation2 [shape = 'f32[32,128]{1,0:T(8,128)}', space=vmem, size = 0x4000, scoped, tag = 'scratch operand']
  %s0 = inlined_call_operand.vmem [shape: bf16[32,256], index: 0, kind: input, shape index: {}]
  %s1 = inlined_call_operand.vmem [shape: bf16[256,128], index: 1, kind: input, shape index: {}]
  %s2 = inlined_call_operand.vmem [shape: f32[1,128], index: 2, kind: input, shape index: {}]
  %s3 = inlined_call_operand.vmem [shape: f32[32,128], index: 3, kind: input, shape index: {}]
  %s4 = inlined_call_operand.vmem [shape: f32[1,128], index: 4, kind: input, shape index: {}]
  %s5 = inlined_call_operand.vmem [shape: f32[1,128], index: 5, kind: input, shape index: {}]
  %s6 = inlined_call_operand.hbm [shape: f32[32,128], index: 6, kind: output, shape index: {}]
  %s7 = sld [smem:[#allocation0]]
  $region42: #{bert_encoder_forward.9} parent=0
    _
  %s9 = ssub.s32 1, %s7
  %s10 = scalar_select 0, %s9, %s7
  $region1: #{bert_encoder_forward.9} parent=0
    #allocation3 [shape = 'u8[16384]{0}', space=vmem, size = 0x4000, scoped, tag = 'output window, operand 0, single buffered']
    #allocation4 [shape = 's32[1]{0}', space=sflag, size = 0x4, scoped, tag = 'scoped memory for bert_encoder_forward.9']
    %11 = vsyncpa [#allocation4], 0
    // Predicated region
    $region2: #{bert_encoder_forward.9} parent=1 // pred_check
      _
    $region3: #{bert_encoder_forward.9} parent=1 // pred_check_branch
      %13 = sbr.rel (0) target = $region5
    $region4: #{bert_encoder_forward.9} parent=1 // pred_region
      _
    $region5: #{bert_encoder_forward.9} parent=1 // pred_fallthru
      _
    // Predicated region
    $region6: #{bert_encoder_forward.9} parent=1 // pred_check
      _
    $region7: #{bert_encoder_forward.9} parent=1 // pred_check_branch
      %15 = sbr.rel (0) target = $region9
    $region8: #{bert_encoder_forward.9} parent=1 // pred_region
      _
    $region9: #{bert_encoder_forward.9} parent=1 // pred_fallthru
      _
    // Predicated region
    $region10: #{bert_encoder_forward.9} parent=1 // pred_check
      _
    $region11: #{bert_encoder_forward.9} parent=1 // pred_check_branch
      %17 = sbr.rel (0) target = $region13
    $region12: #{bert_encoder_forward.9} parent=1 // pred_region
      _
    $region13: #{bert_encoder_forward.9} parent=1 // pred_fallthru
      _
    // Predicated region
    $region14: #{bert_encoder_forward.9} parent=1 // pred_check
      _
    $region15: #{bert_encoder_forward.9} parent=1 // pred_check_branch
      %19 = sbr.rel (0) target = $region17
    $region16: #{bert_encoder_forward.9} parent=1 // pred_region
      _
    $region17: #{bert_encoder_forward.9} parent=1 // pred_fallthru
      _
    // Predicated region
    $region18: #{bert_encoder_forward.9} parent=1 // pred_check
      _
    $region19: #{bert_encoder_forward.9} parent=1 // pred_check_branch
      %21 = sbr.rel (0) target = $region21
    $region20: #{bert_encoder_forward.9} parent=1 // pred_region
      _
    $region21: #{bert_encoder_forward.9} parent=1 // pred_fallthru
      _
    // Predicated region
    $region22: #{bert_encoder_forward.9} parent=1 // pred_check
      _
    $region23: #{bert_encoder_forward.9} parent=1 // pred_check_branch
      %23 = sbr.rel (0) target = $region25
    $region24: #{bert_encoder_forward.9} parent=1 // pred_region
      _
    $region25: #{bert_encoder_forward.9} parent=1 // pred_fallthru
      _
    %p25 = scmp.eq.s32.totalorder 0, 0
    // Predicated region
    $region26: #{bert_encoder_forward.9} parent=1 // pred_check
      %p26 = pneg %p25
    $region27: #{bert_encoder_forward.9} parent=1 // pred_check_branch
      %28 = sbr.rel (%p26) target = $region29
    $region28: #{bert_encoder_forward.9} parent=1 // pred_region
      %29 = vst [vmem:[#allocation2] sm:$0xff] 0.0
      %30 = vst [vmem:[#allocation2 + $0x8] sm:$0xff] 0.0
      %31 = vst [vmem:[#allocation2 + $0x10] sm:$0xff] 0.0
      %32 = vst [vmem:[#allocation2 + $0x18] sm:$0xff] 0.0
    $region29: #{bert_encoder_forward.9} parent=1 // pred_fallthru
      _
    %v33 = vld [vmem:[#allocation2] sm:$0xff]
    %v34 = vld [vmem:[#allocation2 + $0x8] sm:$0xff]
    %v35 = vld [vmem:[#allocation2 + $0x10] sm:$0xff]
    %v36 = vld [vmem:[#allocation2 + $0x18] sm:$0xff]
    %v37 = vld [vmem:[%s0] sm:$0xff]
    %v38 = vld [vmem:[%s0 + $0x8] sm:$0xff]
    %v39 = vld [vmem:[%s0 + $0x10] sm:$0xff]
    %v40 = vld [vmem:[%s0 + $0x18] sm:$0xff]
    %v41 = vld [vmem:[%s1] sm:$0xf]
    %v42 = vld [vmem:[%s1 + $0x4] sm:$0xf]
    %v43 = vld [vmem:[%s1 + $0x8] sm:$0xf]
    %v44 = vld [vmem:[%s1 + $0xc] sm:$0xf]
    %v45 = vld [vmem:[%s1 + $0x10] sm:$0xf]
    %v46 = vld [vmem:[%s1 + $0x14] sm:$0xf]
    %v47 = vld [vmem:[%s1 + $0x18] sm:$0xf]
    %v48 = vld [vmem:[%s1 + $0x1c] sm:$0xf]
    %v49 = vld [vmem:[%s1 + $0x20] sm:$0xf]
    %v50 = vld [vmem:[%s1 + $0x24] sm:$0xf]
    %v51 = vld [vmem:[%s1 + $0x28] sm:$0xf]
    %v52 = vld [vmem:[%s1 + $0x2c] sm:$0xf]
    %v53 = vld [vmem:[%s1 + $0x30] sm:$0xf]
    %v54 = vld [vmem:[%s1 + $0x34] sm:$0xf]
    %v55 = vld [vmem:[%s1 + $0x38] sm:$0xf]
    %v56 = vld [vmem:[%s1 + $0x3c] sm:$0xf]
    %v57 = vld [vmem:[%s1 + $0x40] sm:$0xf]
    %v58 = vld [vmem:[%s1 + $0x44] sm:$0xf]
    %v59 = vld [vmem:[%s1 + $0x48] sm:$0xf]
    %v60 = vld [vmem:[%s1 + $0x4c] sm:$0xf]
    %v61 = vld [vmem:[%s1 + $0x50] sm:$0xf]
    %v62 = vld [vmem:[%s1 + $0x54] sm:$0xf]
    %v63 = vld [vmem:[%s1 + $0x58] sm:$0xf]
    %v64 = vld [vmem:[%s1 + $0x5c] sm:$0xf]
    %v65 = vld [vmem:[%s1 + $0x60] sm:$0xf]
    %v66 = vld [vmem:[%s1 + $0x64] sm:$0xf]
    %v67 = vld [vmem:[%s1 + $0x68] sm:$0xf]
    %v68 = vld [vmem:[%s1 + $0x6c] sm:$0xf]
    %v69 = vld [vmem:[%s1 + $0x70] sm:$0xf]
    %v70 = vld [vmem:[%s1 + $0x74] sm:$0xf]
    %v71 = vld [vmem:[%s1 + $0x78] sm:$0xf]
    %v72 = vld [vmem:[%s1 + $0x7c] sm:$0xf]
    %v77 = vunpack.c.l.b16 %v37
    %v78 = vunpack.c.h.b16 %v37
    %v79 = vunpack.c.l.b16 %v38
    %v80 = vunpack.c.h.b16 %v38
    %v81 = vunpack.c.l.b16 %v39
    %v82 = vunpack.c.h.b16 %v39
    %v83 = vunpack.c.l.b16 %v40
    %v84 = vunpack.c.h.b16 %v40
    %v85 = vpack.c.b16 %v79, %v77
    %v86 = vpack.c.b16 %v80, %v78
    %v87 = vpack.c.b16 %v83, %v81
    %v88 = vpack.c.b16 %v84, %v82
    %v125 = vunpack.c.l.b16 %v41
    %v126 = vunpack.c.l.b16 %v42
    %v127 = vunpack.c.l.b16 %v43
    %v128 = vunpack.c.l.b16 %v44
    %v129 = vunpack.c.l.b16 %v45
    %v130 = vunpack.c.l.b16 %v46
    %v131 = vunpack.c.l.b16 %v47
    %v132 = vunpack.c.l.b16 %v48
    %v133 = vunpack.c.l.b16 %v49
    %v134 = vunpack.c.l.b16 %v50
    %v135 = vunpack.c.l.b16 %v51
    %v136 = vunpack.c.l.b16 %v52
    %v137 = vunpack.c.l.b16 %v53
    %v138 = vunpack.c.l.b16 %v54
    %v139 = vunpack.c.l.b16 %v55
    %v140 = vunpack.c.l.b16 %v56
    %v141 = vunpack.c.l.b16 %v57
    %v142 = vunpack.c.l.b16 %v58
    %v143 = vunpack.c.l.b16 %v59
    %v144 = vunpack.c.l.b16 %v60
    %v145 = vunpack.c.l.b16 %v61
    %v146 = vunpack.c.l.b16 %v62
    %v147 = vunpack.c.l.b16 %v63
    %v148 = vunpack.c.l.b16 %v64
    %v149 = vunpack.c.l.b16 %v65
    %v150 = vunpack.c.l.b16 %v66
    %v151 = vunpack.c.l.b16 %v67
    %v152 = vunpack.c.l.b16 %v68
    %v153 = vunpack.c.l.b16 %v69
    %v154 = vunpack.c.l.b16 %v70
    %v155 = vunpack.c.l.b16 %v71
    %v156 = vunpack.c.l.b16 %v72
    %v157 = vpack.c.b16 %v126, %v125
    %v158 = vpack.c.b16 %v128, %v127
    %v159 = vpack.c.b16 %v130, %v129
    %v160 = vpack.c.b16 %v132, %v131
    %v161 = vpack.c.b16 %v134, %v133
    %v162 = vpack.c.b16 %v136, %v135
    %v163 = vpack.c.b16 %v138, %v137
    %v164 = vpack.c.b16 %v140, %v139
    %v165 = vpack.c.b16 %v142, %v141
    %v166 = vpack.c.b16 %v144, %v143
    %v167 = vpack.c.b16 %v146, %v145
    %v168 = vpack.c.b16 %v148, %v147
    %v169 = vpack.c.b16 %v150, %v149
    %v170 = vpack.c.b16 %v152, %v151
    %v171 = vpack.c.b16 %v154, %v153
    %v172 = vpack.c.b16 %v156, %v155
    %189 = vmatprep.subr.bf16.mxu0 0
    %190 = vmatpush1.bf16.msra.mxu0 %v164
    %191 = vmatprep.subr.bf16.mxu0 0
    %192 = vmatpush1.bf16.msra.mxu0 %v163
    %193 = vmatprep.subr.bf16.mxu0 0
    %194 = vmatpush1.bf16.msra.mxu0 %v162
    %195 = vmatprep.subr.bf16.mxu0 0
    %196 = vmatpush1.bf16.msra.mxu0 %v161
    %197 = vmatprep.subr.bf16.mxu0 0
    %198 = vmatpush1.bf16.msra.mxu0 %v160
    %199 = vmatprep.subr.bf16.mxu0 0
    %200 = vmatpush1.bf16.msra.mxu0 %v159
    %201 = vmatprep.subr.bf16.mxu0 0
    %202 = vmatpush1.bf16.msra.mxu0 %v158
    %203 = vmatprep.subr.bf16.mxu0 0
    %204 = vmatpush1.bf16.msra.mxu0 %v157
    %205 = vmatprep.subr.bf16.mxu0 0
    %206 = vmatpush2.bf16.msra.mxu0 %v172
    %207 = vmatprep.subr.bf16.mxu0 0
    %208 = vmatpush2.bf16.msra.mxu0 %v171
    %209 = vmatprep.subr.bf16.mxu0 0
    %210 = vmatpush2.bf16.msra.mxu0 %v170
    %211 = vmatprep.subr.bf16.mxu0 0
    %212 = vmatpush2.bf16.msra.mxu0 %v169
    %213 = vmatprep.subr.bf16.mxu0 0
    %214 = vmatpush2.bf16.msra.mxu0 %v168
    %215 = vmatprep.subr.bf16.mxu0 0
    %216 = vmatpush2.bf16.msra.mxu0 %v167
    %217 = vmatprep.subr.bf16.mxu0 0
    %218 = vmatpush2.bf16.msra.mxu0 %v166
    %219 = vmatprep.subr.bf16.mxu0 0
    %220 = vmatpush2.bf16.msra.mxu0 %v165
    %221 = vmatprep.mubr.bf16.mxu0 %v86
    %222 = vmatmul.mubr.bf16.gmra.mxu0 %v85
    %v223 = vpop.f32.mrf.mxu0
    %v224 = vadd.f32 0.0, %v223
    %v225 = vpop.f32.mrf.mxu0
    %v226 = vpop.f32.mrf.mxu0
    %v227 = vadd.f32 0.0, %v226
    %v228 = vpop.f32.mrf.mxu0
    %229 = vmatprep.mubr.bf16.mxu0 %v88
    %230 = vmatmul.mubr.bf16.gmra.mxu0 %v87
    %v231 = vpop.f32.mrf.mxu0
    %v232 = vadd.f32 0.0, %v231
    %v233 = vpop.f32.mrf.mxu0
    %v234 = vpop.f32.mrf.mxu0
    %v235 = vadd.f32 0.0, %v234
    %v236 = vpop.f32.mrf.mxu0
    %237 = vdwg.mxu0
    %v238 = vadd.f32 %v33, %v224
    %v239 = vadd.f32 %v34, %v227
    %v240 = vadd.f32 %v35, %v232
    %v241 = vadd.f32 %v36, %v235
    %242 = vst [vmem:[#allocation2] sm:$0xff] %v238
    %243 = vst [vmem:[#allocation2 + $0x8] sm:$0xff] %v239
    %244 = vst [vmem:[#allocation2 + $0x10] sm:$0xff] %v240
    %245 = vst [vmem:[#allocation2 + $0x18] sm:$0xff] %v241
    // Predicated region
    $region30: #{bert_encoder_forward.9} parent=1 // pred_check
      %p246 = pneg %p25
    $region31: #{bert_encoder_forward.9} parent=1 // pred_check_branch
      %248 = sbr.rel (%p246) target = $region33
    $region32: #{bert_encoder_forward.9} parent=1 // pred_region
      %v249 = vld [vmem:[#allocation2] sm:$0xff]
      %v250 = vld [vmem:[#allocation2 + $0x8] sm:$0xff]
      %v251 = vld [vmem:[#allocation2 + $0x10] sm:$0xff]
      %v252 = vld [vmem:[#allocation2 + $0x18] sm:$0xff]
      %v253 = vld [vmem:[%s2] sm:$0x1]
      %v255 = vlaneseq
      %v256 = vshrl.u32 %v255, 7
      %v257 = vsub.s32 0, %v256
      %v258 = vrot.slane %v253, %v257
      %v260 = vadd.f32 %v249, %v258
      %v261 = vadd.f32 %v250, %v258
      %v262 = vadd.f32 %v251, %v258
      %v263 = vadd.f32 %v252, %v258
      %264 = vadd.xlane.f32.xlu0 %v260
      %v265 = vpop.xlane.xlu0 %264
      %266 = vadd.xlane.f32.xlu0 %v261
      %v267 = vpop.xlane.xlu0 %266
      %268 = vadd.xlane.f32.xlu0 %v262
      %v269 = vpop.xlane.xlu0 %268
      %270 = vadd.xlane.f32.xlu0 %v263
      %v271 = vpop.xlane.xlu0 %270
      %v272 = vmul.f32 %v265, 0.0078125
      %v273 = vmul.f32 %v267, 0.0078125
      %v274 = vmul.f32 %v269, 0.0078125
      %v275 = vmul.f32 %v271, 0.0078125
      %v276 = vsub.f32 %v260, %v272
      %v277 = vsub.f32 %v261, %v273
      %v278 = vsub.f32 %v262, %v274
      %v279 = vsub.f32 %v263, %v275
      %v280 = vmul.f32 %v276, %v276
      %v281 = vmul.f32 %v277, %v277
      %v282 = vmul.f32 %v278, %v278
      %v283 = vmul.f32 %v279, %v279
      %284 = vadd.xlane.f32.xlu0 %v280
      %v285 = vpop.xlane.xlu0 %284
      %286 = vadd.xlane.f32.xlu0 %v281
      %v287 = vpop.xlane.xlu0 %286
      %288 = vadd.xlane.f32.xlu0 %v282
      %v289 = vpop.xlane.xlu0 %288
      %290 = vadd.xlane.f32.xlu0 %v283
      %v291 = vpop.xlane.xlu0 %290
      %v292 = vmul.f32 %v285, 0.0078125
      %v293 = vmul.f32 %v287, 0.0078125
      %v294 = vmul.f32 %v289, 0.0078125
      %v295 = vmul.f32 %v291, 0.0078125
      %v296 = vadd.f32 %v292, 1e-05
      %v297 = vadd.f32 %v293, 1e-05
      %v298 = vadd.f32 %v294, 1e-05
      %v299 = vadd.f32 %v295, 1e-05
      %v300 = vrsqrt.pop %v296
      %v301 = vrsqrt.pop %v297
      %v302 = vrsqrt.pop %v298
      %v303 = vrsqrt.pop %v299
      %v304 = vmul.f32 %v276, %v300
      %v305 = vmul.f32 %v277, %v301
      %v306 = vmul.f32 %v278, %v302
      %v307 = vmul.f32 %v279, %v303
      %v308 = vld [vmem:[%s4] sm:$0x1]
      %v310 = vlaneseq
      %v311 = vshrl.u32 %v310, 7
      %v312 = vsub.s32 0, %v311
      %v313 = vrot.slane %v308, %v312
      %v315 = vmul.f32 %v313, %v304
      %v316 = vmul.f32 %v313, %v305
      %v317 = vmul.f32 %v313, %v306
      %v318 = vmul.f32 %v313, %v307
      %v319 = vld [vmem:[%s5] sm:$0x1]
      %v321 = vlaneseq
      %v322 = vshrl.u32 %v321, 7
      %v323 = vsub.s32 0, %v322
      %v324 = vrot.slane %v319, %v323
      %v326 = vadd.f32 %v315, %v324
      %v327 = vadd.f32 %v316, %v324
      %v328 = vadd.f32 %v317, %v324
      %v329 = vadd.f32 %v318, %v324
      %v330 = vld [vmem:[%s3] sm:$0xff]
      %v331 = vld [vmem:[%s3 + $0x8] sm:$0xff]
      %v332 = vld [vmem:[%s3 + $0x10] sm:$0xff]
      %v333 = vld [vmem:[%s3 + $0x18] sm:$0xff]
      %v334 = vadd.f32 %v326, %v330
      %v335 = vadd.f32 %v327, %v331
      %v336 = vadd.f32 %v328, %v332
      %v337 = vadd.f32 %v329, %v333
      %338 = vst [vmem:[#allocation3] sm:$0xff] %v334
      %339 = vst [vmem:[#allocation3 + $0x8] sm:$0xff] %v335
      %340 = vst [vmem:[#allocation3 + $0x10] sm:$0xff] %v336
      %341 = vst [vmem:[#allocation3 + $0x18] sm:$0xff] %v337
    $region33: #{bert_encoder_forward.9} parent=1 // pred_fallthru
      _
    // Predicated region
    $region34: #{bert_encoder_forward.9} parent=1 // pred_check
      _
    $region35: #{bert_encoder_forward.9} parent=1 // pred_check_branch
      %343 = sbr.rel (0) target = $region37
    $region36: #{bert_encoder_forward.9} parent=1 // pred_region
      %s345 = ssub.s32 512, 512
      %346 = vsyncadd [#allocation4], %s345
      %s347 = sshll.u32 [#allocation3], 4
      %s348 = int_to_ptr.vmem [resolvable:$true] %s347
      %353 = dma.vmem_to_hbm [thread:$0]  %s348, 512, %s6, [#allocation4], 128, 128, 8
    $region37: #{bert_encoder_forward.9} parent=1 // pred_fallthru
      _
    // Predicated region
    $region38: #{bert_encoder_forward.9} parent=1 // pred_check
      _
    $region39: #{bert_encoder_forward.9} parent=1 // pred_check_branch
      %355 = sbr.rel (0) target = $region41
    $region40: #{bert_encoder_forward.9} parent=1 // pred_region
      %356 = dma.done [#allocation4], 512
    $region41: #{bert_encoder_forward.9} parent=1 // pred_fallthru
      _
    %357 = vsyncpa [#allocation4], 1

</llo_original>
